<compile_context>
chip_gen: v5e
topology: v5e:2x2
jax: 0.10.0
libtpu: 0.0.40
codegen_flags: <defaults>
</compile_context>

<pallas_src>
import math

import jax
import jax.numpy as jnp
import numpy as np
from jax.experimental import pallas as pl
from jax.experimental.pallas import tpu as pltpu


# Geometry constants (CIFAR 32x32 input, 3x3 valid convs, 2x2/2 pools).
_H = _W = 32
_SEG = 1280            # per-sample lane segment: 1024 data lanes + 256 pad lanes
_PAD_TAIL = 256        # margin so every shifted window read stays in bounds
_SEL_LANES = 768       # lanes per sample consulted by the feature selection matmul
_FEAT = 16 * 6 * 6     # 576


# ----------------------------- fused Pallas kernel --------------------------

def _fused_cifar_kernel(x_ref, w1_ref, b1_ref, w2_ref, b2_ref, sel_ref,
                        fw1_ref, fb1_ref, fw2_ref, fb2_ref, fw3_ref, fb3_ref,
                        out_ref,
                        p1_sc, y1_sc, z1_sc, p2_sc, y2_sc, z2_sc, feat_sc):
    bt = out_ref.shape[0]
    m = bt * _SEG
    n = m - _PAD_TAIL

    # ---- conv1 (3->8, taps folded into the contraction dim) + ReLU ----------
    k = 0
    for dy in range(3):
        for dx in range(3):
            s = dy * _W + dx
            p1_sc[3 * k:3 * k + 3, :] = x_ref[:, s:s + n]
            k += 1
    y1 = jnp.dot(w1_ref[...], p1_sc[...], preferred_element_type=jnp.float32)
    y1 = jnp.maximum(y1 + b1_ref[...], 0.0)
    y1_sc[:, :n] = y1
    y1_sc[:, n:] = jnp.zeros((8, _PAD_TAIL), jnp.float32)

    # ---- pool1 (2x2/2): max of four lane-shifted windows --------------------
    z1 = jnp.maximum(
        jnp.maximum(y1_sc[:, 0:n], y1_sc[:, 1:1 + n]),
        jnp.maximum(y1_sc[:, _W:_W + n], y1_sc[:, _W + 1:_W + 1 + n]))
    z1_sc[:, :n] = z1
    z1_sc[:, n:] = jnp.zeros((8, _PAD_TAIL), jnp.float32)

    # ---- conv2 (8->16); pooled values sit at even anchors so taps use 2x shift
    k = 0
    for dy in range(3):
        for dx in range(3):
            s = 2 * (dy * _W + dx)
            p2_sc[8 * k:8 * k + 8, :] = z1_sc[:, s:s + n]
            k += 1
    y2 = jnp.dot(w2_ref[...], p2_sc[...], preferred_element_type=jnp.float32)
    y2 = jnp.maximum(y2 + b2_ref[...], 0.0)
    y2_sc[:, :n] = y2
    y2_sc[:, n:] = jnp.zeros((16, _PAD_TAIL), jnp.float32)

    # ---- pool2 -------------------------------------------------------------
    z2 = jnp.maximum(
        jnp.maximum(y2_sc[:, 0:n], y2_sc[:, 2:2 + n]),
        jnp.maximum(y2_sc[:, 2 * _W:2 * _W + n],
                    y2_sc[:, 2 * _W + 2:2 * _W + 2 + n]))
    z2_sc[:, :n] = z2
    z2_sc[:, n:] = jnp.zeros((16, _PAD_TAIL), jnp.float32)

    # ---- feature gather: compact the strided 6x6 grid with a 0/1 selection
    # matmul per sample; write rows in torch's (C, H, W) flatten order.
    for b in range(bt):
        u = jnp.dot(z2_sc[:, b * _SEG:b * _SEG + _SEL_LANES], sel_ref[...],
                    preferred_element_type=jnp.float32)   # (16, 36)
        for c in range(16):
            feat_sc[b:b + 1, c * 36:(c + 1) * 36] = u[c:c + 1, :]

    # ---- MLP head ------------------------------------------------------------
    h = jnp.dot(feat_sc[...], fw1_ref[...], preferred_element_type=jnp.float32)
    h = jnp.maximum(h + fb1_ref[...], 0.0)
    h = jnp.dot(h, fw2_ref[...], preferred_element_type=jnp.float32)
    h = jnp.maximum(h + fb2_ref[...], 0.0)
    out_ref[...] = jnp.dot(h, fw3_ref[...],
                           preferred_element_type=jnp.float32) + fb3_ref[...]


# ----------------------------- wrapper ---------------------------------------

def cifar_cnn_forward(x_nchw, params):
    b = x_nchw.shape[0]

    # Batch tile: 8 samples per grid step when possible, otherwise pad B up to
    # a multiple of 8 (or take the whole small batch in one step).
    if b % 8 == 0 or b > 8:
        bt = 8
    else:
        bt = b
    b_pad = math.ceil(b / bt) * bt
    if b_pad != b:
        x_nchw = jnp.pad(x_nchw, ((0, b_pad - b), (0, 0), (0, 0), (0, 0)))

    m = bt * _SEG
    n = m - _PAD_TAIL

    # Input: channels-first slab, one zero-padded 1280-lane segment per sample.
    x_cf = jnp.transpose(x_nchw, (1, 0, 2, 3)).reshape(3, b_pad, _H * _W)
    x_slab = jnp.pad(x_cf, ((0, 0), (0, 0), (0, _SEG - _H * _W)))
    x_slab = x_slab.reshape(3, b_pad * _SEG)

    # Conv weights with the 3x3 taps folded into the contraction dimension.
    # Row order of the in-kernel patches is (tap k = dy*3+dx) major, cin minor.
    w1f = jnp.transpose(params["conv1_w"], (0, 2, 3, 1)).reshape(8, 27)
    w2f = jnp.transpose(params["conv2_w"], (0, 2, 3, 1)).reshape(16, 72)
    b1 = params["conv1_b"].reshape(8, 1)
    b2 = params["conv2_b"].reshape(16, 1)

    # Constant 0/1 selection matrix: pool2 output (u, v) lives at lane
    # 128*u + 4*v of the sample's slab segment.
    uu, vv = np.meshgrid(np.arange(6), np.arange(6), indexing="ij")
    pos = (128 * uu + 4 * vv).reshape(-1)                       # (36,)
    sel = jnp.asarray(
        (np.arange(_SEL_LANES)[:, None] == pos[None, :]).astype(np.float32))

    fw1, fb1 = params["fc1_w"].T, params["fc1_b"].reshape(1, -1)
    fw2, fb2 = params["fc2_w"].T, params["fc2_b"].reshape(1, -1)
    fw3, fb3 = params["fc3_w"].T, params["fc3_b"].reshape(1, -1)

    weights = (w1f, b1, w2f, b2, sel, fw1, fb1, fw2, fb2, fw3, fb3)

    def _full_spec(a):
        return pl.BlockSpec(a.shape, lambda i: (0,) * a.ndim)

    out = pl.pallas_call(
        _fused_cifar_kernel,
        out_shape=jax.ShapeDtypeStruct((b_pad, 10), jnp.float32),
        grid=(b_pad // bt,),
        in_specs=[pl.BlockSpec((3, m), lambda i: (0, i))]
                 + [_full_spec(w) for w in weights],
        out_specs=pl.BlockSpec((bt, 10), lambda i: (i, 0)),
        scratch_shapes=[
            pltpu.VMEM((27, n), jnp.float32),    # conv1 patches
            pltpu.VMEM((8, m), jnp.float32),     # conv1 output
            pltpu.VMEM((8, m), jnp.float32),     # pool1 output
            pltpu.VMEM((72, n), jnp.float32),    # conv2 patches
            pltpu.VMEM((16, m), jnp.float32),    # conv2 output
            pltpu.VMEM((16, m), jnp.float32),    # pool2 output
            pltpu.VMEM((bt, _FEAT), jnp.float32),  # flattened features
        ],
        compiler_params=pltpu.CompilerParams(
            dimension_semantics=("parallel",)),
    )(x_slab, *weights)

    return out[:b]


# ----------------------------- reference (pure JAX) --------------------------

def reference_forward(x, params):
    hi = jax.lax.Precision.HIGHEST

    def conv(x, w, b):
        y = jax.lax.conv_general_dilated(
            x, w, (1, 1), "VALID",
            dimension_numbers=("NCHW", "OIHW", "NCHW"), precision=hi)
        return y + b.reshape(1, -1, 1, 1)

    def pool(x):
        return jax.lax.reduce_window(x, -jnp.inf, jax.lax.max,
                                     (1, 1, 2, 2), (1, 1, 2, 2), "VALID")

    y = pool(jax.nn.relu(conv(x, params["conv1_w"], params["conv1_b"])))
    y = pool(jax.nn.relu(conv(y, params["conv2_w"], params["conv2_b"])))
    y = y.reshape(y.shape[0], -1)
    y = jax.nn.relu(jnp.dot(y, params["fc1_w"].T, precision=hi) + params["fc1_b"])
    y = jax.nn.relu(jnp.dot(y, params["fc2_w"].T, precision=hi) + params["fc2_b"])
    return jnp.dot(y, params["fc3_w"].T, precision=hi) + params["fc3_b"]


# ----------------------------- params ----------------------------------------

def init_params(key):
    def uni(k, shape, fan_in):
        bound = 1.0 / (fan_in ** 0.5)
        return jax.random.uniform(k, shape, jnp.float32, -bound, bound)

    ks = jax.random.split(key, 10)
    return {
        # PyTorch conventions: conv (Cout, Cin, KH, KW), linear (out, in)
        "conv1_w": uni(ks[0], (8, 3, 3, 3), 3 * 9),
        "conv1_b": uni(ks[1], (8,), 3 * 9),
        "conv2_w": uni(ks[2], (16, 8, 3, 3), 8 * 9),
        "conv2_b": uni(ks[3], (16,), 8 * 9),
        "fc1_w": uni(ks[4], (120, 16 * 6 * 6), 16 * 6 * 6),
        "fc1_b": uni(ks[5], (120,), 16 * 6 * 6),
        "fc2_w": uni(ks[6], (84, 120), 120),
        "fc2_b": uni(ks[7], (84,), 120),
        "fc3_w": uni(ks[8], (10, 84), 84),
        "fc3_b": uni(ks[9], (10,), 84),
    }


if __name__ == "__main__":
    key = jax.random.PRNGKey(0)
    k_x, k_p = jax.random.split(key)
    params = init_params(k_p)
    # CIFAR-shaped input (fc1 = 16*6*6 requires 32x32 spatial), small batch.
    x = jax.random.normal(k_x, (2, 3, 32, 32), jnp.float32)

    out = jax.block_until_ready(jax.jit(cifar_cnn_forward)(x, params))
    assert out.shape == (2, 10), out.shape

    ref = jax.block_until_ready(jax.jit(reference_forward)(x, params))
    if not jnp.allclose(out, ref, rtol=1e-3, atol=1e-3):
        raise AssertionError(
            f"mismatch vs reference, max abs diff="
            f"{float(jnp.max(jnp.abs(out - ref)))}")

    print("KERNEL_OK")
</pallas_src>

<mosaic_0001>
module attributes {stable_mosaic.version = 11 : i64} {
  func.func @_fused_cifar_kernel(%arg0: i32, %arg1: memref<3x2560xf32, #tpu.memory_space<vmem>>, %arg2: memref<8x27xf32, #tpu.memory_space<vmem>>, %arg3: memref<8x1xf32, #tpu.memory_space<vmem>>, %arg4: memref<16x72xf32, #tpu.memory_space<vmem>>, %arg5: memref<16x1xf32, #tpu.memory_space<vmem>>, %arg6: memref<768x36xf32, #tpu.memory_space<vmem>>, %arg7: memref<576x120xf32, #tpu.memory_space<vmem>>, %arg8: memref<1x120xf32, #tpu.memory_space<vmem>>, %arg9: memref<120x84xf32, #tpu.memory_space<vmem>>, %arg10: memref<1x84xf32, #tpu.memory_space<vmem>>, %arg11: memref<84x10xf32, #tpu.memory_space<vmem>>, %arg12: memref<1x10xf32, #tpu.memory_space<vmem>>, %arg13: memref<2x10xf32, #tpu.memory_space<vmem>>, %arg14: memref<27x2304xf32, #tpu.memory_space<vmem>>, %arg15: memref<8x2560xf32, #tpu.memory_space<vmem>>, %arg16: memref<8x2560xf32, #tpu.memory_space<vmem>>, %arg17: memref<72x2304xf32, #tpu.memory_space<vmem>>, %arg18: memref<16x2560xf32, #tpu.memory_space<vmem>>, %arg19: memref<16x2560xf32, #tpu.memory_space<vmem>>, %arg20: memref<2x576xf32, #tpu.memory_space<vmem>>) attributes {dimension_semantics = [#tpu.dimension_semantics<parallel>], iteration_bounds = array<i64: 1>, scalar_prefetch = 0 : i64, scratch_operands = 7 : i64, tpu.core_type = #tpu.core_type<tc>, window_params = [{transform_indices = @transform_0, window_bounds = array<i64: 3, 2560>}, {pipeline_mode = #tpu.pipeline_mode<synchronous>, transform_indices = @transform_1, window_bounds = array<i64: 8, 27>}, {pipeline_mode = #tpu.pipeline_mode<synchronous>, transform_indices = @transform_2, window_bounds = array<i64: 8, 1>}, {pipeline_mode = #tpu.pipeline_mode<synchronous>, transform_indices = @transform_3, window_bounds = array<i64: 16, 72>}, {pipeline_mode = #tpu.pipeline_mode<synchronous>, transform_indices = @transform_4, window_bounds = array<i64: 16, 1>}, {pipeline_mode = #tpu.pipeline_mode<synchronous>, transform_indices = @transform_5, window_bounds = array<i64: 768, 36>}, {pipeline_mode = #tpu.pipeline_mode<synchronous>, transform_indices = @transform_6, window_bounds = array<i64: 576, 120>}, {pipeline_mode = #tpu.pipeline_mode<synchronous>, transform_indices = @transform_7, window_bounds = array<i64: 1, 120>}, {pipeline_mode = #tpu.pipeline_mode<synchronous>, transform_indices = @transform_8, window_bounds = array<i64: 120, 84>}, {pipeline_mode = #tpu.pipeline_mode<synchronous>, transform_indices = @transform_9, window_bounds = array<i64: 1, 84>}, {pipeline_mode = #tpu.pipeline_mode<synchronous>, transform_indices = @transform_10, window_bounds = array<i64: 84, 10>}, {pipeline_mode = #tpu.pipeline_mode<synchronous>, transform_indices = @transform_11, window_bounds = array<i64: 1, 10>}, {transform_indices = @transform_12, window_bounds = array<i64: 2, 10>}]} {
    %c0 = arith.constant 0 : index
    %c0_0 = arith.constant 0 : index
    %0 = vector.load %arg1[%c0, %c0_0] : memref<3x2560xf32, #tpu.memory_space<vmem>>, vector<3x2304xf32>
    %c0_1 = arith.constant 0 : index
    %c0_2 = arith.constant 0 : index
    %1 = vector.load %arg14[%c0_1, %c0_2] : memref<27x2304xf32, #tpu.memory_space<vmem>>, vector<3x2304xf32>
    tpu.vector_store %arg14[%c0_1, %c0_2], %0 {strides = array<i32>} : memref<27x2304xf32, #tpu.memory_space<vmem>>, vector<3x2304xf32>,
    %c0_3 = arith.constant 0 : index
    %c1 = arith.constant 1 : index
    %2 = vector.load %arg1[%c0_3, %c1] : memref<3x2560xf32, #tpu.memory_space<vmem>>, vector<3x2304xf32>
    %c3 = arith.constant 3 : index
    %c0_4 = arith.constant 0 : index
    %3 = vector.load %arg14[%c3, %c0_4] : memref<27x2304xf32, #tpu.memory_space<vmem>>, vector<3x2304xf32>
    tpu.vector_store %arg14[%c3, %c0_4], %2 {strides = array<i32>} : memref<27x2304xf32, #tpu.memory_space<vmem>>, vector<3x2304xf32>,
    %c0_5 = arith.constant 0 : index
    %c2 = arith.constant 2 : index
    %4 = vector.load %arg1[%c0_5, %c2] : memref<3x2560xf32, #tpu.memory_space<vmem>>, vector<3x2304xf32>
    %c6 = arith.constant 6 : index
    %c0_6 = arith.constant 0 : index
    %5 = vector.load %arg14[%c6, %c0_6] : memref<27x2304xf32, #tpu.memory_space<vmem>>, vector<3x2304xf32>
    tpu.vector_store %arg14[%c6, %c0_6], %4 {strides = array<i32>} : memref<27x2304xf32, #tpu.memory_space<vmem>>, vector<3x2304xf32>,
    %c0_7 = arith.constant 0 : index
    %c32 = arith.constant 32 : index
    %6 = vector.load %arg1[%c0_7, %c32] : memref<3x2560xf32, #tpu.memory_space<vmem>>, vector<3x2304xf32>
    %c9 = arith.constant 9 : index
    %c0_8 = arith.constant 0 : index
    %7 = vector.load %arg14[%c9, %c0_8] : memref<27x2304xf32, #tpu.memory_space<vmem>>, vector<3x2304xf32>
    tpu.vector_store %arg14[%c9, %c0_8], %6 {strides = array<i32>} : memref<27x2304xf32, #tpu.memory_space<vmem>>, vector<3x2304xf32>,
    %c0_9 = arith.constant 0 : index
    %c33 = arith.constant 33 : index
    %8 = vector.load %arg1[%c0_9, %c33] : memref<3x2560xf32, #tpu.memory_space<vmem>>, vector<3x2304xf32>
    %c12 = arith.constant 12 : index
    %c0_10 = arith.constant 0 : index
    %9 = vector.load %arg14[%c12, %c0_10] : memref<27x2304xf32, #tpu.memory_space<vmem>>, vector<3x2304xf32>
    tpu.vector_store %arg14[%c12, %c0_10], %8 {strides = array<i32>} : memref<27x2304xf32, #tpu.memory_space<vmem>>, vector<3x2304xf32>,
    %c0_11 = arith.constant 0 : index
    %c34 = arith.constant 34 : index
    %10 = vector.load %arg1[%c0_11, %c34] : memref<3x2560xf32, #tpu.memory_space<vmem>>, vector<3x2304xf32>
    %c15 = arith.constant 15 : index
    %c0_12 = arith.constant 0 : index
    %11 = vector.load %arg14[%c15, %c0_12] : memref<27x2304xf32, #tpu.memory_space<vmem>>, vector<3x2304xf32>
    tpu.vector_store %arg14[%c15, %c0_12], %10 {strides = array<i32>} : memref<27x2304xf32, #tpu.memory_space<vmem>>, vector<3x2304xf32>,
    %c0_13 = arith.constant 0 : index
    %c64 = arith.constant 64 : index
    %12 = vector.load %arg1[%c0_13, %c64] : memref<3x2560xf32, #tpu.memory_space<vmem>>, vector<3x2304xf32>
    %c18 = arith.constant 18 : index
    %c0_14 = arith.constant 0 : index
    %13 = vector.load %arg14[%c18, %c0_14] : memref<27x2304xf32, #tpu.memory_space<vmem>>, vector<3x2304xf32>
    tpu.vector_store %arg14[%c18, %c0_14], %12 {strides = array<i32>} : memref<27x2304xf32, #tpu.memory_space<vmem>>, vector<3x2304xf32>,
    %c0_15 = arith.constant 0 : index
    %c65 = arith.constant 65 : index
    %14 = vector.load %arg1[%c0_15, %c65] : memref<3x2560xf32, #tpu.memory_space<vmem>>, vector<3x2304xf32>
    %c21 = arith.constant 21 : index
    %c0_16 = arith.constant 0 : index
    %15 = vector.load %arg14[%c21, %c0_16] : memref<27x2304xf32, #tpu.memory_space<vmem>>, vector<3x2304xf32>
    tpu.vector_store %arg14[%c21, %c0_16], %14 {strides = array<i32>} : memref<27x2304xf32, #tpu.memory_space<vmem>>, vector<3x2304xf32>,
    %c0_17 = arith.constant 0 : index
    %c66 = arith.constant 66 : index
    %16 = vector.load %arg1[%c0_17, %c66] : memref<3x2560xf32, #tpu.memory_space<vmem>>, vector<3x2304xf32>
    %c24 = arith.constant 24 : index
    %c0_18 = arith.constant 0 : index
    %17 = vector.load %arg14[%c24, %c0_18] : memref<27x2304xf32, #tpu.memory_space<vmem>>, vector<3x2304xf32>
    tpu.vector_store %arg14[%c24, %c0_18], %16 {strides = array<i32>} : memref<27x2304xf32, #tpu.memory_space<vmem>>, vector<3x2304xf32>,
    %c0_19 = arith.constant 0 : index
    %c0_20 = arith.constant 0 : index
    %18 = vector.load %arg2[%c0_19, %c0_20] : memref<8x27xf32, #tpu.memory_space<vmem>>, vector<8x27xf32>
    %c0_21 = arith.constant 0 : index
    %c0_22 = arith.constant 0 : index
    %19 = vector.load %arg14[%c0_21, %c0_22] : memref<27x2304xf32, #tpu.memory_space<vmem>>, vector<27x2304xf32>
    %cst = arith.constant dense<0.000000e+00> : vector<8x2304xf32>
    %20 = tpu.matmul %18, %19, %cst {dimension_numbers = #tpu.dot_dimension_numbers<[1], [0], [0], [1], [0, 0, 1, 1], [], []>} : vector<8x27xf32>, vector<27x2304xf32>, vector<8x2304xf32> -> vector<8x2304xf32>
    %c0_23 = arith.constant 0 : index
    %c0_24 = arith.constant 0 : index
    %21 = vector.load %arg3[%c0_23, %c0_24] : memref<8x1xf32, #tpu.memory_space<vmem>>, vector<8x1xf32>
    %22 = vector.broadcast %21 : vector<8x1xf32> to vector<8x2304xf32>
    %23 = arith.addf %20, %22 : vector<8x2304xf32>
    %cst_25 = arith.constant 0.000000e+00 : f32
    %24 = vector.broadcast %cst_25 : f32 to vector<8x2304xf32>
    %25 = arith.maximumf %23, %24 : vector<8x2304xf32>
    %c0_26 = arith.constant 0 : index
    %c0_27 = arith.constant 0 : index
    %26 = vector.load %arg15[%c0_26, %c0_27] : memref<8x2560xf32, #tpu.memory_space<vmem>>, vector<8x2304xf32>
    tpu.vector_store %arg15[%c0_26, %c0_27], %25 {strides = array<i32>} : memref<8x2560xf32, #tpu.memory_space<vmem>>, vector<8x2304xf32>,
    %cst_28 = arith.constant 0.000000e+00 : f32
    %27 = vector.broadcast %cst_28 : f32 to vector<8x256xf32>
    %c0_29 = arith.constant 0 : index
    %c2304 = arith.constant 2304 : index
    %28 = vector.load %arg15[%c0_29, %c2304] : memref<8x2560xf32, #tpu.memory_space<vmem>>, vector<8x256xf32>
    tpu.vector_store %arg15[%c0_29, %c2304], %27 {strides = array<i32>} : memref<8x2560xf32, #tpu.memory_space<vmem>>, vector<8x256xf32>,
    %c0_30 = arith.constant 0 : index
    %c0_31 = arith.constant 0 : index
    %29 = vector.load %arg15[%c0_30, %c0_31] : memref<8x2560xf32, #tpu.memory_space<vmem>>, vector<8x2304xf32>
    %c0_32 = arith.constant 0 : index
    %c1_33 = arith.constant 1 : index
    %30 = vector.load %arg15[%c0_32, %c1_33] : memref<8x2560xf32, #tpu.memory_space<vmem>>, vector<8x2304xf32>
    %31 = arith.maximumf %29, %30 : vector<8x2304xf32>
    %c0_34 = arith.constant 0 : index
    %c32_35 = arith.constant 32 : index
    %32 = vector.load %arg15[%c0_34, %c32_35] : memref<8x2560xf32, #tpu.memory_space<vmem>>, vector<8x2304xf32>
    %c0_36 = arith.constant 0 : index
    %c33_37 = arith.constant 33 : index
    %33 = vector.load %arg15[%c0_36, %c33_37] : memref<8x2560xf32, #tpu.memory_space<vmem>>, vector<8x2304xf32>
    %34 = arith.maximumf %32, %33 : vector<8x2304xf32>
    %35 = arith.maximumf %31, %34 : vector<8x2304xf32>
    %c0_38 = arith.constant 0 : index
    %c0_39 = arith.constant 0 : index
    %36 = vector.load %arg16[%c0_38, %c0_39] : memref<8x2560xf32, #tpu.memory_space<vmem>>, vector<8x2304xf32>
    tpu.vector_store %arg16[%c0_38, %c0_39], %35 {strides = array<i32>} : memref<8x2560xf32, #tpu.memory_space<vmem>>, vector<8x2304xf32>,
    %cst_40 = arith.constant 0.000000e+00 : f32
    %37 = vector.broadcast %cst_40 : f32 to vector<8x256xf32>
    %c0_41 = arith.constant 0 : index
    %c2304_42 = arith.constant 2304 : index
    %38 = vector.load %arg16[%c0_41, %c2304_42] : memref<8x2560xf32, #tpu.memory_space<vmem>>, vector<8x256xf32>
    tpu.vector_store %arg16[%c0_41, %c2304_42], %37 {strides = array<i32>} : memref<8x2560xf32, #tpu.memory_space<vmem>>, vector<8x256xf32>,
    %c0_43 = arith.constant 0 : index
    %c0_44 = arith.constant 0 : index
    %39 = vector.load %arg16[%c0_43, %c0_44] : memref<8x2560xf32, #tpu.memory_space<vmem>>, vector<8x2304xf32>
    %c0_45 = arith.constant 0 : index
    %c0_46 = arith.constant 0 : index
    %40 = vector.load %arg17[%c0_45, %c0_46] : memref<72x2304xf32, #tpu.memory_space<vmem>>, vector<8x2304xf32>
    tpu.vector_store %arg17[%c0_45, %c0_46], %39 {strides = array<i32>} : memref<72x2304xf32, #tpu.memory_space<vmem>>, vector<8x2304xf32>,
    %c0_47 = arith.constant 0 : index
    %c2_48 = arith.constant 2 : index
    %41 = vector.load %arg16[%c0_47, %c2_48] : memref<8x2560xf32, #tpu.memory_space<vmem>>, vector<8x2304xf32>
    %c8 = arith.constant 8 : index
    %c0_49 = arith.constant 0 : index
    %42 = vector.load %arg17[%c8, %c0_49] : memref<72x2304xf32, #tpu.memory_space<vmem>>, vector<8x2304xf32>
    tpu.vector_store %arg17[%c8, %c0_49], %41 {strides = array<i32>} : memref<72x2304xf32, #tpu.memory_space<vmem>>, vector<8x2304xf32>,
    %c0_50 = arith.constant 0 : index
    %c4 = arith.constant 4 : index
    %43 = vector.load %arg16[%c0_50, %c4] : memref<8x2560xf32, #tpu.memory_space<vmem>>, vector<8x2304xf32>
    %c16 = arith.constant 16 : index
    %c0_51 = arith.constant 0 : index
    %44 = vector.load %arg17[%c16, %c0_51] : memref<72x2304xf32, #tpu.memory_space<vmem>>, vector<8x2304xf32>
    tpu.vector_store %arg17[%c16, %c0_51], %43 {strides = array<i32>} : memref<72x2304xf32, #tpu.memory_space<vmem>>, vector<8x2304xf32>,
    %c0_52 = arith.constant 0 : index
    %c64_53 = arith.constant 64 : index
    %45 = vector.load %arg16[%c0_52, %c64_53] : memref<8x2560xf32, #tpu.memory_space<vmem>>, vector<8x2304xf32>
    %c24_54 = arith.constant 24 : index
    %c0_55 = arith.constant 0 : index
    %46 = vector.load %arg17[%c24_54, %c0_55] : memref<72x2304xf32, #tpu.memory_space<vmem>>, vector<8x2304xf32>
    tpu.vector_store %arg17[%c24_54, %c0_55], %45 {strides = array<i32>} : memref<72x2304xf32, #tpu.memory_space<vmem>>, vector<8x2304xf32>,
    %c0_56 = arith.constant 0 : index
    %c66_57 = arith.constant 66 : index
    %47 = vector.load %arg16[%c0_56, %c66_57] : memref<8x2560xf32, #tpu.memory_space<vmem>>, vector<8x2304xf32>
    %c32_58 = arith.constant 32 : index
    %c0_59 = arith.constant 0 : index
    %48 = vector.load %arg17[%c32_58, %c0_59] : memref<72x2304xf32, #tpu.memory_space<vmem>>, vector<8x2304xf32>
    tpu.vector_store %arg17[%c32_58, %c0_59], %47 {strides = array<i32>} : memref<72x2304xf32, #tpu.memory_space<vmem>>, vector<8x2304xf32>,
    %c0_60 = arith.constant 0 : index
    %c68 = arith.constant 68 : index
    %49 = vector.load %arg16[%c0_60, %c68] : memref<8x2560xf32, #tpu.memory_space<vmem>>, vector<8x2304xf32>
    %c40 = arith.constant 40 : index
    %c0_61 = arith.constant 0 : index
    %50 = vector.load %arg17[%c40, %c0_61] : memref<72x2304xf32, #tpu.memory_space<vmem>>, vector<8x2304xf32>
    tpu.vector_store %arg17[%c40, %c0_61], %49 {strides = array<i32>} : memref<72x2304xf32, #tpu.memory_space<vmem>>, vector<8x2304xf32>,
    %c0_62 = arith.constant 0 : index
    %c128 = arith.constant 128 : index
    %51 = vector.load %arg16[%c0_62, %c128] : memref<8x2560xf32, #tpu.memory_space<vmem>>, vector<8x2304xf32>
    %c48 = arith.constant 48 : index
    %c0_63 = arith.constant 0 : index
    %52 = vector.load %arg17[%c48, %c0_63] : memref<72x2304xf32, #tpu.memory_space<vmem>>, vector<8x2304xf32>
    tpu.vector_store %arg17[%c48, %c0_63], %51 {strides = array<i32>} : memref<72x2304xf32, #tpu.memory_space<vmem>>, vector<8x2304xf32>,
    %c0_64 = arith.constant 0 : index
    %c130 = arith.constant 130 : index
    %53 = vector.load %arg16[%c0_64, %c130] : memref<8x2560xf32, #tpu.memory_space<vmem>>, vector<8x2304xf32>
    %c56 = arith.constant 56 : index
    %c0_65 = arith.constant 0 : index
    %54 = vector.load %arg17[%c56, %c0_65] : memref<72x2304xf32, #tpu.memory_space<vmem>>, vector<8x2304xf32>
    tpu.vector_store %arg17[%c56, %c0_65], %53 {strides = array<i32>} : memref<72x2304xf32, #tpu.memory_space<vmem>>, vector<8x2304xf32>,
    %c0_66 = arith.constant 0 : index
    %c132 = arith.constant 132 : index
    %55 = vector.load %arg16[%c0_66, %c132] : memref<8x2560xf32, #tpu.memory_space<vmem>>, vector<8x2304xf32>
    %c64_67 = arith.constant 64 : index
    %c0_68 = arith.constant 0 : index
    %56 = vector.load %arg17[%c64_67, %c0_68] : memref<72x2304xf32, #tpu.memory_space<vmem>>, vector<8x2304xf32>
    tpu.vector_store %arg17[%c64_67, %c0_68], %55 {strides = array<i32>} : memref<72x2304xf32, #tpu.memory_space<vmem>>, vector<8x2304xf32>,
    %c0_69 = arith.constant 0 : index
    %c0_70 = arith.constant 0 : index
    %57 = vector.load %arg4[%c0_69, %c0_70] : memref<16x72xf32, #tpu.memory_space<vmem>>, vector<16x72xf32>
    %c0_71 = arith.constant 0 : index
    %c0_72 = arith.constant 0 : index
    %58 = vector.load %arg17[%c0_71, %c0_72] : memref<72x2304xf32, #tpu.memory_space<vmem>>, vector<72x2304xf32>
    %cst_73 = arith.constant dense<0.000000e+00> : vector<16x2304xf32>
    %59 = tpu.matmul %57, %58, %cst_73 {dimension_numbers = #tpu.dot_dimension_numbers<[1], [0], [0], [1], [0, 0, 1, 1], [], []>} : vector<16x72xf32>, vector<72x2304xf32>, vector<16x2304xf32> -> vector<16x2304xf32>
    %c0_74 = arith.constant 0 : index
    %c0_75 = arith.constant 0 : index
    %60 = vector.load %arg5[%c0_74, %c0_75] : memref<16x1xf32, #tpu.memory_space<vmem>>, vector<16x1xf32>
    %61 = vector.broadcast %60 : vector<16x1xf32> to vector<16x2304xf32>
    %62 = arith.addf %59, %61 : vector<16x2304xf32>
    %cst_76 = arith.constant 0.000000e+00 : f32
    %63 = vector.broadcast %cst_76 : f32 to vector<16x2304xf32>
    %64 = arith.maximumf %62, %63 : vector<16x2304xf32>
    %c0_77 = arith.constant 0 : index
    %c0_78 = arith.constant 0 : index
    %65 = vector.load %arg18[%c0_77, %c0_78] : memref<16x2560xf32, #tpu.memory_space<vmem>>, vector<16x2304xf32>
    tpu.vector_store %arg18[%c0_77, %c0_78], %64 {strides = array<i32>} : memref<16x2560xf32, #tpu.memory_space<vmem>>, vector<16x2304xf32>,
    %cst_79 = arith.constant 0.000000e+00 : f32
    %66 = vector.broadcast %cst_79 : f32 to vector<16x256xf32>
    %c0_80 = arith.constant 0 : index
    %c2304_81 = arith.constant 2304 : index
    %67 = vector.load %arg18[%c0_80, %c2304_81] : memref<16x2560xf32, #tpu.memory_space<vmem>>, vector<16x256xf32>
    tpu.vector_store %arg18[%c0_80, %c2304_81], %66 {strides = array<i32>} : memref<16x2560xf32, #tpu.memory_space<vmem>>, vector<16x256xf32>,
    %c0_82 = arith.constant 0 : index
    %c0_83 = arith.constant 0 : index
    %68 = vector.load %arg18[%c0_82, %c0_83] : memref<16x2560xf32, #tpu.memory_space<vmem>>, vector<16x2304xf32>
    %c0_84 = arith.constant 0 : index
    %c2_85 = arith.constant 2 : index
    %69 = vector.load %arg18[%c0_84, %c2_85] : memref<16x2560xf32, #tpu.memory_space<vmem>>, vector<16x2304xf32>
    %70 = arith.maximumf %68, %69 : vector<16x2304xf32>
    %c0_86 = arith.constant 0 : index
    %c64_87 = arith.constant 64 : index
    %71 = vector.load %arg18[%c0_86, %c64_87] : memref<16x2560xf32, #tpu.memory_space<vmem>>, vector<16x2304xf32>
    %c0_88 = arith.constant 0 : index
    %c66_89 = arith.constant 66 : index
    %72 = vector.load %arg18[%c0_88, %c66_89] : memref<16x2560xf32, #tpu.memory_space<vmem>>, vector<16x2304xf32>
    %73 = arith.maximumf %71, %72 : vector<16x2304xf32>
    %74 = arith.maximumf %70, %73 : vector<16x2304xf32>
    %c0_90 = arith.constant 0 : index
    %c0_91 = arith.constant 0 : index
    %75 = vector.load %arg19[%c0_90, %c0_91] : memref<16x2560xf32, #tpu.memory_space<vmem>>, vector<16x2304xf32>
    tpu.vector_store %arg19[%c0_90, %c0_91], %74 {strides = array<i32>} : memref<16x2560xf32, #tpu.memory_space<vmem>>, vector<16x2304xf32>,
    %cst_92 = arith.constant 0.000000e+00 : f32
    %76 = vector.broadcast %cst_92 : f32 to vector<16x256xf32>
    %c0_93 = arith.constant 0 : index
    %c2304_94 = arith.constant 2304 : index
    %77 = vector.load %arg19[%c0_93, %c2304_94] : memref<16x2560xf32, #tpu.memory_space<vmem>>, vector<16x256xf32>
    tpu.vector_store %arg19[%c0_93, %c2304_94], %76 {strides = array<i32>} : memref<16x2560xf32, #tpu.memory_space<vmem>>, vector<16x256xf32>,
    %c0_95 = arith.constant 0 : index
    %c0_96 = arith.constant 0 : index
    %78 = vector.load %arg19[%c0_95, %c0_96] : memref<16x2560xf32, #tpu.memory_space<vmem>>, vector<16x768xf32>
    %c0_97 = arith.constant 0 : index
    %c0_98 = arith.constant 0 : index
    %79 = vector.load %arg6[%c0_97, %c0_98] : memref<768x36xf32, #tpu.memory_space<vmem>>, vector<768x36xf32>
    %cst_99 = arith.constant dense<0.000000e+00> : vector<16x36xf32>
    %80 = tpu.matmul %78, %79, %cst_99 {dimension_numbers = #tpu.dot_dimension_numbers<[1], [0], [0], [1], [0, 0, 1, 1], [], []>} : vector<16x768xf32>, vector<768x36xf32>, vector<16x36xf32> -> vector<16x36xf32>
    %81 = vector.extract_strided_slice %80 {offsets = [0, 0], sizes = [1, 36], strides = [1, 1]} : vector<16x36xf32> to vector<1x36xf32>
    %c0_100 = arith.constant 0 : index
    %c0_101 = arith.constant 0 : index
    %82 = vector.load %arg20[%c0_100, %c0_101] : memref<2x576xf32, #tpu.memory_space<vmem>>, vector<1x36xf32>
    tpu.vector_store %arg20[%c0_100, %c0_101], %81 {strides = array<i32>} : memref<2x576xf32, #tpu.memory_space<vmem>>, vector<1x36xf32>,
    %83 = vector.extract_strided_slice %80 {offsets = [1, 0], sizes = [1, 36], strides = [1, 1]} : vector<16x36xf32> to vector<1x36xf32>
    %c0_102 = arith.constant 0 : index
    %c36 = arith.constant 36 : index
    %84 = vector.load %arg20[%c0_102, %c36] : memref<2x576xf32, #tpu.memory_space<vmem>>, vector<1x36xf32>
    tpu.vector_store %arg20[%c0_102, %c36], %83 {strides = array<i32>} : memref<2x576xf32, #tpu.memory_space<vmem>>, vector<1x36xf32>,
    %85 = vector.extract_strided_slice %80 {offsets = [2, 0], sizes = [1, 36], strides = [1, 1]} : vector<16x36xf32> to vector<1x36xf32>
    %c0_103 = arith.constant 0 : index
    %c72 = arith.constant 72 : index
    %86 = vector.load %arg20[%c0_103, %c72] : memref<2x576xf32, #tpu.memory_space<vmem>>, vector<1x36xf32>
    tpu.vector_store %arg20[%c0_103, %c72], %85 {strides = array<i32>} : memref<2x576xf32, #tpu.memory_space<vmem>>, vector<1x36xf32>,
    %87 = vector.extract_strided_slice %80 {offsets = [3, 0], sizes = [1, 36], strides = [1, 1]} : vector<16x36xf32> to vector<1x36xf32>
    %c0_104 = arith.constant 0 : index
    %c108 = arith.constant 108 : index
    %88 = vector.load %arg20[%c0_104, %c108] : memref<2x576xf32, #tpu.memory_space<vmem>>, vector<1x36xf32>
    tpu.vector_store %arg20[%c0_104, %c108], %87 {strides = array<i32>} : memref<2x576xf32, #tpu.memory_space<vmem>>, vector<1x36xf32>,
    %89 = vector.extract_strided_slice %80 {offsets = [4, 0], sizes = [1, 36], strides = [1, 1]} : vector<16x36xf32> to vector<1x36xf32>
    %c0_105 = arith.constant 0 : index
    %c144 = arith.constant 144 : index
    %90 = vector.load %arg20[%c0_105, %c144] : memref<2x576xf32, #tpu.memory_space<vmem>>, vector<1x36xf32>
    tpu.vector_store %arg20[%c0_105, %c144], %89 {strides = array<i32>} : memref<2x576xf32, #tpu.memory_space<vmem>>, vector<1x36xf32>,
    %91 = vector.extract_strided_slice %80 {offsets = [5, 0], sizes = [1, 36], strides = [1, 1]} : vector<16x36xf32> to vector<1x36xf32>
    %c0_106 = arith.constant 0 : index
    %c180 = arith.constant 180 : index
    %92 = vector.load %arg20[%c0_106, %c180] : memref<2x576xf32, #tpu.memory_space<vmem>>, vector<1x36xf32>
    tpu.vector_store %arg20[%c0_106, %c180], %91 {strides = array<i32>} : memref<2x576xf32, #tpu.memory_space<vmem>>, vector<1x36xf32>,
    %93 = vector.extract_strided_slice %80 {offsets = [6, 0], sizes = [1, 36], strides = [1, 1]} : vector<16x36xf32> to vector<1x36xf32>
    %c0_107 = arith.constant 0 : index
    %c216 = arith.constant 216 : index
    %94 = vector.load %arg20[%c0_107, %c216] : memref<2x576xf32, #tpu.memory_space<vmem>>, vector<1x36xf32>
    tpu.vector_store %arg20[%c0_107, %c216], %93 {strides = array<i32>} : memref<2x576xf32, #tpu.memory_space<vmem>>, vector<1x36xf32>,
    %95 = vector.extract_strided_slice %80 {offsets = [7, 0], sizes = [1, 36], strides = [1, 1]} : vector<16x36xf32> to vector<1x36xf32>
    %c0_108 = arith.constant 0 : index
    %c252 = arith.constant 252 : index
    %96 = vector.load %arg20[%c0_108, %c252] : memref<2x576xf32, #tpu.memory_space<vmem>>, vector<1x36xf32>
    tpu.vector_store %arg20[%c0_108, %c252], %95 {strides = array<i32>} : memref<2x576xf32, #tpu.memory_space<vmem>>, vector<1x36xf32>,
    %97 = vector.extract_strided_slice %80 {offsets = [8, 0], sizes = [1, 36], strides = [1, 1]} : vector<16x36xf32> to vector<1x36xf32>
    %c0_109 = arith.constant 0 : index
    %c288 = arith.constant 288 : index
    %98 = vector.load %arg20[%c0_109, %c288] : memref<2x576xf32, #tpu.memory_space<vmem>>, vector<1x36xf32>
    tpu.vector_store %arg20[%c0_109, %c288], %97 {strides = array<i32>} : memref<2x576xf32, #tpu.memory_space<vmem>>, vector<1x36xf32>,
    %99 = vector.extract_strided_slice %80 {offsets = [9, 0], sizes = [1, 36], strides = [1, 1]} : vector<16x36xf32> to vector<1x36xf32>
    %c0_110 = arith.constant 0 : index
    %c324 = arith.constant 324 : index
    %100 = vector.load %arg20[%c0_110, %c324] : memref<2x576xf32, #tpu.memory_space<vmem>>, vector<1x36xf32>
    tpu.vector_store %arg20[%c0_110, %c324], %99 {strides = array<i32>} : memref<2x576xf32, #tpu.memory_space<vmem>>, vector<1x36xf32>,
    %101 = vector.extract_strided_slice %80 {offsets = [10, 0], sizes = [1, 36], strides = [1, 1]} : vector<16x36xf32> to vector<1x36xf32>
    %c0_111 = arith.constant 0 : index
    %c360 = arith.constant 360 : index
    %102 = vector.load %arg20[%c0_111, %c360] : memref<2x576xf32, #tpu.memory_space<vmem>>, vector<1x36xf32>
    tpu.vector_store %arg20[%c0_111, %c360], %101 {strides = array<i32>} : memref<2x576xf32, #tpu.memory_space<vmem>>, vector<1x36xf32>,
    %103 = vector.extract_strided_slice %80 {offsets = [11, 0], sizes = [1, 36], strides = [1, 1]} : vector<16x36xf32> to vector<1x36xf32>
    %c0_112 = arith.constant 0 : index
    %c396 = arith.constant 396 : index
    %104 = vector.load %arg20[%c0_112, %c396] : memref<2x576xf32, #tpu.memory_space<vmem>>, vector<1x36xf32>
    tpu.vector_store %arg20[%c0_112, %c396], %103 {strides = array<i32>} : memref<2x576xf32, #tpu.memory_space<vmem>>, vector<1x36xf32>,
    %105 = vector.extract_strided_slice %80 {offsets = [12, 0], sizes = [1, 36], strides = [1, 1]} : vector<16x36xf32> to vector<1x36xf32>
    %c0_113 = arith.constant 0 : index
    %c432 = arith.constant 432 : index
    %106 = vector.load %arg20[%c0_113, %c432] : memref<2x576xf32, #tpu.memory_space<vmem>>, vector<1x36xf32>
    tpu.vector_store %arg20[%c0_113, %c432], %105 {strides = array<i32>} : memref<2x576xf32, #tpu.memory_space<vmem>>, vector<1x36xf32>,
    %107 = vector.extract_strided_slice %80 {offsets = [13, 0], sizes = [1, 36], strides = [1, 1]} : vector<16x36xf32> to vector<1x36xf32>
    %c0_114 = arith.constant 0 : index
    %c468 = arith.constant 468 : index
    %108 = vector.load %arg20[%c0_114, %c468] : memref<2x576xf32, #tpu.memory_space<vmem>>, vector<1x36xf32>
    tpu.vector_store %arg20[%c0_114, %c468], %107 {strides = array<i32>} : memref<2x576xf32, #tpu.memory_space<vmem>>, vector<1x36xf32>,
    %109 = vector.extract_strided_slice %80 {offsets = [14, 0], sizes = [1, 36], strides = [1, 1]} : vector<16x36xf32> to vector<1x36xf32>
    %c0_115 = arith.constant 0 : index
    %c504 = arith.constant 504 : index
    %110 = vector.load %arg20[%c0_115, %c504] : memref<2x576xf32, #tpu.memory_space<vmem>>, vector<1x36xf32>
    tpu.vector_store %arg20[%c0_115, %c504], %109 {strides = array<i32>} : memref<2x576xf32, #tpu.memory_space<vmem>>, vector<1x36xf32>,
    %111 = vector.extract_strided_slice %80 {offsets = [15, 0], sizes = [1, 36], strides = [1, 1]} : vector<16x36xf32> to vector<1x36xf32>
    %c0_116 = arith.constant 0 : index
    %c540 = arith.constant 540 : index
    %112 = vector.load %arg20[%c0_116, %c540] : memref<2x576xf32, #tpu.memory_space<vmem>>, vector<1x36xf32>
    tpu.vector_store %arg20[%c0_116, %c540], %111 {strides = array<i32>} : memref<2x576xf32, #tpu.memory_space<vmem>>, vector<1x36xf32>,
    %c0_117 = arith.constant 0 : index
    %c1280 = arith.constant 1280 : index
    %113 = vector.load %arg19[%c0_117, %c1280] : memref<16x2560xf32, #tpu.memory_space<vmem>>, vector<16x768xf32>
    %c0_118 = arith.constant 0 : index
    %c0_119 = arith.constant 0 : index
    %114 = vector.load %arg6[%c0_118, %c0_119] : memref<768x36xf32, #tpu.memory_space<vmem>>, vector<768x36xf32>
    %cst_120 = arith.constant dense<0.000000e+00> : vector<16x36xf32>
    %115 = tpu.matmul %113, %114, %cst_120 {dimension_numbers = #tpu.dot_dimension_numbers<[1], [0], [0], [1], [0, 0, 1, 1], [], []>} : vector<16x768xf32>, vector<768x36xf32>, vector<16x36xf32> -> vector<16x36xf32>
    %116 = vector.extract_strided_slice %115 {offsets = [0, 0], sizes = [1, 36], strides = [1, 1]} : vector<16x36xf32> to vector<1x36xf32>
    %c1_121 = arith.constant 1 : index
    %c0_122 = arith.constant 0 : index
    %117 = vector.load %arg20[%c1_121, %c0_122] : memref<2x576xf32, #tpu.memory_space<vmem>>, vector<1x36xf32>
    tpu.vector_store %arg20[%c1_121, %c0_122], %116 {strides = array<i32>} : memref<2x576xf32, #tpu.memory_space<vmem>>, vector<1x36xf32>,
    %118 = vector.extract_strided_slice %115 {offsets = [1, 0], sizes = [1, 36], strides = [1, 1]} : vector<16x36xf32> to vector<1x36xf32>
    %c1_123 = arith.constant 1 : index
    %c36_124 = arith.constant 36 : index
    %119 = vector.load %arg20[%c1_123, %c36_124] : memref<2x576xf32, #tpu.memory_space<vmem>>, vector<1x36xf32>
    tpu.vector_store %arg20[%c1_123, %c36_124], %118 {strides = array<i32>} : memref<2x576xf32, #tpu.memory_space<vmem>>, vector<1x36xf32>,
    %120 = vector.extract_strided_slice %115 {offsets = [2, 0], sizes = [1, 36], strides = [1, 1]} : vector<16x36xf32> to vector<1x36xf32>
    %c1_125 = arith.constant 1 : index
    %c72_126 = arith.constant 72 : index
    %121 = vector.load %arg20[%c1_125, %c72_126] : memref<2x576xf32, #tpu.memory_space<vmem>>, vector<1x36xf32>
    tpu.vector_store %arg20[%c1_125, %c72_126], %120 {strides = array<i32>} : memref<2x576xf32, #tpu.memory_space<vmem>>, vector<1x36xf32>,
    %122 = vector.extract_strided_slice %115 {offsets = [3, 0], sizes = [1, 36], strides = [1, 1]} : vector<16x36xf32> to vector<1x36xf32>
    %c1_127 = arith.constant 1 : index
    %c108_128 = arith.constant 108 : index
    %123 = vector.load %arg20[%c1_127, %c108_128] : memref<2x576xf32, #tpu.memory_space<vmem>>, vector<1x36xf32>
    tpu.vector_store %arg20[%c1_127, %c108_128], %122 {strides = array<i32>} : memref<2x576xf32, #tpu.memory_space<vmem>>, vector<1x36xf32>,
    %124 = vector.extract_strided_slice %115 {offsets = [4, 0], sizes = [1, 36], strides = [1, 1]} : vector<16x36xf32> to vector<1x36xf32>
    %c1_129 = arith.constant 1 : index
    %c144_130 = arith.constant 144 : index
    %125 = vector.load %arg20[%c1_129, %c144_130] : memref<2x576xf32, #tpu.memory_space<vmem>>, vector<1x36xf32>
    tpu.vector_store %arg20[%c1_129, %c144_130], %124 {strides = array<i32>} : memref<2x576xf32, #tpu.memory_space<vmem>>, vector<1x36xf32>,
    %126 = vector.extract_strided_slice %115 {offsets = [5, 0], sizes = [1, 36], strides = [1, 1]} : vector<16x36xf32> to vector<1x36xf32>
    %c1_131 = arith.constant 1 : index
    %c180_132 = arith.constant 180 : index
    %127 = vector.load %arg20[%c1_131, %c180_132] : memref<2x576xf32, #tpu.memory_space<vmem>>, vector<1x36xf32>
    tpu.vector_store %arg20[%c1_131, %c180_132], %126 {strides = array<i32>} : memref<2x576xf32, #tpu.memory_space<vmem>>, vector<1x36xf32>,
    %128 = vector.extract_strided_slice %115 {offsets = [6, 0], sizes = [1, 36], strides = [1, 1]} : vector<16x36xf32> to vector<1x36xf32>
    %c1_133 = arith.constant 1 : index
    %c216_134 = arith.constant 216 : index
    %129 = vector.load %arg20[%c1_133, %c216_134] : memref<2x576xf32, #tpu.memory_space<vmem>>, vector<1x36xf32>
    tpu.vector_store %arg20[%c1_133, %c216_134], %128 {strides = array<i32>} : memref<2x576xf32, #tpu.memory_space<vmem>>, vector<1x36xf32>,
    %130 = vector.extract_strided_slice %115 {offsets = [7, 0], sizes = [1, 36], strides = [1, 1]} : vector<16x36xf32> to vector<1x36xf32>
    %c1_135 = arith.constant 1 : index
    %c252_136 = arith.constant 252 : index
    %131 = vector.load %arg20[%c1_135, %c252_136] : memref<2x576xf32, #tpu.memory_space<vmem>>, vector<1x36xf32>
    tpu.vector_store %arg20[%c1_135, %c252_136], %130 {strides = array<i32>} : memref<2x576xf32, #tpu.memory_space<vmem>>, vector<1x36xf32>,
    %132 = vector.extract_strided_slice %115 {offsets = [8, 0], sizes = [1, 36], strides = [1, 1]} : vector<16x36xf32> to vector<1x36xf32>
    %c1_137 = arith.constant 1 : index
    %c288_138 = arith.constant 288 : index
    %133 = vector.load %arg20[%c1_137, %c288_138] : memref<2x576xf32, #tpu.memory_space<vmem>>, vector<1x36xf32>
    tpu.vector_store %arg20[%c1_137, %c288_138], %132 {strides = array<i32>} : memref<2x576xf32, #tpu.memory_space<vmem>>, vector<1x36xf32>,
    %134 = vector.extract_strided_slice %115 {offsets = [9, 0], sizes = [1, 36], strides = [1, 1]} : vector<16x36xf32> to vector<1x36xf32>
    %c1_139 = arith.constant 1 : index
    %c324_140 = arith.constant 324 : index
    %135 = vector.load %arg20[%c1_139, %c324_140] : memref<2x576xf32, #tpu.memory_space<vmem>>, vector<1x36xf32>
    tpu.vector_store %arg20[%c1_139, %c324_140], %134 {strides = array<i32>} : memref<2x576xf32, #tpu.memory_space<vmem>>, vector<1x36xf32>,
    %136 = vector.extract_strided_slice %115 {offsets = [10, 0], sizes = [1, 36], strides = [1, 1]} : vector<16x36xf32> to vector<1x36xf32>
    %c1_141 = arith.constant 1 : index
    %c360_142 = arith.constant 360 : index
    %137 = vector.load %arg20[%c1_141, %c360_142] : memref<2x576xf32, #tpu.memory_space<vmem>>, vector<1x36xf32>
    tpu.vector_store %arg20[%c1_141, %c360_142], %136 {strides = array<i32>} : memref<2x576xf32, #tpu.memory_space<vmem>>, vector<1x36xf32>,
    %138 = vector.extract_strided_slice %115 {offsets = [11, 0], sizes = [1, 36], strides = [1, 1]} : vector<16x36xf32> to vector<1x36xf32>
    %c1_143 = arith.constant 1 : index
    %c396_144 = arith.constant 396 : index
    %139 = vector.load %arg20[%c1_143, %c396_144] : memref<2x576xf32, #tpu.memory_space<vmem>>, vector<1x36xf32>
    tpu.vector_store %arg20[%c1_143, %c396_144], %138 {strides = array<i32>} : memref<2x576xf32, #tpu.memory_space<vmem>>, vector<1x36xf32>,
    %140 = vector.extract_strided_slice %115 {offsets = [12, 0], sizes = [1, 36], strides = [1, 1]} : vector<16x36xf32> to vector<1x36xf32>
    %c1_145 = arith.constant 1 : index
    %c432_146 = arith.constant 432 : index
    %141 = vector.load %arg20[%c1_145, %c432_146] : memref<2x576xf32, #tpu.memory_space<vmem>>, vector<1x36xf32>
    tpu.vector_store %arg20[%c1_145, %c432_146], %140 {strides = array<i32>} : memref<2x576xf32, #tpu.memory_space<vmem>>, vector<1x36xf32>,
    %142 = vector.extract_strided_slice %115 {offsets = [13, 0], sizes = [1, 36], strides = [1, 1]} : vector<16x36xf32> to vector<1x36xf32>
    %c1_147 = arith.constant 1 : index
    %c468_148 = arith.constant 468 : index
    %143 = vector.load %arg20[%c1_147, %c468_148] : memref<2x576xf32, #tpu.memory_space<vmem>>, vector<1x36xf32>
    tpu.vector_store %arg20[%c1_147, %c468_148], %142 {strides = array<i32>} : memref<2x576xf32, #tpu.memory_space<vmem>>, vector<1x36xf32>,
    %144 = vector.extract_strided_slice %115 {offsets = [14, 0], sizes = [1, 36], strides = [1, 1]} : vector<16x36xf32> to vector<1x36xf32>
    %c1_149 = arith.constant 1 : index
    %c504_150 = arith.constant 504 : index
    %145 = vector.load %arg20[%c1_149, %c504_150] : memref<2x576xf32, #tpu.memory_space<vmem>>, vector<1x36xf32>
    tpu.vector_store %arg20[%c1_149, %c504_150], %144 {strides = array<i32>} : memref<2x576xf32, #tpu.memory_space<vmem>>, vector<1x36xf32>,
    %146 = vector.extract_strided_slice %115 {offsets = [15, 0], sizes = [1, 36], strides = [1, 1]} : vector<16x36xf32> to vector<1x36xf32>
    %c1_151 = arith.constant 1 : index
    %c540_152 = arith.constant 540 : index
    %147 = vector.load %arg20[%c1_151, %c540_152] : memref<2x576xf32, #tpu.memory_space<vmem>>, vector<1x36xf32>
    tpu.vector_store %arg20[%c1_151, %c540_152], %146 {strides = array<i32>} : memref<2x576xf32, #tpu.memory_space<vmem>>, vector<1x36xf32>,
    %c0_153 = arith.constant 0 : index
    %c0_154 = arith.constant 0 : index
    %148 = vector.load %arg20[%c0_153, %c0_154] : memref<2x576xf32, #tpu.memory_space<vmem>>, vector<2x576xf32>
    %c0_155 = arith.constant 0 : index
    %c0_156 = arith.constant 0 : index
    %149 = vector.load %arg7[%c0_155, %c0_156] : memref<576x120xf32, #tpu.memory_space<vmem>>, vector<576x120xf32>
    %cst_157 = arith.constant dense<0.000000e+00> : vector<2x120xf32>
    %150 = tpu.matmul %148, %149, %cst_157 {dimension_numbers = #tpu.dot_dimension_numbers<[1], [0], [0], [1], [0, 0, 1, 1], [], []>} : vector<2x576xf32>, vector<576x120xf32>, vector<2x120xf32> -> vector<2x120xf32>
    %c0_158 = arith.constant 0 : index
    %c0_159 = arith.constant 0 : index
    %151 = vector.load %arg8[%c0_158, %c0_159] : memref<1x120xf32, #tpu.memory_space<vmem>>, vector<1x120xf32>
    %152 = vector.broadcast %151 : vector<1x120xf32> to vector<2x120xf32>
    %153 = arith.addf %150, %152 : vector<2x120xf32>
    %cst_160 = arith.constant 0.000000e+00 : f32
    %154 = vector.broadcast %cst_160 : f32 to vector<2x120xf32>
    %155 = arith.maximumf %153, %154 : vector<2x120xf32>
    %c0_161 = arith.constant 0 : index
    %c0_162 = arith.constant 0 : index
    %156 = vector.load %arg9[%c0_161, %c0_162] : memref<120x84xf32, #tpu.memory_space<vmem>>, vector<120x84xf32>
    %cst_163 = arith.constant dense<0.000000e+00> : vector<2x84xf32>
    %157 = tpu.matmul %155, %156, %cst_163 {dimension_numbers = #tpu.dot_dimension_numbers<[1], [0], [0], [1], [0, 0, 1, 1], [], []>} : vector<2x120xf32>, vector<120x84xf32>, vector<2x84xf32> -> vector<2x84xf32>
    %c0_164 = arith.constant 0 : index
    %c0_165 = arith.constant 0 : index
    %158 = vector.load %arg10[%c0_164, %c0_165] : memref<1x84xf32, #tpu.memory_space<vmem>>, vector<1x84xf32>
    %159 = vector.broadcast %158 : vector<1x84xf32> to vector<2x84xf32>
    %160 = arith.addf %157, %159 : vector<2x84xf32>
    %cst_166 = arith.constant 0.000000e+00 : f32
    %161 = vector.broadcast %cst_166 : f32 to vector<2x84xf32>
    %162 = arith.maximumf %160, %161 : vector<2x84xf32>
    %c0_167 = arith.constant 0 : index
    %c0_168 = arith.constant 0 : index
    %163 = vector.load %arg11[%c0_167, %c0_168] : memref<84x10xf32, #tpu.memory_space<vmem>>, vector<84x10xf32>
    %cst_169 = arith.constant dense<0.000000e+00> : vector<2x10xf32>
    %164 = tpu.matmul %162, %163, %cst_169 {dimension_numbers = #tpu.dot_dimension_numbers<[1], [0], [0], [1], [0, 0, 1, 1], [], []>} : vector<2x84xf32>, vector<84x10xf32>, vector<2x10xf32> -> vector<2x10xf32>
    %c0_170 = arith.constant 0 : index
    %c0_171 = arith.constant 0 : index
    %165 = vector.load %arg12[%c0_170, %c0_171] : memref<1x10xf32, #tpu.memory_space<vmem>>, vector<1x10xf32>
    %166 = vector.broadcast %165 : vector<1x10xf32> to vector<2x10xf32>
    %167 = arith.addf %164, %166 : vector<2x10xf32>
    %c0_172 = arith.constant 0 : index
    %c0_173 = arith.constant 0 : index
    %168 = vector.load %arg13[%c0_172, %c0_173] : memref<2x10xf32, #tpu.memory_space<vmem>>, vector<2x10xf32>
    tpu.vector_store %arg13[%c0_172, %c0_173], %167 {strides = array<i32>} : memref<2x10xf32, #tpu.memory_space<vmem>>, vector<2x10xf32>,
    return
  }
  func.func @transform_0(%arg0: i32) -> (i32, i32) {
    %c0_i32 = arith.constant 0 : i32
    %c0_i32_0 = arith.constant 0 : i32
    return %c0_i32, %arg0 : i32, i32
  }
  func.func @transform_1(%arg0: i32) -> (i32, i32) {
    %c0_i32 = arith.constant 0 : i32
    %c0_i32_0 = arith.constant 0 : i32
    %c0_i32_1 = arith.constant 0 : i32
    return %c0_i32, %c0_i32_0 : i32, i32
  }
  func.func @transform_2(%arg0: i32) -> (i32, i32) {
    %c0_i32 = arith.constant 0 : i32
    %c0_i32_0 = arith.constant 0 : i32
    %c0_i32_1 = arith.constant 0 : i32
    return %c0_i32, %c0_i32_0 : i32, i32
  }
  func.func @transform_3(%arg0: i32) -> (i32, i32) {
    %c0_i32 = arith.constant 0 : i32
    %c0_i32_0 = arith.constant 0 : i32
    %c0_i32_1 = arith.constant 0 : i32
    return %c0_i32, %c0_i32_0 : i32, i32
  }
  func.func @transform_4(%arg0: i32) -> (i32, i32) {
    %c0_i32 = arith.constant 0 : i32
    %c0_i32_0 = arith.constant 0 : i32
    %c0_i32_1 = arith.constant 0 : i32
    return %c0_i32, %c0_i32_0 : i32, i32
  }
  func.func @transform_5(%arg0: i32) -> (i32, i32) {
    %c0_i32 = arith.constant 0 : i32
    %c0_i32_0 = arith.constant 0 : i32
    %c0_i32_1 = arith.constant 0 : i32
    return %c0_i32, %c0_i32_0 : i32, i32
  }
  func.func @transform_6(%arg0: i32) -> (i32, i32) {
    %c0_i32 = arith.constant 0 : i32
    %c0_i32_0 = arith.constant 0 : i32
    %c0_i32_1 = arith.constant 0 : i32
    return %c0_i32, %c0_i32_0 : i32, i32
  }
  func.func @transform_7(%arg0: i32) -> (i32, i32) {
    %c0_i32 = arith.constant 0 : i32
    %c0_i32_0 = arith.constant 0 : i32
    %c0_i32_1 = arith.constant 0 : i32
    return %c0_i32, %c0_i32_0 : i32, i32
  }
  func.func @transform_8(%arg0: i32) -> (i32, i32) {
    %c0_i32 = arith.constant 0 : i32
    %c0_i32_0 = arith.constant 0 : i32
    %c0_i32_1 = arith.constant 0 : i32
    return %c0_i32, %c0_i32_0 : i32, i32
  }
  func.func @transform_9(%arg0: i32) -> (i32, i32) {
    %c0_i32 = arith.constant 0 : i32
    %c0_i32_0 = arith.constant 0 : i32
    %c0_i32_1 = arith.constant 0 : i32
    return %c0_i32, %c0_i32_0 : i32, i32
  }
  func.func @transform_10(%arg0: i32) -> (i32, i32) {
    %c0_i32 = arith.constant 0 : i32
    %c0_i32_0 = arith.constant 0 : i32
    %c0_i32_1 = arith.constant 0 : i32
    return %c0_i32, %c0_i32_0 : i32, i32
  }
  func.func @transform_11(%arg0: i32) -> (i32, i32) {
    %c0_i32 = arith.constant 0 : i32
    %c0_i32_0 = arith.constant 0 : i32
    %c0_i32_1 = arith.constant 0 : i32
    return %c0_i32, %c0_i32_0 : i32, i32
  }
  func.func @transform_12(%arg0: i32) -> (i32, i32) {
    %c0_i32 = arith.constant 0 : i32
    %c0_i32_0 = arith.constant 0 : i32
    return %arg0, %c0_i32 : i32, i32
  }
}

</mosaic_0001>

<llo_original>
// kernel: cifar_cnn_forward.1
$region0: #{cifar_cnn_forward.1}
  #allocation0 [shape = 'u32[]', space=smem, size = 0x4, offset = 0x4, fixed_abs, tag = 'smem constant byte address 0x4 - core index']
  #allocation1 [shape = 'u32[72,128]{1,0:T(1,128)}', space=vmem, size = 0x9000, scoped, tag = 'internal scratch']
  #allocation2 [shape = 'f32[27,2304]{1,0:T(8,128)}', space=vmem, size = 0x48000, scoped, tag = 'scratch operand']
  #allocation3 [shape = 'f32[8,2560]{1,0:T(8,128)}', space=vmem, size = 0x14000, scoped, tag = 'scratch operand']
  #allocation4 [shape = 'f32[8,2560]{1,0:T(8,128)}', space=vmem, size = 0x14000, scoped, tag = 'scratch operand']
  #allocation5 [shape = 'f32[72,2304]{1,0:T(8,128)}', space=vmem, size = 0xa2000, scoped, tag = 'scratch operand']
  #allocation6 [shape = 'f32[16,2560]{1,0:T(8,128)}', space=vmem, size = 0x28000, scoped, tag = 'scratch operand']
  #allocation7 [shape = 'f32[16,2560]{1,0:T(8,128)}', space=vmem, size = 0x28000, scoped, tag = 'scratch operand']
  #allocation8 [shape = 'f32[2,576]{1,0:T(2,128)}', space=vmem, size = 0x1400, scoped, tag = 'scratch operand']
  %s0 = inlined_call_operand.vmem [shape: f32[3,2560], index: 0, kind: input, shape index: {}]
  %s1 = inlined_call_operand.vmem [shape: f32[8,27], index: 1, kind: input, shape index: {}]
  %s2 = inlined_call_operand.vmem [shape: f32[8,1], index: 2, kind: input, shape index: {}]
  %s3 = inlined_call_operand.vmem [shape: f32[16,72], index: 3, kind: input, shape index: {}]
  %s4 = inlined_call_operand.vmem [shape: f32[16,1], index: 4, kind: input, shape index: {}]
  %s5 = inlined_call_operand.hbm [shape: f32[768,36], index: 5, kind: input, shape index: {}]
  %s6 = inlined_call_operand.vmem [shape: f32[576,120], index: 6, kind: input, shape index: {}]
  %s7 = inlined_call_operand.vmem [shape: f32[1,120], index: 7, kind: input, shape index: {}]
  %s8 = inlined_call_operand.vmem [shape: f32[120,84], index: 8, kind: input, shape index: {}]
  %s9 = inlined_call_operand.vmem [shape: f32[1,84], index: 9, kind: input, shape index: {}]
  %s10 = inlined_call_operand.vmem [shape: f32[84,10], index: 10, kind: input, shape index: {}]
  %s11 = inlined_call_operand.vmem [shape: f32[1,10], index: 11, kind: input, shape index: {}]
  %s12 = inlined_call_operand.hbm [shape: f32[2,10], index: 12, kind: output, shape index: {}]
  %s13 = sld [smem:[#allocation0]]
  $region62: #{cifar_cnn_forward.1} parent=0
    _
  %s15 = ssub.s32 1, %s13
  %s16 = scalar_select 0, %s15, %s13
  $region1: #{cifar_cnn_forward.1} parent=0
    #allocation9 [shape = 'u8[393216]{0}', space=vmem, size = 0x60000, scoped, tag = 'input window, operand 5, single buffered']
    #allocation10 [shape = 's32[1]{0}', space=sflag, size = 0x4, scoped, tag = 'scoped memory for cifar_cnn_forward.1']
    #allocation11 [shape = 's32[1]{0}', space=sflag, size = 0x4, scoped, tag = 'scoped memory for cifar_cnn_forward.1']
    #allocation12 [shape = 'u8[1024]{0}', space=vmem, size = 0x400, scoped, tag = 'output window, operand 0, single buffered']
    %17 = vsyncpa [#allocation10], 0
    %18 = vsyncpa [#allocation11], 0
    // Predicated region
    $region2: #{cifar_cnn_forward.1} parent=1 // pred_check
      _
    $region3: #{cifar_cnn_forward.1} parent=1 // pred_check_branch
      %20 = sbr.rel (0) target = $region5
    $region4: #{cifar_cnn_forward.1} parent=1 // pred_region
      _
    $region5: #{cifar_cnn_forward.1} parent=1 // pred_fallthru
      _
    // Predicated region
    $region6: #{cifar_cnn_forward.1} parent=1 // pred_check
      _
    $region7: #{cifar_cnn_forward.1} parent=1 // pred_check_branch
      %22 = sbr.rel (0) target = $region9
    $region8: #{cifar_cnn_forward.1} parent=1 // pred_region
      _
    $region9: #{cifar_cnn_forward.1} parent=1 // pred_fallthru
      _
    // Predicated region
    $region10: #{cifar_cnn_forward.1} parent=1 // pred_check
      _
    $region11: #{cifar_cnn_forward.1} parent=1 // pred_check_branch
      %24 = sbr.rel (0) target = $region13
    $region12: #{cifar_cnn_forward.1} parent=1 // pred_region
      _
    $region13: #{cifar_cnn_forward.1} parent=1 // pred_fallthru
      _
    // Predicated region
    $region14: #{cifar_cnn_forward.1} parent=1 // pred_check
      _
    $region15: #{cifar_cnn_forward.1} parent=1 // pred_check_branch
      %26 = sbr.rel (0) target = $region17
    $region16: #{cifar_cnn_forward.1} parent=1 // pred_region
      _
    $region17: #{cifar_cnn_forward.1} parent=1 // pred_fallthru
      _
    // Predicated region
    $region18: #{cifar_cnn_forward.1} parent=1 // pred_check
      _
    $region19: #{cifar_cnn_forward.1} parent=1 // pred_check_branch
      %28 = sbr.rel (0) target = $region21
    $region20: #{cifar_cnn_forward.1} parent=1 // pred_region
      _
    $region21: #{cifar_cnn_forward.1} parent=1 // pred_fallthru
      _
    // Predicated region
    $region22: #{cifar_cnn_forward.1} parent=1 // pred_check
      _
    $region23: #{cifar_cnn_forward.1} parent=1 // pred_check_branch
      %30 = sbr.rel (0) target = $region25
    $region24: #{cifar_cnn_forward.1} parent=1 // pred_region
      %32 = vsyncadd [#allocation10], 0
      %s33 = sshll.u32 %s5, 4
      %s34 = int_to_ptr.hbm [resolvable:$true] %s33
      %s35 = sshll.u32 [#allocation9], 4
      %s36 = int_to_ptr.vmem [resolvable:$true] %s35
      %41 = dma.hbm_to_vmem [thread:$0]  %s34, 12288, %s36, [#allocation10], 128, 128, 8
    $region25: #{cifar_cnn_forward.1} parent=1 // pred_fallthru
      _
    // Predicated region
    $region26: #{cifar_cnn_forward.1} parent=1 // pred_check
      _
    $region27: #{cifar_cnn_forward.1} parent=1 // pred_check_branch
      %43 = sbr.rel (0) target = $region29
    $region28: #{cifar_cnn_forward.1} parent=1 // pred_region
      _
    $region29: #{cifar_cnn_forward.1} parent=1 // pred_fallthru
      _
    // Predicated region
    $region30: #{cifar_cnn_forward.1} parent=1 // pred_check
      _
    $region31: #{cifar_cnn_forward.1} parent=1 // pred_check_branch
      %45 = sbr.rel (0) target = $region33
    $region32: #{cifar_cnn_forward.1} parent=1 // pred_region
      _
    $region33: #{cifar_cnn_forward.1} parent=1 // pred_fallthru
      _
    // Predicated region
    $region34: #{cifar_cnn_forward.1} parent=1 // pred_check
      _
    $region35: #{cifar_cnn_forward.1} parent=1 // pred_check_branch
      %47 = sbr.rel (0) target = $region37
    $region36: #{cifar_cnn_forward.1} parent=1 // pred_region
      _
    $region37: #{cifar_cnn_forward.1} parent=1 // pred_fallthru
      _
    // Predicated region
    $region38: #{cifar_cnn_forward.1} parent=1 // pred_check
      _
    $region39: #{cifar_cnn_forward.1} parent=1 // pred_check_branch
      %49 = sbr.rel (0) target = $region41
    $region40: #{cifar_cnn_forward.1} parent=1 // pred_region
      _
    $region41: #{cifar_cnn_forward.1} parent=1 // pred_fallthru
      _
    // Predicated region
    $region42: #{cifar_cnn_forward.1} parent=1 // pred_check
      _
    $region43: #{cifar_cnn_forward.1} parent=1 // pred_check_branch
      %51 = sbr.rel (0) target = $region45
    $region44: #{cifar_cnn_forward.1} parent=1 // pred_region
      _
    $region45: #{cifar_cnn_forward.1} parent=1 // pred_fallthru
      _
    // Predicated region
    $region46: #{cifar_cnn_forward.1} parent=1 // pred_check
      _
    $region47: #{cifar_cnn_forward.1} parent=1 // pred_check_branch
      %53 = sbr.rel (0) target = $region49
    $region48: #{cifar_cnn_forward.1} parent=1 // pred_region
      _
    $region49: #{cifar_cnn_forward.1} parent=1 // pred_fallthru
      _
    // Predicated region
    $region50: #{cifar_cnn_forward.1} parent=1 // pred_check
      _
    $region51: #{cifar_cnn_forward.1} parent=1 // pred_check_branch
      %55 = sbr.rel (0) target = $region53
    $region52: #{cifar_cnn_forward.1} parent=1 // pred_region
      %57 = dma.done [#allocation10], 12288
    $region53: #{cifar_cnn_forward.1} parent=1 // pred_fallthru
      _
    %v58 = vld [vmem:[%s0] sm:$0x77]
    %v59 = vld [vmem:[%s0 + $0x8] sm:$0x77]
    %v60 = vld [vmem:[%s0 + $0x10] sm:$0x77]
    %v61 = vld [vmem:[%s0 + $0x18] sm:$0x77]
    %v62 = vld [vmem:[%s0 + $0x20] sm:$0x77]
    %v63 = vld [vmem:[%s0 + $0x28] sm:$0x77]
    %v64 = vld [vmem:[%s0 + $0x30] sm:$0x77]
    %v65 = vld [vmem:[%s0 + $0x38] sm:$0x77]
    %v66 = vld [vmem:[%s0 + $0x40] sm:$0x77]
    %76 = vst [vmem:[#allocation1] ss:$2 sm:$0xff] %v58
    %s77 = scalar_lea.vmem [#allocation1], 16
    %78 = vst [vmem:[%s77] ss:$2 sm:$0xff] %v59
    %s79 = scalar_lea.vmem [#allocation1], 32
    %80 = vst [vmem:[%s79] ss:$2 sm:$0xff] %v60
    %s81 = scalar_lea.vmem [#allocation1], 48
    %82 = vst [vmem:[%s81] ss:$2 sm:$0xff] %v61
    %v83 = vld.sshfl [vmem:[#allocation1] sm:$0xff pattern:$0x75316420]
    %v84 = vld.sshfl [vmem:[#allocation1 + $0x8] sm:$0xff pattern:$0x75316420]
    %v85 = vld.sshfl [vmem:[#allocation1 + $0x10] sm:$0xff pattern:$0x75316420]
    %v86 = vld.sshfl [vmem:[#allocation1 + $0x18] sm:$0xff pattern:$0x75316420]
    %v87 = vld.sshfl [vmem:[#allocation1 + $0x20] sm:$0xff pattern:$0x75316420]
    %v88 = vld.sshfl [vmem:[#allocation1 + $0x28] sm:$0xff pattern:$0x75316420]
    %v89 = vld.sshfl [vmem:[#allocation1 + $0x30] sm:$0xff pattern:$0x75316420]
    %v90 = vld.sshfl [vmem:[#allocation1 + $0x38] sm:$0xff pattern:$0x75316420]
    %91 = vst [vmem:[#allocation1] ss:$2 sm:$0xff] %v62
    %92 = vst [vmem:[%s77] ss:$2 sm:$0xff] %v63
    %93 = vst [vmem:[%s79] ss:$2 sm:$0xff] %v64
    %94 = vst [vmem:[%s81] ss:$2 sm:$0xff] %v65
    %v95 = vld.sshfl [vmem:[#allocation1] sm:$0xff pattern:$0x75316420]
    %v96 = vld.sshfl [vmem:[#allocation1 + $0x8] sm:$0xff pattern:$0x75316420]
    %v97 = vld.sshfl [vmem:[#allocation1 + $0x10] sm:$0xff pattern:$0x75316420]
    %v98 = vld.sshfl [vmem:[#allocation1 + $0x18] sm:$0xff pattern:$0x75316420]
    %v99 = vld.sshfl [vmem:[#allocation1 + $0x20] sm:$0xff pattern:$0x75316420]
    %v100 = vld.sshfl [vmem:[#allocation1 + $0x28] sm:$0xff pattern:$0x75316420]
    %v101 = vld.sshfl [vmem:[#allocation1 + $0x30] sm:$0xff pattern:$0x75316420]
    %v102 = vld.sshfl [vmem:[#allocation1 + $0x38] sm:$0xff pattern:$0x75316420]
    %103 = vst [vmem:[#allocation1] ss:$2 sm:$0xff] %v66
    %v104 = vld.sshfl [vmem:[#allocation1] sm:$0xff pattern:$0x75316420]
    %v105 = vld.sshfl [vmem:[#allocation1 + $0x8] sm:$0xff pattern:$0x75316420]
    %124 = vst [vmem:[#allocation2] sm:$0x7] %v83
    %125 = vst [vmem:[#allocation2 + $0x8] sm:$0x7] %v84
    %126 = vst [vmem:[#allocation2 + $0x10] sm:$0x7] %v85
    %127 = vst [vmem:[#allocation2 + $0x18] sm:$0x7] %v86
    %128 = vst [vmem:[#allocation2 + $0x20] sm:$0x7] %v87
    %129 = vst [vmem:[#allocation2 + $0x28] sm:$0x7] %v88
    %130 = vst [vmem:[#allocation2 + $0x30] sm:$0x7] %v89
    %131 = vst [vmem:[#allocation2 + $0x38] sm:$0x7] %v90
    %132 = vst [vmem:[#allocation2 + $0x40] sm:$0x7] %v95
    %133 = vst [vmem:[#allocation2 + $0x48] sm:$0x7] %v96
    %134 = vst [vmem:[#allocation2 + $0x50] sm:$0x7] %v97
    %135 = vst [vmem:[#allocation2 + $0x58] sm:$0x7] %v98
    %136 = vst [vmem:[#allocation2 + $0x60] sm:$0x7] %v99
    %137 = vst [vmem:[#allocation2 + $0x68] sm:$0x7] %v100
    %138 = vst [vmem:[#allocation2 + $0x70] sm:$0x7] %v101
    %139 = vst [vmem:[#allocation2 + $0x78] sm:$0x7] %v102
    %140 = vst [vmem:[#allocation2 + $0x80] sm:$0x7] %v104
    %141 = vst [vmem:[#allocation2 + $0x88] sm:$0x7] %v105
    %v142 = vld [vmem:[%s0] sm:$0x77]
    %v143 = vld [vmem:[%s0 + $0x8] sm:$0x77]
    %v144 = vld [vmem:[%s0 + $0x10] sm:$0x77]
    %v145 = vld [vmem:[%s0 + $0x18] sm:$0x77]
    %v146 = vld [vmem:[%s0 + $0x20] sm:$0x77]
    %v147 = vld [vmem:[%s0 + $0x28] sm:$0x77]
    %v148 = vld [vmem:[%s0 + $0x30] sm:$0x77]
    %v149 = vld [vmem:[%s0 + $0x38] sm:$0x77]
    %v150 = vld [vmem:[%s0 + $0x40] sm:$0x77]
    %v151 = vld [vmem:[%s0 + $0x48] sm:$0x7]
    %162 = vst [vmem:[#allocation1] ss:$2 sm:$0xff] %v142
    %s163 = scalar_lea.vmem [#allocation1], 16
    %164 = vst [vmem:[%s163] ss:$2 sm:$0xff] %v143
    %s165 = scalar_lea.vmem [#allocation1], 32
    %166 = vst [vmem:[%s165] ss:$2 sm:$0xff] %v144
    %s167 = scalar_lea.vmem [#allocation1], 48
    %168 = vst [vmem:[%s167] ss:$2 sm:$0xff] %v145
    %v169 = vld.sshfl [vmem:[#allocation1] sm:$0xff pattern:$0x75316420]
    %v170 = vld.sshfl [vmem:[#allocation1 + $0x8] sm:$0xff pattern:$0x75316420]
    %v171 = vld.sshfl [vmem:[#allocation1 + $0x10] sm:$0xff pattern:$0x75316420]
    %v172 = vld.sshfl [vmem:[#allocation1 + $0x18] sm:$0xff pattern:$0x75316420]
    %v173 = vld.sshfl [vmem:[#allocation1 + $0x20] sm:$0xff pattern:$0x75316420]
    %v174 = vld.sshfl [vmem:[#allocation1 + $0x28] sm:$0xff pattern:$0x75316420]
    %v175 = vld.sshfl [vmem:[#allocation1 + $0x30] sm:$0xff pattern:$0x75316420]
    %v176 = vld.sshfl [vmem:[#allocation1 + $0x38] sm:$0xff pattern:$0x75316420]
    %177 = vst [vmem:[#allocation1] ss:$2 sm:$0xff] %v146
    %178 = vst [vmem:[%s163] ss:$2 sm:$0xff] %v147
    %179 = vst [vmem:[%s165] ss:$2 sm:$0xff] %v148
    %180 = vst [vmem:[%s167] ss:$2 sm:$0xff] %v149
    %v181 = vld.sshfl [vmem:[#allocation1] sm:$0xff pattern:$0x75316420]
    %v182 = vld.sshfl [vmem:[#allocation1 + $0x8] sm:$0xff pattern:$0x75316420]
    %v183 = vld.sshfl [vmem:[#allocation1 + $0x10] sm:$0xff pattern:$0x75316420]
    %v184 = vld.sshfl [vmem:[#allocation1 + $0x18] sm:$0xff pattern:$0x75316420]
    %v185 = vld.sshfl [vmem:[#allocation1 + $0x20] sm:$0xff pattern:$0x75316420]
    %v186 = vld.sshfl [vmem:[#allocation1 + $0x28] sm:$0xff pattern:$0x75316420]
    %v187 = vld.sshfl [vmem:[#allocation1 + $0x30] sm:$0xff pattern:$0x75316420]
    %v188 = vld.sshfl [vmem:[#allocation1 + $0x38] sm:$0xff pattern:$0x75316420]
    %189 = vst [vmem:[#allocation1] ss:$2 sm:$0xff] %v150
    %190 = vst [vmem:[%s163] ss:$2 sm:$0xff] %v151
    %v191 = vld.sshfl [vmem:[#allocation1] sm:$0xff pattern:$0x75316420]
    %v192 = vld.sshfl [vmem:[#allocation1 + $0x8] sm:$0xff pattern:$0x75316420]
    %v193 = vld.sshfl [vmem:[#allocation1 + $0x10] sm:$0xff pattern:$0x75316420]
    %v194 = vrot.slane %v169, 5
    %v195 = vrot.slane %v170, 5
    %v196 = vrot.slane %v171, 5
    %v197 = vrot.slane %v172, 5
    %v198 = vrot.slane %v173, 5
    %v199 = vrot.slane %v174, 5
    %v200 = vrot.slane %v175, 5
    %v201 = vrot.slane %v176, 5
    %v202 = vrot.slane %v181, 5
    %v203 = vrot.slane %v182, 5
    %v204 = vrot.slane %v183, 5
    %v205 = vrot.slane %v184, 5
    %v206 = vrot.slane %v185, 5
    %v207 = vrot.slane %v186, 5
    %v208 = vrot.slane %v187, 5
    %v209 = vrot.slane %v188, 5
    %v210 = vrot.slane %v191, 5
    %v211 = vrot.slane %v192, 5
    %v212 = vrot.slane %v193, 5
    %213 = vrot.lane.b32.xlu0 %v194, 127
    %v214 = vpop.permute.xlu0 %213
    %215 = vrot.lane.b32.xlu0 %v195, 127
    %v216 = vpop.permute.xlu0 %215
    %217 = vrot.lane.b32.xlu0 %v196, 127
    %v218 = vpop.permute.xlu0 %217
    %219 = vrot.lane.b32.xlu0 %v197, 127
    %v220 = vpop.permute.xlu0 %219
    %221 = vrot.lane.b32.xlu0 %v198, 127
    %v222 = vpop.permute.xlu0 %221
    %223 = vrot.lane.b32.xlu0 %v199, 127
    %v224 = vpop.permute.xlu0 %223
    %225 = vrot.lane.b32.xlu0 %v200, 127
    %v226 = vpop.permute.xlu0 %225
    %227 = vrot.lane.b32.xlu0 %v201, 127
    %v228 = vpop.permute.xlu0 %227
    %229 = vrot.lane.b32.xlu0 %v202, 127
    %v230 = vpop.permute.xlu0 %229
    %231 = vrot.lane.b32.xlu0 %v203, 127
    %v232 = vpop.permute.xlu0 %231
    %233 = vrot.lane.b32.xlu0 %v204, 127
    %v234 = vpop.permute.xlu0 %233
    %235 = vrot.lane.b32.xlu0 %v205, 127
    %v236 = vpop.permute.xlu0 %235
    %237 = vrot.lane.b32.xlu0 %v206, 127
    %v238 = vpop.permute.xlu0 %237
    %239 = vrot.lane.b32.xlu0 %v207, 127
    %v240 = vpop.permute.xlu0 %239
    %241 = vrot.lane.b32.xlu0 %v208, 127
    %v242 = vpop.permute.xlu0 %241
    %243 = vrot.lane.b32.xlu0 %v209, 127
    %v244 = vpop.permute.xlu0 %243
    %245 = vrot.lane.b32.xlu0 %v210, 127
    %v246 = vpop.permute.xlu0 %245
    %247 = vrot.lane.b32.xlu0 %v211, 127
    %v248 = vpop.permute.xlu0 %247
    %249 = vrot.lane.b32.xlu0 %v212, 127
    %v250 = vpop.permute.xlu0 %249
    %vm251 = vcmask 1039360
    %v252 = vsel %vm251, %v214, %v216
    %v253 = vsel %vm251, %v216, %v218
    %v254 = vsel %vm251, %v218, %v220
    %v255 = vsel %vm251, %v220, %v222
    %v256 = vsel %vm251, %v222, %v224
    %v257 = vsel %vm251, %v224, %v226
    %v258 = vsel %vm251, %v226, %v228
    %v259 = vsel %vm251, %v228, %v230
    %v260 = vsel %vm251, %v230, %v232
    %v261 = vsel %vm251, %v232, %v234
    %v262 = vsel %vm251, %v234, %v236
    %v263 = vsel %vm251, %v236, %v238
    %v264 = vsel %vm251, %v238, %v240
    %v265 = vsel %vm251, %v240, %v242
    %v266 = vsel %vm251, %v242, %v244
    %v267 = vsel %vm251, %v244, %v246
    %v268 = vsel %vm251, %v246, %v248
    %v269 = vsel %vm251, %v248, %v250
    %288 = vst [vmem:[#allocation2] sm:$0x38] %v252
    %289 = vst [vmem:[#allocation2 + $0x8] sm:$0x38] %v253
    %290 = vst [vmem:[#allocation2 + $0x10] sm:$0x38] %v254
    %291 = vst [vmem:[#allocation2 + $0x18] sm:$0x38] %v255
    %292 = vst [vmem:[#allocation2 + $0x20] sm:$0x38] %v256
    %293 = vst [vmem:[#allocation2 + $0x28] sm:$0x38] %v257
    %294 = vst [vmem:[#allocation2 + $0x30] sm:$0x38] %v258
    %295 = vst [vmem:[#allocation2 + $0x38] sm:$0x38] %v259
    %296 = vst [vmem:[#allocation2 + $0x40] sm:$0x38] %v260
    %297 = vst [vmem:[#allocation2 + $0x48] sm:$0x38] %v261
    %298 = vst [vmem:[#allocation2 + $0x50] sm:$0x38] %v262
    %299 = vst [vmem:[#allocation2 + $0x58] sm:$0x38] %v263
    %300 = vst [vmem:[#allocation2 + $0x60] sm:$0x38] %v264
    %301 = vst [vmem:[#allocation2 + $0x68] sm:$0x38] %v265
    %302 = vst [vmem:[#allocation2 + $0x70] sm:$0x38] %v266
    %303 = vst [vmem:[#allocation2 + $0x78] sm:$0x38] %v267
    %304 = vst [vmem:[#allocation2 + $0x80] sm:$0x38] %v268
    %305 = vst [vmem:[#allocation2 + $0x88] sm:$0x38] %v269
    %v306 = vld [vmem:[%s0] sm:$0x77]
    %v307 = vld [vmem:[%s0 + $0x8] sm:$0x77]
    %v308 = vld [vmem:[%s0 + $0x10] sm:$0x77]
    %v309 = vld [vmem:[%s0 + $0x18] sm:$0x77]
    %v310 = vld [vmem:[%s0 + $0x20] sm:$0x77]
    %v311 = vld [vmem:[%s0 + $0x28] sm:$0x77]
    %v312 = vld [vmem:[%s0 + $0x30] sm:$0x77]
    %v313 = vld [vmem:[%s0 + $0x38] sm:$0x77]
    %v314 = vld [vmem:[%s0 + $0x40] sm:$0x77]
    %v315 = vld [vmem:[%s0 + $0x48] sm:$0x7]
    %326 = vst [vmem:[#allocation1] ss:$2 sm:$0xff] %v306
    %s327 = scalar_lea.vmem [#allocation1], 16
    %328 = vst [vmem:[%s327] ss:$2 sm:$0xff] %v307
    %s329 = scalar_lea.vmem [#allocation1], 32
    %330 = vst [vmem:[%s329] ss:$2 sm:$0xff] %v308
    %s331 = scalar_lea.vmem [#allocation1], 48
    %332 = vst [vmem:[%s331] ss:$2 sm:$0xff] %v309
    %v333 = vld.sshfl [vmem:[#allocation1] sm:$0xff pattern:$0x75316420]
    %v334 = vld.sshfl [vmem:[#allocation1 + $0x8] sm:$0xff pattern:$0x75316420]
    %v335 = vld.sshfl [vmem:[#allocation1 + $0x10] sm:$0xff pattern:$0x75316420]
    %v336 = vld.sshfl [vmem:[#allocation1 + $0x18] sm:$0xff pattern:$0x75316420]
    %v337 = vld.sshfl [vmem:[#allocation1 + $0x20] sm:$0xff pattern:$0x75316420]
    %v338 = vld.sshfl [vmem:[#allocation1 + $0x28] sm:$0xff pattern:$0x75316420]
    %v339 = vld.sshfl [vmem:[#allocation1 + $0x30] sm:$0xff pattern:$0x75316420]
    %v340 = vld.sshfl [vmem:[#allocation1 + $0x38] sm:$0xff pattern:$0x75316420]
    %341 = vst [vmem:[#allocation1] ss:$2 sm:$0xff] %v310
    %342 = vst [vmem:[%s327] ss:$2 sm:$0xff] %v311
    %343 = vst [vmem:[%s329] ss:$2 sm:$0xff] %v312
    %344 = vst [vmem:[%s331] ss:$2 sm:$0xff] %v313
    %v345 = vld.sshfl [vmem:[#allocation1] sm:$0xff pattern:$0x75316420]
    %v346 = vld.sshfl [vmem:[#allocation1 + $0x8] sm:$0xff pattern:$0x75316420]
    %v347 = vld.sshfl [vmem:[#allocation1 + $0x10] sm:$0xff pattern:$0x75316420]
    %v348 = vld.sshfl [vmem:[#allocation1 + $0x18] sm:$0xff pattern:$0x75316420]
    %v349 = vld.sshfl [vmem:[#allocation1 + $0x20] sm:$0xff pattern:$0x75316420]
    %v350 = vld.sshfl [vmem:[#allocation1 + $0x28] sm:$0xff pattern:$0x75316420]
    %v351 = vld.sshfl [vmem:[#allocation1 + $0x30] sm:$0xff pattern:$0x75316420]
    %v352 = vld.sshfl [vmem:[#allocation1 + $0x38] sm:$0xff pattern:$0x75316420]
    %353 = vst [vmem:[#allocation1] ss:$2 sm:$0xff] %v314
    %354 = vst [vmem:[%s327] ss:$2 sm:$0xff] %v315
    %v355 = vld.sshfl [vmem:[#allocation1] sm:$0xff pattern:$0x75316420]
    %v356 = vld.sshfl [vmem:[#allocation1 + $0x8] sm:$0xff pattern:$0x75316420]
    %v357 = vld.sshfl [vmem:[#allocation1 + $0x10] sm:$0xff pattern:$0x75316420]
    %v358 = vrot.slane %v333, 2
    %v359 = vrot.slane %v334, 2
    %v360 = vrot.slane %v335, 2
    %v361 = vrot.slane %v336, 2
    %v362 = vrot.slane %v337, 2
    %v363 = vrot.slane %v338, 2
    %v364 = vrot.slane %v339, 2
    %v365 = vrot.slane %v340, 2
    %v366 = vrot.slane %v345, 2
    %v367 = vrot.slane %v346, 2
    %v368 = vrot.slane %v347, 2
    %v369 = vrot.slane %v348, 2
    %v370 = vrot.slane %v349, 2
    %v371 = vrot.slane %v350, 2
    %v372 = vrot.slane %v351, 2
    %v373 = vrot.slane %v352, 2
    %v374 = vrot.slane %v355, 2
    %v375 = vrot.slane %v356, 2
    %v376 = vrot.slane %v357, 2
    %377 = vrot.lane.b32.xlu0 %v358, 126
    %v378 = vpop.permute.xlu0 %377
    %379 = vrot.lane.b32.xlu0 %v359, 126
    %v380 = vpop.permute.xlu0 %379
    %381 = vrot.lane.b32.xlu0 %v360, 126
    %v382 = vpop.permute.xlu0 %381
    %383 = vrot.lane.b32.xlu0 %v361, 126
    %v384 = vpop.permute.xlu0 %383
    %385 = vrot.lane.b32.xlu0 %v362, 126
    %v386 = vpop.permute.xlu0 %385
    %387 = vrot.lane.b32.xlu0 %v363, 126
    %v388 = vpop.permute.xlu0 %387
    %389 = vrot.lane.b32.xlu0 %v364, 126
    %v390 = vpop.permute.xlu0 %389
    %391 = vrot.lane.b32.xlu0 %v365, 126
    %v392 = vpop.permute.xlu0 %391
    %393 = vrot.lane.b32.xlu0 %v366, 126
    %v394 = vpop.permute.xlu0 %393
    %395 = vrot.lane.b32.xlu0 %v367, 126
    %v396 = vpop.permute.xlu0 %395
    %397 = vrot.lane.b32.xlu0 %v368, 126
    %v398 = vpop.permute.xlu0 %397
    %399 = vrot.lane.b32.xlu0 %v369, 126
    %v400 = vpop.permute.xlu0 %399
    %401 = vrot.lane.b32.xlu0 %v370, 126
    %v402 = vpop.permute.xlu0 %401
    %403 = vrot.lane.b32.xlu0 %v371, 126
    %v404 = vpop.permute.xlu0 %403
    %405 = vrot.lane.b32.xlu0 %v372, 126
    %v406 = vpop.permute.xlu0 %405
    %407 = vrot.lane.b32.xlu0 %v373, 126
    %v408 = vpop.permute.xlu0 %407
    %409 = vrot.lane.b32.xlu0 %v374, 126
    %v410 = vpop.permute.xlu0 %409
    %411 = vrot.lane.b32.xlu0 %v375, 126
    %v412 = vpop.permute.xlu0 %411
    %413 = vrot.lane.b32.xlu0 %v376, 126
    %v414 = vpop.permute.xlu0 %413
    %vm415 = vcmask 1031168
    %v416 = vsel %vm415, %v378, %v380
    %v417 = vsel %vm415, %v380, %v382
    %v418 = vsel %vm415, %v382, %v384
    %v419 = vsel %vm415, %v384, %v386
    %v420 = vsel %vm415, %v386, %v388
    %v421 = vsel %vm415, %v388, %v390
    %v422 = vsel %vm415, %v390, %v392
    %v423 = vsel %vm415, %v392, %v394
    %v424 = vsel %vm415, %v394, %v396
    %v425 = vsel %vm415, %v396, %v398
    %v426 = vsel %vm415, %v398, %v400
    %v427 = vsel %vm415, %v400, %v402
    %v428 = vsel %vm415, %v402, %v404
    %v429 = vsel %vm415, %v404, %v406
    %v430 = vsel %vm415, %v406, %v408
    %v431 = vsel %vm415, %v408, %v410
    %v432 = vsel %vm415, %v410, %v412
    %v433 = vsel %vm415, %v412, %v414
    %452 = vst [vmem:[#allocation2] sm:$0xc0] %v416
    %453 = vst [vmem:[#allocation2 + $0x8] sm:$0xc0] %v417
    %454 = vst [vmem:[#allocation2 + $0x10] sm:$0xc0] %v418
    %455 = vst [vmem:[#allocation2 + $0x18] sm:$0xc0] %v419
    %456 = vst [vmem:[#allocation2 + $0x20] sm:$0xc0] %v420
    %457 = vst [vmem:[#allocation2 + $0x28] sm:$0xc0] %v421
    %458 = vst [vmem:[#allocation2 + $0x30] sm:$0xc0] %v422
    %459 = vst [vmem:[#allocation2 + $0x38] sm:$0xc0] %v423
    %460 = vst [vmem:[#allocation2 + $0x40] sm:$0xc0] %v424
    %461 = vst [vmem:[#allocation2 + $0x48] sm:$0xc0] %v425
    %462 = vst [vmem:[#allocation2 + $0x50] sm:$0xc0] %v426
    %463 = vst [vmem:[#allocation2 + $0x58] sm:$0xc0] %v427
    %464 = vst [vmem:[#allocation2 + $0x60] sm:$0xc0] %v428
    %465 = vst [vmem:[#allocation2 + $0x68] sm:$0xc0] %v429
    %466 = vst [vmem:[#allocation2 + $0x70] sm:$0xc0] %v430
    %467 = vst [vmem:[#allocation2 + $0x78] sm:$0xc0] %v431
    %468 = vst [vmem:[#allocation2 + $0x80] sm:$0xc0] %v432
    %469 = vst [vmem:[#allocation2 + $0x88] sm:$0xc0] %v433
    %470 = vst [vmem:[#allocation2 + $0x90] sm:$0x1] %v416
    %471 = vst [vmem:[#allocation2 + $0x98] sm:$0x1] %v417
    %472 = vst [vmem:[#allocation2 + $0xa0] sm:$0x1] %v418
    %473 = vst [vmem:[#allocation2 + $0xa8] sm:$0x1] %v419
    %474 = vst [vmem:[#allocation2 + $0xb0] sm:$0x1] %v420
    %475 = vst [vmem:[#allocation2 + $0xb8] sm:$0x1] %v421
    %476 = vst [vmem:[#allocation2 + $0xc0] sm:$0x1] %v422
    %477 = vst [vmem:[#allocation2 + $0xc8] sm:$0x1] %v423
    %478 = vst [vmem:[#allocation2 + $0xd0] sm:$0x1] %v424
    %479 = vst [vmem:[#allocation2 + $0xd8] sm:$0x1] %v425
    %480 = vst [vmem:[#allocation2 + $0xe0] sm:$0x1] %v426
    %481 = vst [vmem:[#allocation2 + $0xe8] sm:$0x1] %v427
    %482 = vst [vmem:[#allocation2 + $0xf0] sm:$0x1] %v428
    %483 = vst [vmem:[#allocation2 + $0xf8] sm:$0x1] %v429
    %484 = vst [vmem:[#allocation2 + $0x100] sm:$0x1] %v430
    %485 = vst [vmem:[#allocation2 + $0x108] sm:$0x1] %v431
    %486 = vst [vmem:[#allocation2 + $0x110] sm:$0x1] %v432
    %487 = vst [vmem:[#allocation2 + $0x118] sm:$0x1] %v433
    %v488 = vld [vmem:[%s0] sm:$0x77]
    %v489 = vld [vmem:[%s0 + $0x8] sm:$0x77]
    %v490 = vld [vmem:[%s0 + $0x10] sm:$0x77]
    %v491 = vld [vmem:[%s0 + $0x18] sm:$0x77]
    %v492 = vld [vmem:[%s0 + $0x20] sm:$0x77]
    %v493 = vld [vmem:[%s0 + $0x28] sm:$0x77]
    %v494 = vld [vmem:[%s0 + $0x30] sm:$0x77]
    %v495 = vld [vmem:[%s0 + $0x38] sm:$0x77]
    %v496 = vld [vmem:[%s0 + $0x40] sm:$0x77]
    %v497 = vld [vmem:[%s0 + $0x48] sm:$0x7]
    %508 = vst [vmem:[#allocation1] ss:$2 sm:$0xff] %v488
    %s509 = scalar_lea.vmem [#allocation1], 16
    %510 = vst [vmem:[%s509] ss:$2 sm:$0xff] %v489
    %s511 = scalar_lea.vmem [#allocation1], 32
    %512 = vst [vmem:[%s511] ss:$2 sm:$0xff] %v490
    %s513 = scalar_lea.vmem [#allocation1], 48
    %514 = vst [vmem:[%s513] ss:$2 sm:$0xff] %v491
    %v515 = vld.sshfl [vmem:[#allocation1] sm:$0xff pattern:$0x75316420]
    %v516 = vld.sshfl [vmem:[#allocation1 + $0x8] sm:$0xff pattern:$0x75316420]
    %v517 = vld.sshfl [vmem:[#allocation1 + $0x10] sm:$0xff pattern:$0x75316420]
    %v518 = vld.sshfl [vmem:[#allocation1 + $0x18] sm:$0xff pattern:$0x75316420]
    %v519 = vld.sshfl [vmem:[#allocation1 + $0x20] sm:$0xff pattern:$0x75316420]
    %v520 = vld.sshfl [vmem:[#allocation1 + $0x28] sm:$0xff pattern:$0x75316420]
    %v521 = vld.sshfl [vmem:[#allocation1 + $0x30] sm:$0xff pattern:$0x75316420]
    %v522 = vld.sshfl [vmem:[#allocation1 + $0x38] sm:$0xff pattern:$0x75316420]
    %523 = vst [vmem:[#allocation1] ss:$2 sm:$0xff] %v492
    %524 = vst [vmem:[%s509] ss:$2 sm:$0xff] %v493
    %525 = vst [vmem:[%s511] ss:$2 sm:$0xff] %v494
    %526 = vst [vmem:[%s513] ss:$2 sm:$0xff] %v495
    %v527 = vld.sshfl [vmem:[#allocation1] sm:$0xff pattern:$0x75316420]
    %v528 = vld.sshfl [vmem:[#allocation1 + $0x8] sm:$0xff pattern:$0x75316420]
    %v529 = vld.sshfl [vmem:[#allocation1 + $0x10] sm:$0xff pattern:$0x75316420]
    %v530 = vld.sshfl [vmem:[#allocation1 + $0x18] sm:$0xff pattern:$0x75316420]
    %v531 = vld.sshfl [vmem:[#allocation1 + $0x20] sm:$0xff pattern:$0x75316420]
    %v532 = vld.sshfl [vmem:[#allocation1 + $0x28] sm:$0xff pattern:$0x75316420]
    %v533 = vld.sshfl [vmem:[#allocation1 + $0x30] sm:$0xff pattern:$0x75316420]
    %v534 = vld.sshfl [vmem:[#allocation1 + $0x38] sm:$0xff pattern:$0x75316420]
    %535 = vst [vmem:[#allocation1] ss:$2 sm:$0xff] %v496
    %536 = vst [vmem:[%s509] ss:$2 sm:$0xff] %v497
    %v537 = vld.sshfl [vmem:[#allocation1] sm:$0xff pattern:$0x75316420]
    %v538 = vld.sshfl [vmem:[#allocation1 + $0x8] sm:$0xff pattern:$0x75316420]
    %v539 = vld.sshfl [vmem:[#allocation1 + $0x10] sm:$0xff pattern:$0x75316420]
    %v540 = vrot.slane %v515, 7
    %v541 = vrot.slane %v516, 7
    %v542 = vrot.slane %v517, 7
    %v543 = vrot.slane %v518, 7
    %v544 = vrot.slane %v519, 7
    %v545 = vrot.slane %v520, 7
    %v546 = vrot.slane %v521, 7
    %v547 = vrot.slane %v522, 7
    %v548 = vrot.slane %v527, 7
    %v549 = vrot.slane %v528, 7
    %v550 = vrot.slane %v529, 7
    %v551 = vrot.slane %v530, 7
    %v552 = vrot.slane %v531, 7
    %v553 = vrot.slane %v532, 7
    %v554 = vrot.slane %v533, 7
    %v555 = vrot.slane %v534, 7
    %v556 = vrot.slane %v537, 7
    %v557 = vrot.slane %v538, 7
    %v558 = vrot.slane %v539, 7
    %559 = vrot.lane.b32.xlu0 %v540, 96
    %v560 = vpop.permute.xlu0 %559
    %561 = vrot.lane.b32.xlu0 %v541, 96
    %v562 = vpop.permute.xlu0 %561
    %563 = vrot.lane.b32.xlu0 %v542, 96
    %v564 = vpop.permute.xlu0 %563
    %565 = vrot.lane.b32.xlu0 %v543, 96
    %v566 = vpop.permute.xlu0 %565
    %567 = vrot.lane.b32.xlu0 %v544, 96
    %v568 = vpop.permute.xlu0 %567
    %569 = vrot.lane.b32.xlu0 %v545, 96
    %v570 = vpop.permute.xlu0 %569
    %571 = vrot.lane.b32.xlu0 %v546, 96
    %v572 = vpop.permute.xlu0 %571
    %573 = vrot.lane.b32.xlu0 %v547, 96
    %v574 = vpop.permute.xlu0 %573
    %575 = vrot.lane.b32.xlu0 %v548, 96
    %v576 = vpop.permute.xlu0 %575
    %577 = vrot.lane.b32.xlu0 %v549, 96
    %v578 = vpop.permute.xlu0 %577
    %579 = vrot.lane.b32.xlu0 %v550, 96
    %v580 = vpop.permute.xlu0 %579
    %581 = vrot.lane.b32.xlu0 %v551, 96
    %v582 = vpop.permute.xlu0 %581
    %583 = vrot.lane.b32.xlu0 %v552, 96
    %v584 = vpop.permute.xlu0 %583
    %585 = vrot.lane.b32.xlu0 %v553, 96
    %v586 = vpop.permute.xlu0 %585
    %587 = vrot.lane.b32.xlu0 %v554, 96
    %v588 = vpop.permute.xlu0 %587
    %589 = vrot.lane.b32.xlu0 %v555, 96
    %v590 = vpop.permute.xlu0 %589
    %591 = vrot.lane.b32.xlu0 %v556, 96
    %v592 = vpop.permute.xlu0 %591
    %593 = vrot.lane.b32.xlu0 %v557, 96
    %v594 = vpop.permute.xlu0 %593
    %595 = vrot.lane.b32.xlu0 %v558, 96
    %v596 = vpop.permute.xlu0 %595
    %vm597 = vcmask 785408
    %v598 = vsel %vm597, %v560, %v562
    %v599 = vsel %vm597, %v562, %v564
    %v600 = vsel %vm597, %v564, %v566
    %v601 = vsel %vm597, %v566, %v568
    %v602 = vsel %vm597, %v568, %v570
    %v603 = vsel %vm597, %v570, %v572
    %v604 = vsel %vm597, %v572, %v574
    %v605 = vsel %vm597, %v574, %v576
    %v606 = vsel %vm597, %v576, %v578
    %v607 = vsel %vm597, %v578, %v580
    %v608 = vsel %vm597, %v580, %v582
    %v609 = vsel %vm597, %v582, %v584
    %v610 = vsel %vm597, %v584, %v586
    %v611 = vsel %vm597, %v586, %v588
    %v612 = vsel %vm597, %v588, %v590
    %v613 = vsel %vm597, %v590, %v592
    %v614 = vsel %vm597, %v592, %v594
    %v615 = vsel %vm597, %v594, %v596
    %634 = vst [vmem:[#allocation2 + $0x90] sm:$0xe] %v598
    %635 = vst [vmem:[#allocation2 + $0x98] sm:$0xe] %v599
    %636 = vst [vmem:[#allocation2 + $0xa0] sm:$0xe] %v600
    %637 = vst [vmem:[#allocation2 + $0xa8] sm:$0xe] %v601
    %638 = vst [vmem:[#allocation2 + $0xb0] sm:$0xe] %v602
    %639 = vst [vmem:[#allocation2 + $0xb8] sm:$0xe] %v603
    %640 = vst [vmem:[#allocation2 + $0xc0] sm:$0xe] %v604
    %641 = vst [vmem:[#allocation2 + $0xc8] sm:$0xe] %v605
    %642 = vst [vmem:[#allocation2 + $0xd0] sm:$0xe] %v606
    %643 = vst [vmem:[#allocation2 + $0xd8] sm:$0xe] %v607
    %644 = vst [vmem:[#allocation2 + $0xe0] sm:$0xe] %v608
    %645 = vst [vmem:[#allocation2 + $0xe8] sm:$0xe] %v609
    %646 = vst [vmem:[#allocation2 + $0xf0] sm:$0xe] %v610
    %647 = vst [vmem:[#allocation2 + $0xf8] sm:$0xe] %v611
    %648 = vst [vmem:[#allocation2 + $0x100] sm:$0xe] %v612
    %649 = vst [vmem:[#allocation2 + $0x108] sm:$0xe] %v613
    %650 = vst [vmem:[#allocation2 + $0x110] sm:$0xe] %v614
    %651 = vst [vmem:[#allocation2 + $0x118] sm:$0xe] %v615
    %v652 = vld [vmem:[%s0] sm:$0x77]
    %v653 = vld [vmem:[%s0 + $0x8] sm:$0x77]
    %v654 = vld [vmem:[%s0 + $0x10] sm:$0x77]
    %v655 = vld [vmem:[%s0 + $0x18] sm:$0x77]
    %v656 = vld [vmem:[%s0 + $0x20] sm:$0x77]
    %v657 = vld [vmem:[%s0 + $0x28] sm:$0x77]
    %v658 = vld [vmem:[%s0 + $0x30] sm:$0x77]
    %v659 = vld [vmem:[%s0 + $0x38] sm:$0x77]
    %v660 = vld [vmem:[%s0 + $0x40] sm:$0x77]
    %v661 = vld [vmem:[%s0 + $0x48] sm:$0x7]
    %s672 = scalar_lea.vmem [#allocation1], 1
    %673 = vst [vmem:[%s672] ss:$2 sm:$0xff] %v652
    %s674 = scalar_lea.vmem [#allocation1], 17
    %675 = vst [vmem:[%s674] ss:$2 sm:$0xff] %v653
    %s676 = scalar_lea.vmem [#allocation1], 33
    %677 = vst [vmem:[%s676] ss:$2 sm:$0xff] %v654
    %s678 = scalar_lea.vmem [#allocation1], 49
    %679 = vst [vmem:[%s678] ss:$2 sm:$0xff] %v655
    %v680 = vld.sshfl [vmem:[#allocation1] sm:$0xff pattern:$0x75316420]
    %v681 = vld.sshfl [vmem:[#allocation1 + $0x8] sm:$0xff pattern:$0x75316420]
    %v682 = vld.sshfl [vmem:[#allocation1 + $0x10] sm:$0xff pattern:$0x75316420]
    %v683 = vld.sshfl [vmem:[#allocation1 + $0x18] sm:$0xff pattern:$0x75316420]
    %v684 = vld.sshfl [vmem:[#allocation1 + $0x20] sm:$0xff pattern:$0x75316420]
    %v685 = vld.sshfl [vmem:[#allocation1 + $0x28] sm:$0xff pattern:$0x75316420]
    %v686 = vld.sshfl [vmem:[#allocation1 + $0x30] sm:$0xff pattern:$0x75316420]
    %v687 = vld.sshfl [vmem:[#allocation1 + $0x38] sm:$0xff pattern:$0x75316420]
    %688 = vst [vmem:[%s672] ss:$2 sm:$0xff] %v656
    %689 = vst [vmem:[%s674] ss:$2 sm:$0xff] %v657
    %690 = vst [vmem:[%s676] ss:$2 sm:$0xff] %v658
    %691 = vst [vmem:[%s678] ss:$2 sm:$0xff] %v659
    %v692 = vld.sshfl [vmem:[#allocation1] sm:$0xff pattern:$0x75316420]
    %v693 = vld.sshfl [vmem:[#allocation1 + $0x8] sm:$0xff pattern:$0x75316420]
    %v694 = vld.sshfl [vmem:[#allocation1 + $0x10] sm:$0xff pattern:$0x75316420]
    %v695 = vld.sshfl [vmem:[#allocation1 + $0x18] sm:$0xff pattern:$0x75316420]
    %v696 = vld.sshfl [vmem:[#allocation1 + $0x20] sm:$0xff pattern:$0x75316420]
    %v697 = vld.sshfl [vmem:[#allocation1 + $0x28] sm:$0xff pattern:$0x75316420]
    %v698 = vld.sshfl [vmem:[#allocation1 + $0x30] sm:$0xff pattern:$0x75316420]
    %v699 = vld.sshfl [vmem:[#allocation1 + $0x38] sm:$0xff pattern:$0x75316420]
    %700 = vst [vmem:[%s672] ss:$2 sm:$0xff] %v660
    %701 = vst [vmem:[%s674] ss:$2 sm:$0xff] %v661
    %v702 = vld.sshfl [vmem:[#allocation1] sm:$0xff pattern:$0x75316420]
    %v703 = vld.sshfl [vmem:[#allocation1 + $0x8] sm:$0xff pattern:$0x75316420]
    %v704 = vld.sshfl [vmem:[#allocation1 + $0x10] sm:$0xff pattern:$0x75316420]
    %705 = vrot.lane.b32.xlu0 %v680, 95
    %v706 = vpop.permute.xlu0 %705
    %707 = vrot.lane.b32.xlu0 %v681, 95
    %v708 = vpop.permute.xlu0 %707
    %709 = vrot.lane.b32.xlu0 %v682, 95
    %v710 = vpop.permute.xlu0 %709
    %711 = vrot.lane.b32.xlu0 %v683, 95
    %v712 = vpop.permute.xlu0 %711
    %713 = vrot.lane.b32.xlu0 %v684, 95
    %v714 = vpop.permute.xlu0 %713
    %715 = vrot.lane.b32.xlu0 %v685, 95
    %v716 = vpop.permute.xlu0 %715
    %717 = vrot.lane.b32.xlu0 %v686, 95
    %v718 = vpop.permute.xlu0 %717
    %719 = vrot.lane.b32.xlu0 %v687, 95
    %v720 = vpop.permute.xlu0 %719
    %721 = vrot.lane.b32.xlu0 %v692, 95
    %v722 = vpop.permute.xlu0 %721
    %723 = vrot.lane.b32.xlu0 %v693, 95
    %v724 = vpop.permute.xlu0 %723
    %725 = vrot.lane.b32.xlu0 %v694, 95
    %v726 = vpop.permute.xlu0 %725
    %727 = vrot.lane.b32.xlu0 %v695, 95
    %v728 = vpop.permute.xlu0 %727
    %729 = vrot.lane.b32.xlu0 %v696, 95
    %v730 = vpop.permute.xlu0 %729
    %731 = vrot.lane.b32.xlu0 %v697, 95
    %v732 = vpop.permute.xlu0 %731
    %733 = vrot.lane.b32.xlu0 %v698, 95
    %v734 = vpop.permute.xlu0 %733
    %735 = vrot.lane.b32.xlu0 %v699, 95
    %v736 = vpop.permute.xlu0 %735
    %737 = vrot.lane.b32.xlu0 %v702, 95
    %v738 = vpop.permute.xlu0 %737
    %739 = vrot.lane.b32.xlu0 %v703, 95
    %v740 = vpop.permute.xlu0 %739
    %741 = vrot.lane.b32.xlu0 %v704, 95
    %v742 = vpop.permute.xlu0 %741
    %vm743 = vcmask 777216
    %v744 = vsel %vm743, %v706, %v708
    %v745 = vsel %vm743, %v708, %v710
    %v746 = vsel %vm743, %v710, %v712
    %v747 = vsel %vm743, %v712, %v714
    %v748 = vsel %vm743, %v714, %v716
    %v749 = vsel %vm743, %v716, %v718
    %v750 = vsel %vm743, %v718, %v720
    %v751 = vsel %vm743, %v720, %v722
    %v752 = vsel %vm743, %v722, %v724
    %v753 = vsel %vm743, %v724, %v726
    %v754 = vsel %vm743, %v726, %v728
    %v755 = vsel %vm743, %v728, %v730
    %v756 = vsel %vm743, %v730, %v732
    %v757 = vsel %vm743, %v732, %v734
    %v758 = vsel %vm743, %v734, %v736
    %v759 = vsel %vm743, %v736, %v738
    %v760 = vsel %vm743, %v738, %v740
    %v761 = vsel %vm743, %v740, %v742
    %780 = vst [vmem:[#allocation2 + $0x90] sm:$0x70] %v744
    %781 = vst [vmem:[#allocation2 + $0x98] sm:$0x70] %v745
    %782 = vst [vmem:[#allocation2 + $0xa0] sm:$0x70] %v746
    %783 = vst [vmem:[#allocation2 + $0xa8] sm:$0x70] %v747
    %784 = vst [vmem:[#allocation2 + $0xb0] sm:$0x70] %v748
    %785 = vst [vmem:[#allocation2 + $0xb8] sm:$0x70] %v749
    %786 = vst [vmem:[#allocation2 + $0xc0] sm:$0x70] %v750
    %787 = vst [vmem:[#allocation2 + $0xc8] sm:$0x70] %v751
    %788 = vst [vmem:[#allocation2 + $0xd0] sm:$0x70] %v752
    %789 = vst [vmem:[#allocation2 + $0xd8] sm:$0x70] %v753
    %790 = vst [vmem:[#allocation2 + $0xe0] sm:$0x70] %v754
    %791 = vst [vmem:[#allocation2 + $0xe8] sm:$0x70] %v755
    %792 = vst [vmem:[#allocation2 + $0xf0] sm:$0x70] %v756
    %793 = vst [vmem:[#allocation2 + $0xf8] sm:$0x70] %v757
    %794 = vst [vmem:[#allocation2 + $0x100] sm:$0x70] %v758
    %795 = vst [vmem:[#allocation2 + $0x108] sm:$0x70] %v759
    %796 = vst [vmem:[#allocation2 + $0x110] sm:$0x70] %v760
    %797 = vst [vmem:[#allocation2 + $0x118] sm:$0x70] %v761
    %v798 = vld [vmem:[%s0] sm:$0x77]
    %v799 = vld [vmem:[%s0 + $0x8] sm:$0x77]
    %v800 = vld [vmem:[%s0 + $0x10] sm:$0x77]
    %v801 = vld [vmem:[%s0 + $0x18] sm:$0x77]
    %v802 = vld [vmem:[%s0 + $0x20] sm:$0x77]
    %v803 = vld [vmem:[%s0 + $0x28] sm:$0x77]
    %v804 = vld [vmem:[%s0 + $0x30] sm:$0x77]
    %v805 = vld [vmem:[%s0 + $0x38] sm:$0x77]
    %v806 = vld [vmem:[%s0 + $0x40] sm:$0x77]
    %v807 = vld [vmem:[%s0 + $0x48] sm:$0x7]
    %818 = vst [vmem:[#allocation1] ss:$2 sm:$0xff] %v798
    %s819 = scalar_lea.vmem [#allocation1], 16
    %820 = vst [vmem:[%s819] ss:$2 sm:$0xff] %v799
    %s821 = scalar_lea.vmem [#allocation1], 32
    %822 = vst [vmem:[%s821] ss:$2 sm:$0xff] %v800
    %s823 = scalar_lea.vmem [#allocation1], 48
    %824 = vst [vmem:[%s823] ss:$2 sm:$0xff] %v801
    %v825 = vld.sshfl [vmem:[#allocation1] sm:$0xff pattern:$0x75316420]
    %v826 = vld.sshfl [vmem:[#allocation1 + $0x8] sm:$0xff pattern:$0x75316420]
    %v827 = vld.sshfl [vmem:[#allocation1 + $0x10] sm:$0xff pattern:$0x75316420]
    %v828 = vld.sshfl [vmem:[#allocation1 + $0x18] sm:$0xff pattern:$0x75316420]
    %v829 = vld.sshfl [vmem:[#allocation1 + $0x20] sm:$0xff pattern:$0x75316420]
    %v830 = vld.sshfl [vmem:[#allocation1 + $0x28] sm:$0xff pattern:$0x75316420]
    %v831 = vld.sshfl [vmem:[#allocation1 + $0x30] sm:$0xff pattern:$0x75316420]
    %v832 = vld.sshfl [vmem:[#allocation1 + $0x38] sm:$0xff pattern:$0x75316420]
    %833 = vst [vmem:[#allocation1] ss:$2 sm:$0xff] %v802
    %834 = vst [vmem:[%s819] ss:$2 sm:$0xff] %v803
    %835 = vst [vmem:[%s821] ss:$2 sm:$0xff] %v804
    %836 = vst [vmem:[%s823] ss:$2 sm:$0xff] %v805
    %v837 = vld.sshfl [vmem:[#allocation1] sm:$0xff pattern:$0x75316420]
    %v838 = vld.sshfl [vmem:[#allocation1 + $0x8] sm:$0xff pattern:$0x75316420]
    %v839 = vld.sshfl [vmem:[#allocation1 + $0x10] sm:$0xff pattern:$0x75316420]
    %v840 = vld.sshfl [vmem:[#allocation1 + $0x18] sm:$0xff pattern:$0x75316420]
    %v841 = vld.sshfl [vmem:[#allocation1 + $0x20] sm:$0xff pattern:$0x75316420]
    %v842 = vld.sshfl [vmem:[#allocation1 + $0x28] sm:$0xff pattern:$0x75316420]
    %v843 = vld.sshfl [vmem:[#allocation1 + $0x30] sm:$0xff pattern:$0x75316420]
    %v844 = vld.sshfl [vmem:[#allocation1 + $0x38] sm:$0xff pattern:$0x75316420]
    %845 = vst [vmem:[#allocation1] ss:$2 sm:$0xff] %v806
    %846 = vst [vmem:[%s819] ss:$2 sm:$0xff] %v807
    %v847 = vld.sshfl [vmem:[#allocation1] sm:$0xff pattern:$0x75316420]
    %v848 = vld.sshfl [vmem:[#allocation1 + $0x8] sm:$0xff pattern:$0x75316420]
    %v849 = vld.sshfl [vmem:[#allocation1 + $0x10] sm:$0xff pattern:$0x75316420]
    %v850 = vrot.slane %v825, 1
    %v851 = vrot.slane %v826, 1
    %v852 = vrot.slane %v827, 1
    %v853 = vrot.slane %v828, 1
    %v854 = vrot.slane %v829, 1
    %v855 = vrot.slane %v830, 1
    %v856 = vrot.slane %v831, 1
    %v857 = vrot.slane %v832, 1
    %v858 = vrot.slane %v837, 1
    %v859 = vrot.slane %v838, 1
    %v860 = vrot.slane %v839, 1
    %v861 = vrot.slane %v840, 1
    %v862 = vrot.slane %v841, 1
    %v863 = vrot.slane %v842, 1
    %v864 = vrot.slane %v843, 1
    %v865 = vrot.slane %v844, 1
    %v866 = vrot.slane %v847, 1
    %v867 = vrot.slane %v848, 1
    %v868 = vrot.slane %v849, 1
    %869 = vrot.lane.b32.xlu0 %v850, 94
    %v870 = vpop.permute.xlu0 %869
    %871 = vrot.lane.b32.xlu0 %v851, 94
    %v872 = vpop.permute.xlu0 %871
    %873 = vrot.lane.b32.xlu0 %v852, 94
    %v874 = vpop.permute.xlu0 %873
    %875 = vrot.lane.b32.xlu0 %v853, 94
    %v876 = vpop.permute.xlu0 %875
    %877 = vrot.lane.b32.xlu0 %v854, 94
    %v878 = vpop.permute.xlu0 %877
    %879 = vrot.lane.b32.xlu0 %v855, 94
    %v880 = vpop.permute.xlu0 %879
    %881 = vrot.lane.b32.xlu0 %v856, 94
    %v882 = vpop.permute.xlu0 %881
    %883 = vrot.lane.b32.xlu0 %v857, 94
    %v884 = vpop.permute.xlu0 %883
    %885 = vrot.lane.b32.xlu0 %v858, 94
    %v886 = vpop.permute.xlu0 %885
    %887 = vrot.lane.b32.xlu0 %v859, 94
    %v888 = vpop.permute.xlu0 %887
    %889 = vrot.lane.b32.xlu0 %v860, 94
    %v890 = vpop.permute.xlu0 %889
    %891 = vrot.lane.b32.xlu0 %v861, 94
    %v892 = vpop.permute.xlu0 %891
    %893 = vrot.lane.b32.xlu0 %v862, 94
    %v894 = vpop.permute.xlu0 %893
    %895 = vrot.lane.b32.xlu0 %v863, 94
    %v896 = vpop.permute.xlu0 %895
    %897 = vrot.lane.b32.xlu0 %v864, 94
    %v898 = vpop.permute.xlu0 %897
    %899 = vrot.lane.b32.xlu0 %v865, 94
    %v900 = vpop.permute.xlu0 %899
    %901 = vrot.lane.b32.xlu0 %v866, 94
    %v902 = vpop.permute.xlu0 %901
    %903 = vrot.lane.b32.xlu0 %v867, 94
    %v904 = vpop.permute.xlu0 %903
    %905 = vrot.lane.b32.xlu0 %v868, 94
    %v906 = vpop.permute.xlu0 %905
    %vm907 = vcmask 769024
    %v908 = vsel %vm907, %v870, %v872
    %v909 = vsel %vm907, %v872, %v874
    %v910 = vsel %vm907, %v874, %v876
    %v911 = vsel %vm907, %v876, %v878
    %v912 = vsel %vm907, %v878, %v880
    %v913 = vsel %vm907, %v880, %v882
    %v914 = vsel %vm907, %v882, %v884
    %v915 = vsel %vm907, %v884, %v886
    %v916 = vsel %vm907, %v886, %v888
    %v917 = vsel %vm907, %v888, %v890
    %v918 = vsel %vm907, %v890, %v892
    %v919 = vsel %vm907, %v892, %v894
    %v920 = vsel %vm907, %v894, %v896
    %v921 = vsel %vm907, %v896, %v898
    %v922 = vsel %vm907, %v898, %v900
    %v923 = vsel %vm907, %v900, %v902
    %v924 = vsel %vm907, %v902, %v904
    %v925 = vsel %vm907, %v904, %v906
    %944 = vst [vmem:[#allocation2 + $0x90] sm:$0x80] %v908
    %945 = vst [vmem:[#allocation2 + $0x98] sm:$0x80] %v909
    %946 = vst [vmem:[#allocation2 + $0xa0] sm:$0x80] %v910
    %947 = vst [vmem:[#allocation2 + $0xa8] sm:$0x80] %v911
    %948 = vst [vmem:[#allocation2 + $0xb0] sm:$0x80] %v912
    %949 = vst [vmem:[#allocation2 + $0xb8] sm:$0x80] %v913
    %950 = vst [vmem:[#allocation2 + $0xc0] sm:$0x80] %v914
    %951 = vst [vmem:[#allocation2 + $0xc8] sm:$0x80] %v915
    %952 = vst [vmem:[#allocation2 + $0xd0] sm:$0x80] %v916
    %953 = vst [vmem:[#allocation2 + $0xd8] sm:$0x80] %v917
    %954 = vst [vmem:[#allocation2 + $0xe0] sm:$0x80] %v918
    %955 = vst [vmem:[#allocation2 + $0xe8] sm:$0x80] %v919
    %956 = vst [vmem:[#allocation2 + $0xf0] sm:$0x80] %v920
    %957 = vst [vmem:[#allocation2 + $0xf8] sm:$0x80] %v921
    %958 = vst [vmem:[#allocation2 + $0x100] sm:$0x80] %v922
    %959 = vst [vmem:[#allocation2 + $0x108] sm:$0x80] %v923
    %960 = vst [vmem:[#allocation2 + $0x110] sm:$0x80] %v924
    %961 = vst [vmem:[#allocation2 + $0x118] sm:$0x80] %v925
    %962 = vst [vmem:[#allocation2 + $0x120] sm:$0x3] %v908
    %963 = vst [vmem:[#allocation2 + $0x128] sm:$0x3] %v909
    %964 = vst [vmem:[#allocation2 + $0x130] sm:$0x3] %v910
    %965 = vst [vmem:[#allocation2 + $0x138] sm:$0x3] %v911
    %966 = vst [vmem:[#allocation2 + $0x140] sm:$0x3] %v912
    %967 = vst [vmem:[#allocation2 + $0x148] sm:$0x3] %v913
    %968 = vst [vmem:[#allocation2 + $0x150] sm:$0x3] %v914
    %969 = vst [vmem:[#allocation2 + $0x158] sm:$0x3] %v915
    %970 = vst [vmem:[#allocation2 + $0x160] sm:$0x3] %v916
    %971 = vst [vmem:[#allocation2 + $0x168] sm:$0x3] %v917
    %972 = vst [vmem:[#allocation2 + $0x170] sm:$0x3] %v918
    %973 = vst [vmem:[#allocation2 + $0x178] sm:$0x3] %v919
    %974 = vst [vmem:[#allocation2 + $0x180] sm:$0x3] %v920
    %975 = vst [vmem:[#allocation2 + $0x188] sm:$0x3] %v921
    %976 = vst [vmem:[#allocation2 + $0x190] sm:$0x3] %v922
    %977 = vst [vmem:[#allocation2 + $0x198] sm:$0x3] %v923
    %978 = vst [vmem:[#allocation2 + $0x1a0] sm:$0x3] %v924
    %979 = vst [vmem:[#allocation2 + $0x1a8] sm:$0x3] %v925
    %v980 = vld [vmem:[%s0] sm:$0x77]
    %v981 = vld [vmem:[%s0 + $0x8] sm:$0x77]
    %v982 = vld [vmem:[%s0 + $0x10] sm:$0x77]
    %v983 = vld [vmem:[%s0 + $0x18] sm:$0x77]
    %v984 = vld [vmem:[%s0 + $0x20] sm:$0x77]
    %v985 = vld [vmem:[%s0 + $0x28] sm:$0x77]
    %v986 = vld [vmem:[%s0 + $0x30] sm:$0x77]
    %v987 = vld [vmem:[%s0 + $0x38] sm:$0x77]
    %v988 = vld [vmem:[%s0 + $0x40] sm:$0x77]
    %v989 = vld [vmem:[%s0 + $0x48] sm:$0x7]
    %1000 = vst [vmem:[#allocation1] ss:$2 sm:$0xff] %v980
    %s1001 = scalar_lea.vmem [#allocation1], 16
    %1002 = vst [vmem:[%s1001] ss:$2 sm:$0xff] %v981
    %s1003 = scalar_lea.vmem [#allocation1], 32
    %1004 = vst [vmem:[%s1003] ss:$2 sm:$0xff] %v982
    %s1005 = scalar_lea.vmem [#allocation1], 48
    %1006 = vst [vmem:[%s1005] ss:$2 sm:$0xff] %v983
    %v1007 = vld.sshfl [vmem:[#allocation1] sm:$0xff pattern:$0x75316420]
    %v1008 = vld.sshfl [vmem:[#allocation1 + $0x8] sm:$0xff pattern:$0x75316420]
    %v1009 = vld.sshfl [vmem:[#allocation1 + $0x10] sm:$0xff pattern:$0x75316420]
    %v1010 = vld.sshfl [vmem:[#allocation1 + $0x18] sm:$0xff pattern:$0x75316420]
    %v1011 = vld.sshfl [vmem:[#allocation1 + $0x20] sm:$0xff pattern:$0x75316420]
    %v1012 = vld.sshfl [vmem:[#allocation1 + $0x28] sm:$0xff pattern:$0x75316420]
    %v1013 = vld.sshfl [vmem:[#allocation1 + $0x30] sm:$0xff pattern:$0x75316420]
    %v1014 = vld.sshfl [vmem:[#allocation1 + $0x38] sm:$0xff pattern:$0x75316420]
    %1015 = vst [vmem:[#allocation1] ss:$2 sm:$0xff] %v984
    %1016 = vst [vmem:[%s1001] ss:$2 sm:$0xff] %v985
    %1017 = vst [vmem:[%s1003] ss:$2 sm:$0xff] %v986
    %1018 = vst [vmem:[%s1005] ss:$2 sm:$0xff] %v987
    %v1019 = vld.sshfl [vmem:[#allocation1] sm:$0xff pattern:$0x75316420]
    %v1020 = vld.sshfl [vmem:[#allocation1 + $0x8] sm:$0xff pattern:$0x75316420]
    %v1021 = vld.sshfl [vmem:[#allocation1 + $0x10] sm:$0xff pattern:$0x75316420]
    %v1022 = vld.sshfl [vmem:[#allocation1 + $0x18] sm:$0xff pattern:$0x75316420]
    %v1023 = vld.sshfl [vmem:[#allocation1 + $0x20] sm:$0xff pattern:$0x75316420]
    %v1024 = vld.sshfl [vmem:[#allocation1 + $0x28] sm:$0xff pattern:$0x75316420]
    %v1025 = vld.sshfl [vmem:[#allocation1 + $0x30] sm:$0xff pattern:$0x75316420]
    %v1026 = vld.sshfl [vmem:[#allocation1 + $0x38] sm:$0xff pattern:$0x75316420]
    %1027 = vst [vmem:[#allocation1] ss:$2 sm:$0xff] %v988
    %1028 = vst [vmem:[%s1001] ss:$2 sm:$0xff] %v989
    %v1029 = vld.sshfl [vmem:[#allocation1] sm:$0xff pattern:$0x75316420]
    %v1030 = vld.sshfl [vmem:[#allocation1 + $0x8] sm:$0xff pattern:$0x75316420]
    %v1031 = vld.sshfl [vmem:[#allocation1 + $0x10] sm:$0xff pattern:$0x75316420]
    %v1032 = vrot.slane %v1007, 6
    %v1033 = vrot.slane %v1008, 6
    %v1034 = vrot.slane %v1009, 6
    %v1035 = vrot.slane %v1010, 6
    %v1036 = vrot.slane %v1011, 6
    %v1037 = vrot.slane %v1012, 6
    %v1038 = vrot.slane %v1013, 6
    %v1039 = vrot.slane %v1014, 6
    %v1040 = vrot.slane %v1019, 6
    %v1041 = vrot.slane %v1020, 6
    %v1042 = vrot.slane %v1021, 6
    %v1043 = vrot.slane %v1022, 6
    %v1044 = vrot.slane %v1023, 6
    %v1045 = vrot.slane %v1024, 6
    %v1046 = vrot.slane %v1025, 6
    %v1047 = vrot.slane %v1026, 6
    %v1048 = vrot.slane %v1029, 6
    %v1049 = vrot.slane %v1030, 6
    %v1050 = vrot.slane %v1031, 6
    %1051 = vrot.lane.b32.xlu0 %v1032, 64
    %v1052 = vpop.permute.xlu0 %1051
    %1053 = vrot.lane.b32.xlu0 %v1033, 64
    %v1054 = vpop.permute.xlu0 %1053
    %1055 = vrot.lane.b32.xlu0 %v1034, 64
    %v1056 = vpop.permute.xlu0 %1055
    %1057 = vrot.lane.b32.xlu0 %v1035, 64
    %v1058 = vpop.permute.xlu0 %1057
    %1059 = vrot.lane.b32.xlu0 %v1036, 64
    %v1060 = vpop.permute.xlu0 %1059
    %1061 = vrot.lane.b32.xlu0 %v1037, 64
    %v1062 = vpop.permute.xlu0 %1061
    %1063 = vrot.lane.b32.xlu0 %v1038, 64
    %v1064 = vpop.permute.xlu0 %1063
    %1065 = vrot.lane.b32.xlu0 %v1039, 64
    %v1066 = vpop.permute.xlu0 %1065
    %1067 = vrot.lane.b32.xlu0 %v1040, 64
    %v1068 = vpop.permute.xlu0 %1067
    %1069 = vrot.lane.b32.xlu0 %v1041, 64
    %v1070 = vpop.permute.xlu0 %1069
    %1071 = vrot.lane.b32.xlu0 %v1042, 64
    %v1072 = vpop.permute.xlu0 %1071
    %1073 = vrot.lane.b32.xlu0 %v1043, 64
    %v1074 = vpop.permute.xlu0 %1073
    %1075 = vrot.lane.b32.xlu0 %v1044, 64
    %v1076 = vpop.permute.xlu0 %1075
    %1077 = vrot.lane.b32.xlu0 %v1045, 64
    %v1078 = vpop.permute.xlu0 %1077
    %1079 = vrot.lane.b32.xlu0 %v1046, 64
    %v1080 = vpop.permute.xlu0 %1079
    %1081 = vrot.lane.b32.xlu0 %v1047, 64
    %v1082 = vpop.permute.xlu0 %1081
    %1083 = vrot.lane.b32.xlu0 %v1048, 64
    %v1084 = vpop.permute.xlu0 %1083
    %1085 = vrot.lane.b32.xlu0 %v1049, 64
    %v1086 = vpop.permute.xlu0 %1085
    %1087 = vrot.lane.b32.xlu0 %v1050, 64
    %v1088 = vpop.permute.xlu0 %1087
    %vm1089 = vcmask 523264
    %v1090 = vsel %vm1089, %v1052, %v1054
    %v1091 = vsel %vm1089, %v1054, %v1056
    %v1092 = vsel %vm1089, %v1056, %v1058
    %v1093 = vsel %vm1089, %v1058, %v1060
    %v1094 = vsel %vm1089, %v1060, %v1062
    %v1095 = vsel %vm1089, %v1062, %v1064
    %v1096 = vsel %vm1089, %v1064, %v1066
    %v1097 = vsel %vm1089, %v1066, %v1068
    %v1098 = vsel %vm1089, %v1068, %v1070
    %v1099 = vsel %vm1089, %v1070, %v1072
    %v1100 = vsel %vm1089, %v1072, %v1074
    %v1101 = vsel %vm1089, %v1074, %v1076
    %v1102 = vsel %vm1089, %v1076, %v1078
    %v1103 = vsel %vm1089, %v1078, %v1080
    %v1104 = vsel %vm1089, %v1080, %v1082
    %v1105 = vsel %vm1089, %v1082, %v1084
    %v1106 = vsel %vm1089, %v1084, %v1086
    %v1107 = vsel %vm1089, %v1086, %v1088
    %1126 = vst [vmem:[#allocation2 + $0x120] sm:$0x1c] %v1090
    %1127 = vst [vmem:[#allocation2 + $0x128] sm:$0x1c] %v1091
    %1128 = vst [vmem:[#allocation2 + $0x130] sm:$0x1c] %v1092
    %1129 = vst [vmem:[#allocation2 + $0x138] sm:$0x1c] %v1093
    %1130 = vst [vmem:[#allocation2 + $0x140] sm:$0x1c] %v1094
    %1131 = vst [vmem:[#allocation2 + $0x148] sm:$0x1c] %v1095
    %1132 = vst [vmem:[#allocation2 + $0x150] sm:$0x1c] %v1096
    %1133 = vst [vmem:[#allocation2 + $0x158] sm:$0x1c] %v1097
    %1134 = vst [vmem:[#allocation2 + $0x160] sm:$0x1c] %v1098
    %1135 = vst [vmem:[#allocation2 + $0x168] sm:$0x1c] %v1099
    %1136 = vst [vmem:[#allocation2 + $0x170] sm:$0x1c] %v1100
    %1137 = vst [vmem:[#allocation2 + $0x178] sm:$0x1c] %v1101
    %1138 = vst [vmem:[#allocation2 + $0x180] sm:$0x1c] %v1102
    %1139 = vst [vmem:[#allocation2 + $0x188] sm:$0x1c] %v1103
    %1140 = vst [vmem:[#allocation2 + $0x190] sm:$0x1c] %v1104
    %1141 = vst [vmem:[#allocation2 + $0x198] sm:$0x1c] %v1105
    %1142 = vst [vmem:[#allocation2 + $0x1a0] sm:$0x1c] %v1106
    %1143 = vst [vmem:[#allocation2 + $0x1a8] sm:$0x1c] %v1107
    %v1144 = vld [vmem:[%s0] sm:$0x77]
    %v1145 = vld [vmem:[%s0 + $0x8] sm:$0x77]
    %v1146 = vld [vmem:[%s0 + $0x10] sm:$0x77]
    %v1147 = vld [vmem:[%s0 + $0x18] sm:$0x77]
    %v1148 = vld [vmem:[%s0 + $0x20] sm:$0x77]
    %v1149 = vld [vmem:[%s0 + $0x28] sm:$0x77]
    %v1150 = vld [vmem:[%s0 + $0x30] sm:$0x77]
    %v1151 = vld [vmem:[%s0 + $0x38] sm:$0x77]
    %v1152 = vld [vmem:[%s0 + $0x40] sm:$0x77]
    %v1153 = vld [vmem:[%s0 + $0x48] sm:$0x7]
    %1164 = vst [vmem:[#allocation1] ss:$2 sm:$0xff] %v1144
    %s1165 = scalar_lea.vmem [#allocation1], 16
    %1166 = vst [vmem:[%s1165] ss:$2 sm:$0xff] %v1145
    %s1167 = scalar_lea.vmem [#allocation1], 32
    %1168 = vst [vmem:[%s1167] ss:$2 sm:$0xff] %v1146
    %s1169 = scalar_lea.vmem [#allocation1], 48
    %1170 = vst [vmem:[%s1169] ss:$2 sm:$0xff] %v1147
    %v1171 = vld.sshfl [vmem:[#allocation1] sm:$0xff pattern:$0x75316420]
    %v1172 = vld.sshfl [vmem:[#allocation1 + $0x8] sm:$0xff pattern:$0x75316420]
    %v1173 = vld.sshfl [vmem:[#allocation1 + $0x10] sm:$0xff pattern:$0x75316420]
    %v1174 = vld.sshfl [vmem:[#allocation1 + $0x18] sm:$0xff pattern:$0x75316420]
    %v1175 = vld.sshfl [vmem:[#allocation1 + $0x20] sm:$0xff pattern:$0x75316420]
    %v1176 = vld.sshfl [vmem:[#allocation1 + $0x28] sm:$0xff pattern:$0x75316420]
    %v1177 = vld.sshfl [vmem:[#allocation1 + $0x30] sm:$0xff pattern:$0x75316420]
    %v1178 = vld.sshfl [vmem:[#allocation1 + $0x38] sm:$0xff pattern:$0x75316420]
    %1179 = vst [vmem:[#allocation1] ss:$2 sm:$0xff] %v1148
    %1180 = vst [vmem:[%s1165] ss:$2 sm:$0xff] %v1149
    %1181 = vst [vmem:[%s1167] ss:$2 sm:$0xff] %v1150
    %1182 = vst [vmem:[%s1169] ss:$2 sm:$0xff] %v1151
    %v1183 = vld.sshfl [vmem:[#allocation1] sm:$0xff pattern:$0x75316420]
    %v1184 = vld.sshfl [vmem:[#allocation1 + $0x8] sm:$0xff pattern:$0x75316420]
    %v1185 = vld.sshfl [vmem:[#allocation1 + $0x10] sm:$0xff pattern:$0x75316420]
    %v1186 = vld.sshfl [vmem:[#allocation1 + $0x18] sm:$0xff pattern:$0x75316420]
    %v1187 = vld.sshfl [vmem:[#allocation1 + $0x20] sm:$0xff pattern:$0x75316420]
    %v1188 = vld.sshfl [vmem:[#allocation1 + $0x28] sm:$0xff pattern:$0x75316420]
    %v1189 = vld.sshfl [vmem:[#allocation1 + $0x30] sm:$0xff pattern:$0x75316420]
    %v1190 = vld.sshfl [vmem:[#allocation1 + $0x38] sm:$0xff pattern:$0x75316420]
    %1191 = vst [vmem:[#allocation1] ss:$2 sm:$0xff] %v1152
    %1192 = vst [vmem:[%s1165] ss:$2 sm:$0xff] %v1153
    %v1193 = vld.sshfl [vmem:[#allocation1] sm:$0xff pattern:$0x75316420]
    %v1194 = vld.sshfl [vmem:[#allocation1 + $0x8] sm:$0xff pattern:$0x75316420]
    %v1195 = vld.sshfl [vmem:[#allocation1 + $0x10] sm:$0xff pattern:$0x75316420]
    %v1196 = vrot.slane %v1171, 3
    %v1197 = vrot.slane %v1172, 3
    %v1198 = vrot.slane %v1173, 3
    %v1199 = vrot.slane %v1174, 3
    %v1200 = vrot.slane %v1175, 3
    %v1201 = vrot.slane %v1176, 3
    %v1202 = vrot.slane %v1177, 3
    %v1203 = vrot.slane %v1178, 3
    %v1204 = vrot.slane %v1183, 3
    %v1205 = vrot.slane %v1184, 3
    %v1206 = vrot.slane %v1185, 3
    %v1207 = vrot.slane %v1186, 3
    %v1208 = vrot.slane %v1187, 3
    %v1209 = vrot.slane %v1188, 3
    %v1210 = vrot.slane %v1189, 3
    %v1211 = vrot.slane %v1190, 3
    %v1212 = vrot.slane %v1193, 3
    %v1213 = vrot.slane %v1194, 3
    %v1214 = vrot.slane %v1195, 3
    %1215 = vrot.lane.b32.xlu0 %v1196, 63
    %v1216 = vpop.permute.xlu0 %1215
    %1217 = vrot.lane.b32.xlu0 %v1197, 63
    %v1218 = vpop.permute.xlu0 %1217
    %1219 = vrot.lane.b32.xlu0 %v1198, 63
    %v1220 = vpop.permute.xlu0 %1219
    %1221 = vrot.lane.b32.xlu0 %v1199, 63
    %v1222 = vpop.permute.xlu0 %1221
    %1223 = vrot.lane.b32.xlu0 %v1200, 63
    %v1224 = vpop.permute.xlu0 %1223
    %1225 = vrot.lane.b32.xlu0 %v1201, 63
    %v1226 = vpop.permute.xlu0 %1225
    %1227 = vrot.lane.b32.xlu0 %v1202, 63
    %v1228 = vpop.permute.xlu0 %1227
    %1229 = vrot.lane.b32.xlu0 %v1203, 63
    %v1230 = vpop.permute.xlu0 %1229
    %1231 = vrot.lane.b32.xlu0 %v1204, 63
    %v1232 = vpop.permute.xlu0 %1231
    %1233 = vrot.lane.b32.xlu0 %v1205, 63
    %v1234 = vpop.permute.xlu0 %1233
    %1235 = vrot.lane.b32.xlu0 %v1206, 63
    %v1236 = vpop.permute.xlu0 %1235
    %1237 = vrot.lane.b32.xlu0 %v1207, 63
    %v1238 = vpop.permute.xlu0 %1237
    %1239 = vrot.lane.b32.xlu0 %v1208, 63
    %v1240 = vpop.permute.xlu0 %1239
    %1241 = vrot.lane.b32.xlu0 %v1209, 63
    %v1242 = vpop.permute.xlu0 %1241
    %1243 = vrot.lane.b32.xlu0 %v1210, 63
    %v1244 = vpop.permute.xlu0 %1243
    %1245 = vrot.lane.b32.xlu0 %v1211, 63
    %v1246 = vpop.permute.xlu0 %1245
    %1247 = vrot.lane.b32.xlu0 %v1212, 63
    %v1248 = vpop.permute.xlu0 %1247
    %1249 = vrot.lane.b32.xlu0 %v1213, 63
    %v1250 = vpop.permute.xlu0 %1249
    %1251 = vrot.lane.b32.xlu0 %v1214, 63
    %v1252 = vpop.permute.xlu0 %1251
    %vm1253 = vcmask 515072
    %v1254 = vsel %vm1253, %v1216, %v1218
    %v1255 = vsel %vm1253, %v1218, %v1220
    %v1256 = vsel %vm1253, %v1220, %v1222
    %v1257 = vsel %vm1253, %v1222, %v1224
    %v1258 = vsel %vm1253, %v1224, %v1226
    %v1259 = vsel %vm1253, %v1226, %v1228
    %v1260 = vsel %vm1253, %v1228, %v1230
    %v1261 = vsel %vm1253, %v1230, %v1232
    %v1262 = vsel %vm1253, %v1232, %v1234
    %v1263 = vsel %vm1253, %v1234, %v1236
    %v1264 = vsel %vm1253, %v1236, %v1238
    %v1265 = vsel %vm1253, %v1238, %v1240
    %v1266 = vsel %vm1253, %v1240, %v1242
    %v1267 = vsel %vm1253, %v1242, %v1244
    %v1268 = vsel %vm1253, %v1244, %v1246
    %v1269 = vsel %vm1253, %v1246, %v1248
    %v1270 = vsel %vm1253, %v1248, %v1250
    %v1271 = vsel %vm1253, %v1250, %v1252
    %1290 = vst [vmem:[#allocation2 + $0x120] sm:$0xe0] %v1254
    %1291 = vst [vmem:[#allocation2 + $0x128] sm:$0xe0] %v1255
    %1292 = vst [vmem:[#allocation2 + $0x130] sm:$0xe0] %v1256
    %1293 = vst [vmem:[#allocation2 + $0x138] sm:$0xe0] %v1257
    %1294 = vst [vmem:[#allocation2 + $0x140] sm:$0xe0] %v1258
    %1295 = vst [vmem:[#allocation2 + $0x148] sm:$0xe0] %v1259
    %1296 = vst [vmem:[#allocation2 + $0x150] sm:$0xe0] %v1260
    %1297 = vst [vmem:[#allocation2 + $0x158] sm:$0xe0] %v1261
    %1298 = vst [vmem:[#allocation2 + $0x160] sm:$0xe0] %v1262
    %1299 = vst [vmem:[#allocation2 + $0x168] sm:$0xe0] %v1263
    %1300 = vst [vmem:[#allocation2 + $0x170] sm:$0xe0] %v1264
    %1301 = vst [vmem:[#allocation2 + $0x178] sm:$0xe0] %v1265
    %1302 = vst [vmem:[#allocation2 + $0x180] sm:$0xe0] %v1266
    %1303 = vst [vmem:[#allocation2 + $0x188] sm:$0xe0] %v1267
    %1304 = vst [vmem:[#allocation2 + $0x190] sm:$0xe0] %v1268
    %1305 = vst [vmem:[#allocation2 + $0x198] sm:$0xe0] %v1269
    %1306 = vst [vmem:[#allocation2 + $0x1a0] sm:$0xe0] %v1270
    %1307 = vst [vmem:[#allocation2 + $0x1a8] sm:$0xe0] %v1271
    %v1308 = vld [vmem:[%s0] sm:$0x77]
    %v1309 = vld [vmem:[%s0 + $0x8] sm:$0x77]
    %v1310 = vld [vmem:[%s0 + $0x10] sm:$0x77]
    %v1311 = vld [vmem:[%s0 + $0x18] sm:$0x77]
    %v1312 = vld [vmem:[%s0 + $0x20] sm:$0x77]
    %v1313 = vld [vmem:[%s0 + $0x28] sm:$0x77]
    %v1314 = vld [vmem:[%s0 + $0x30] sm:$0x77]
    %v1315 = vld [vmem:[%s0 + $0x38] sm:$0x77]
    %v1316 = vld [vmem:[%s0 + $0x40] sm:$0x77]
    %v1317 = vld [vmem:[%s0 + $0x48] sm:$0x7]
    %1328 = vst [vmem:[#allocation1] ss:$2 sm:$0xff] %v1308
    %s1329 = scalar_lea.vmem [#allocation1], 16
    %1330 = vst [vmem:[%s1329] ss:$2 sm:$0xff] %v1309
    %s1331 = scalar_lea.vmem [#allocation1], 32
    %1332 = vst [vmem:[%s1331] ss:$2 sm:$0xff] %v1310
    %s1333 = scalar_lea.vmem [#allocation1], 48
    %1334 = vst [vmem:[%s1333] ss:$2 sm:$0xff] %v1311
    %v1335 = vld.sshfl [vmem:[#allocation1] sm:$0xff pattern:$0x75316420]
    %v1336 = vld.sshfl [vmem:[#allocation1 + $0x8] sm:$0xff pattern:$0x75316420]
    %v1337 = vld.sshfl [vmem:[#allocation1 + $0x10] sm:$0xff pattern:$0x75316420]
    %v1338 = vld.sshfl [vmem:[#allocation1 + $0x18] sm:$0xff pattern:$0x75316420]
    %v1339 = vld.sshfl [vmem:[#allocation1 + $0x20] sm:$0xff pattern:$0x75316420]
    %v1340 = vld.sshfl [vmem:[#allocation1 + $0x28] sm:$0xff pattern:$0x75316420]
    %v1341 = vld.sshfl [vmem:[#allocation1 + $0x30] sm:$0xff pattern:$0x75316420]
    %v1342 = vld.sshfl [vmem:[#allocation1 + $0x38] sm:$0xff pattern:$0x75316420]
    %1343 = vst [vmem:[#allocation1] ss:$2 sm:$0xff] %v1312
    %1344 = vst [vmem:[%s1329] ss:$2 sm:$0xff] %v1313
    %1345 = vst [vmem:[%s1331] ss:$2 sm:$0xff] %v1314
    %1346 = vst [vmem:[%s1333] ss:$2 sm:$0xff] %v1315
    %v1347 = vld.sshfl [vmem:[#allocation1] sm:$0xff pattern:$0x75316420]
    %v1348 = vld.sshfl [vmem:[#allocation1 + $0x8] sm:$0xff pattern:$0x75316420]
    %v1349 = vld.sshfl [vmem:[#allocation1 + $0x10] sm:$0xff pattern:$0x75316420]
    %v1350 = vld.sshfl [vmem:[#allocation1 + $0x18] sm:$0xff pattern:$0x75316420]
    %v1351 = vld.sshfl [vmem:[#allocation1 + $0x20] sm:$0xff pattern:$0x75316420]
    %v1352 = vld.sshfl [vmem:[#allocation1 + $0x28] sm:$0xff pattern:$0x75316420]
    %v1353 = vld.sshfl [vmem:[#allocation1 + $0x30] sm:$0xff pattern:$0x75316420]
    %v1354 = vld.sshfl [vmem:[#allocation1 + $0x38] sm:$0xff pattern:$0x75316420]
    %1355 = vst [vmem:[#allocation1] ss:$2 sm:$0xff] %v1316
    %1356 = vst [vmem:[%s1329] ss:$2 sm:$0xff] %v1317
    %v1357 = vld.sshfl [vmem:[#allocation1] sm:$0xff pattern:$0x75316420]
    %v1358 = vld.sshfl [vmem:[#allocation1 + $0x8] sm:$0xff pattern:$0x75316420]
    %v1359 = vld.sshfl [vmem:[#allocation1 + $0x10] sm:$0xff pattern:$0x75316420]
    %1360 = vrot.lane.b32.xlu0 %v1335, 62
    %v1361 = vpop.permute.xlu0 %1360
    %1362 = vrot.lane.b32.xlu0 %v1336, 62
    %v1363 = vpop.permute.xlu0 %1362
    %1364 = vrot.lane.b32.xlu0 %v1337, 62
    %v1365 = vpop.permute.xlu0 %1364
    %1366 = vrot.lane.b32.xlu0 %v1338, 62
    %v1367 = vpop.permute.xlu0 %1366
    %1368 = vrot.lane.b32.xlu0 %v1339, 62
    %v1369 = vpop.permute.xlu0 %1368
    %1370 = vrot.lane.b32.xlu0 %v1340, 62
    %v1371 = vpop.permute.xlu0 %1370
    %1372 = vrot.lane.b32.xlu0 %v1341, 62
    %v1373 = vpop.permute.xlu0 %1372
    %1374 = vrot.lane.b32.xlu0 %v1342, 62
    %v1375 = vpop.permute.xlu0 %1374
    %1376 = vrot.lane.b32.xlu0 %v1347, 62
    %v1377 = vpop.permute.xlu0 %1376
    %1378 = vrot.lane.b32.xlu0 %v1348, 62
    %v1379 = vpop.permute.xlu0 %1378
    %1380 = vrot.lane.b32.xlu0 %v1349, 62
    %v1381 = vpop.permute.xlu0 %1380
    %1382 = vrot.lane.b32.xlu0 %v1350, 62
    %v1383 = vpop.permute.xlu0 %1382
    %1384 = vrot.lane.b32.xlu0 %v1351, 62
    %v1385 = vpop.permute.xlu0 %1384
    %1386 = vrot.lane.b32.xlu0 %v1352, 62
    %v1387 = vpop.permute.xlu0 %1386
    %1388 = vrot.lane.b32.xlu0 %v1353, 62
    %v1389 = vpop.permute.xlu0 %1388
    %1390 = vrot.lane.b32.xlu0 %v1354, 62
    %v1391 = vpop.permute.xlu0 %1390
    %1392 = vrot.lane.b32.xlu0 %v1357, 62
    %v1393 = vpop.permute.xlu0 %1392
    %1394 = vrot.lane.b32.xlu0 %v1358, 62
    %v1395 = vpop.permute.xlu0 %1394
    %1396 = vrot.lane.b32.xlu0 %v1359, 62
    %v1397 = vpop.permute.xlu0 %1396
    %vm1398 = vcmask 506880
    %v1399 = vsel %vm1398, %v1361, %v1363
    %v1400 = vsel %vm1398, %v1363, %v1365
    %v1401 = vsel %vm1398, %v1365, %v1367
    %v1402 = vsel %vm1398, %v1367, %v1369
    %v1403 = vsel %vm1398, %v1369, %v1371
    %v1404 = vsel %vm1398, %v1371, %v1373
    %v1405 = vsel %vm1398, %v1373, %v1375
    %v1406 = vsel %vm1398, %v1375, %v1377
    %v1407 = vsel %vm1398, %v1377, %v1379
    %v1408 = vsel %vm1398, %v1379, %v1381
    %v1409 = vsel %vm1398, %v1381, %v1383
    %v1410 = vsel %vm1398, %v1383, %v1385
    %v1411 = vsel %vm1398, %v1385, %v1387
    %v1412 = vsel %vm1398, %v1387, %v1389
    %v1413 = vsel %vm1398, %v1389, %v1391
    %v1414 = vsel %vm1398, %v1391, %v1393
    %v1415 = vsel %vm1398, %v1393, %v1395
    %v1416 = vsel %vm1398, %v1395, %v1397
    %1435 = vst [vmem:[#allocation2 + $0x1b0] sm:$0x7] %v1399
    %1436 = vst [vmem:[#allocation2 + $0x1b8] sm:$0x7] %v1400
    %1437 = vst [vmem:[#allocation2 + $0x1c0] sm:$0x7] %v1401
    %1438 = vst [vmem:[#allocation2 + $0x1c8] sm:$0x7] %v1402
    %1439 = vst [vmem:[#allocation2 + $0x1d0] sm:$0x7] %v1403
    %1440 = vst [vmem:[#allocation2 + $0x1d8] sm:$0x7] %v1404
    %1441 = vst [vmem:[#allocation2 + $0x1e0] sm:$0x7] %v1405
    %1442 = vst [vmem:[#allocation2 + $0x1e8] sm:$0x7] %v1406
    %1443 = vst [vmem:[#allocation2 + $0x1f0] sm:$0x7] %v1407
    %1444 = vst [vmem:[#allocation2 + $0x1f8] sm:$0x7] %v1408
    %1445 = vst [vmem:[#allocation2 + $0x200] sm:$0x7] %v1409
    %1446 = vst [vmem:[#allocation2 + $0x208] sm:$0x7] %v1410
    %1447 = vst [vmem:[#allocation2 + $0x210] sm:$0x7] %v1411
    %1448 = vst [vmem:[#allocation2 + $0x218] sm:$0x7] %v1412
    %1449 = vst [vmem:[#allocation2 + $0x220] sm:$0x7] %v1413
    %1450 = vst [vmem:[#allocation2 + $0x228] sm:$0x7] %v1414
    %1451 = vst [vmem:[#allocation2 + $0x230] sm:$0x7] %v1415
    %1452 = vst [vmem:[#allocation2 + $0x238] sm:$0x7] %v1416
    %v1453 = vld [vmem:[%s1] sm:$0xff]
    %v1454 = vld [vmem:[#allocation2] sm:$0xff]
    %v1455 = vld [vmem:[#allocation2 + $0x8] sm:$0xff]
    %v1456 = vld [vmem:[#allocation2 + $0x10] sm:$0xff]
    %v1457 = vld [vmem:[#allocation2 + $0x18] sm:$0xff]
    %v1458 = vld [vmem:[#allocation2 + $0x20] sm:$0xff]
    %v1459 = vld [vmem:[#allocation2 + $0x28] sm:$0xff]
    %v1460 = vld [vmem:[#allocation2 + $0x30] sm:$0xff]
    %v1461 = vld [vmem:[#allocation2 + $0x38] sm:$0xff]
    %v1462 = vld [vmem:[#allocation2 + $0x40] sm:$0xff]
    %v1463 = vld [vmem:[#allocation2 + $0x48] sm:$0xff]
    %v1464 = vld [vmem:[#allocation2 + $0x50] sm:$0xff]
    %v1465 = vld [vmem:[#allocation2 + $0x58] sm:$0xff]
    %v1466 = vld [vmem:[#allocation2 + $0x60] sm:$0xff]
    %v1467 = vld [vmem:[#allocation2 + $0x68] sm:$0xff]
    %v1468 = vld [vmem:[#allocation2 + $0x70] sm:$0xff]
    %v1469 = vld [vmem:[#allocation2 + $0x78] sm:$0xff]
    %v1470 = vld [vmem:[#allocation2 + $0x80] sm:$0xff]
    %v1471 = vld [vmem:[#allocation2 + $0x88] sm:$0xff]
    %v1472 = vld [vmem:[#allocation2 + $0x90] sm:$0xff]
    %v1473 = vld [vmem:[#allocation2 + $0x98] sm:$0xff]
    %v1474 = vld [vmem:[#allocation2 + $0xa0] sm:$0xff]
    %v1475 = vld [vmem:[#allocation2 + $0xa8] sm:$0xff]
    %v1476 = vld [vmem:[#allocation2 + $0xb0] sm:$0xff]
    %v1477 = vld [vmem:[#allocation2 + $0xb8] sm:$0xff]
    %v1478 = vld [vmem:[#allocation2 + $0xc0] sm:$0xff]
    %v1479 = vld [vmem:[#allocation2 + $0xc8] sm:$0xff]
    %v1480 = vld [vmem:[#allocation2 + $0xd0] sm:$0xff]
    %v1481 = vld [vmem:[#allocation2 + $0xd8] sm:$0xff]
    %v1482 = vld [vmem:[#allocation2 + $0xe0] sm:$0xff]
    %v1483 = vld [vmem:[#allocation2 + $0xe8] sm:$0xff]
    %v1484 = vld [vmem:[#allocation2 + $0xf0] sm:$0xff]
    %v1485 = vld [vmem:[#allocation2 + $0xf8] sm:$0xff]
    %v1486 = vld [vmem:[#allocation2 + $0x100] sm:$0xff]
    %v1487 = vld [vmem:[#allocation2 + $0x108] sm:$0xff]
    %v1488 = vld [vmem:[#allocation2 + $0x110] sm:$0xff]
    %v1489 = vld [vmem:[#allocation2 + $0x118] sm:$0xff]
    %v1490 = vld [vmem:[#allocation2 + $0x120] sm:$0xff]
    %v1491 = vld [vmem:[#allocation2 + $0x128] sm:$0xff]
    %v1492 = vld [vmem:[#allocation2 + $0x130] sm:$0xff]
    %v1493 = vld [vmem:[#allocation2 + $0x138] sm:$0xff]
    %v1494 = vld [vmem:[#allocation2 + $0x140] sm:$0xff]
    %v1495 = vld [vmem:[#allocation2 + $0x148] sm:$0xff]
    %v1496 = vld [vmem:[#allocation2 + $0x150] sm:$0xff]
    %v1497 = vld [vmem:[#allocation2 + $0x158] sm:$0xff]
    %v1498 = vld [vmem:[#allocation2 + $0x160] sm:$0xff]
    %v1499 = vld [vmem:[#allocation2 + $0x168] sm:$0xff]
    %v1500 = vld [vmem:[#allocation2 + $0x170] sm:$0xff]
    %v1501 = vld [vmem:[#allocation2 + $0x178] sm:$0xff]
    %v1502 = vld [vmem:[#allocation2 + $0x180] sm:$0xff]
    %v1503 = vld [vmem:[#allocation2 + $0x188] sm:$0xff]
    %v1504 = vld [vmem:[#allocation2 + $0x190] sm:$0xff]
    %v1505 = vld [vmem:[#allocation2 + $0x198] sm:$0xff]
    %v1506 = vld [vmem:[#allocation2 + $0x1a0] sm:$0xff]
    %v1507 = vld [vmem:[#allocation2 + $0x1a8] sm:$0xff]
    %v1508 = vld [vmem:[#allocation2 + $0x1b0] sm:$0x7]
    %v1509 = vld [vmem:[#allocation2 + $0x1b8] sm:$0x7]
    %v1510 = vld [vmem:[#allocation2 + $0x1c0] sm:$0x7]
    %v1511 = vld [vmem:[#allocation2 + $0x1c8] sm:$0x7]
    %v1512 = vld [vmem:[#allocation2 + $0x1d0] sm:$0x7]
    %v1513 = vld [vmem:[#allocation2 + $0x1d8] sm:$0x7]
    %v1514 = vld [vmem:[#allocation2 + $0x1e0] sm:$0x7]
    %v1515 = vld [vmem:[#allocation2 + $0x1e8] sm:$0x7]
    %v1516 = vld [vmem:[#allocation2 + $0x1f0] sm:$0x7]
    %v1517 = vld [vmem:[#allocation2 + $0x1f8] sm:$0x7]
    %v1518 = vld [vmem:[#allocation2 + $0x200] sm:$0x7]
    %v1519 = vld [vmem:[#allocation2 + $0x208] sm:$0x7]
    %v1520 = vld [vmem:[#allocation2 + $0x210] sm:$0x7]
    %v1521 = vld [vmem:[#allocation2 + $0x218] sm:$0x7]
    %v1522 = vld [vmem:[#allocation2 + $0x220] sm:$0x7]
    %v1523 = vld [vmem:[#allocation2 + $0x228] sm:$0x7]
    %v1524 = vld [vmem:[#allocation2 + $0x230] sm:$0x7]
    %v1525 = vld [vmem:[#allocation2 + $0x238] sm:$0x7]
    %v1526 = vld [vmem:[%s2] sm:$0xff]
    %1528 = vset.pattern.permute.xlu0 0
    %1529 = vperm.xlu0 %1528, %v1526
    %v1530 = vpop.permute.xlu0 %1529
    %vm1532 = vcmask 220160
    %v1534 = vsel %vm1532, %v1453, 0
    %vm1536 = vcmask 1042432
    %v1538 = vsel %vm1536, %v1508, 0
    %v1541 = vsel %vm1536, %v1509, 0
    %v1544 = vsel %vm1536, %v1510, 0
    %v1547 = vsel %vm1536, %v1511, 0
    %v1550 = vsel %vm1536, %v1512, 0
    %v1553 = vsel %vm1536, %v1513, 0
    %v1556 = vsel %vm1536, %v1514, 0
    %v1559 = vsel %vm1536, %v1515, 0
    %v1562 = vsel %vm1536, %v1516, 0
    %v1565 = vsel %vm1536, %v1517, 0
    %v1568 = vsel %vm1536, %v1518, 0
    %v1571 = vsel %vm1536, %v1519, 0
    %v1574 = vsel %vm1536, %v1520, 0
    %v1577 = vsel %vm1536, %v1521, 0
    %v1580 = vsel %vm1536, %v1522, 0
    %v1583 = vsel %vm1536, %v1523, 0
    %v1586 = vsel %vm1536, %v1524, 0
    %v1589 = vsel %vm1536, %v1525, 0
    %1591 = vmatpush.msra.mxu0 0.0
    %1592 = vmatpush.msra.mxu0 0.0
    %1593 = vmatpush.msra.mxu0 0.0
    %1594 = vmatpush.msra.mxu0 0.0
    %1595 = vmatpush.msra.mxu0 0.0
    %1596 = vmatpush.msra.mxu0 0.0
    %1597 = vmatpush.msra.mxu0 0.0
    %1598 = vmatpush.msra.mxu0 0.0
    %1599 = vmatpush.msra.mxu0 0.0
    %1600 = vmatpush.msra.mxu0 0.0
    %1601 = vmatpush.msra.mxu0 0.0
    %1602 = vmatpush.msra.mxu0 0.0
    %1603 = vmatpush.msra.mxu0 %v1538
    %1604 = vmatpush.msra.mxu0 %v1490
    %1605 = vmatpush.msra.mxu0 %v1472
    %1606 = vmatpush.msra.mxu0 %v1454
    %1607 = vmatmul.f32.gmra.mxu0 %v1534
    %v1608 = vpop.f32.mrf.mxu0
    %v1609 = vadd.f32 %v1530, %v1608
    %1610 = vdwg.mxu0
    %1611 = vmatpush.msra.mxu0 0.0
    %1612 = vmatpush.msra.mxu0 0.0
    %1613 = vmatpush.msra.mxu0 0.0
    %1614 = vmatpush.msra.mxu0 0.0
    %1615 = vmatpush.msra.mxu0 0.0
    %1616 = vmatpush.msra.mxu0 0.0
    %1617 = vmatpush.msra.mxu0 0.0
    %1618 = vmatpush.msra.mxu0 0.0
    %1619 = vmatpush.msra.mxu0 0.0
    %1620 = vmatpush.msra.mxu0 0.0
    %1621 = vmatpush.msra.mxu0 0.0
    %1622 = vmatpush.msra.mxu0 0.0
    %1623 = vmatpush.msra.mxu0 %v1541
    %1624 = vmatpush.msra.mxu0 %v1491
    %1625 = vmatpush.msra.mxu0 %v1473
    %1626 = vmatpush.msra.mxu0 %v1455
    %1627 = vmatmul.f32.gmra.mxu0 %v1534
    %v1628 = vpop.f32.mrf.mxu0
    %v1629 = vadd.f32 %v1530, %v1628
    %1630 = vdwg.mxu0
    %1631 = vmatpush.msra.mxu0 0.0
    %1632 = vmatpush.msra.mxu0 0.0
    %1633 = vmatpush.msra.mxu0 0.0
    %1634 = vmatpush.msra.mxu0 0.0
    %1635 = vmatpush.msra.mxu0 0.0
    %1636 = vmatpush.msra.mxu0 0.0
    %1637 = vmatpush.msra.mxu0 0.0
    %1638 = vmatpush.msra.mxu0 0.0
    %1639 = vmatpush.msra.mxu0 0.0
    %1640 = vmatpush.msra.mxu0 0.0
    %1641 = vmatpush.msra.mxu0 0.0
    %1642 = vmatpush.msra.mxu0 0.0
    %1643 = vmatpush.msra.mxu0 %v1544
    %1644 = vmatpush.msra.mxu0 %v1492
    %1645 = vmatpush.msra.mxu0 %v1474
    %1646 = vmatpush.msra.mxu0 %v1456
    %1647 = vmatmul.f32.gmra.mxu0 %v1534
    %v1648 = vpop.f32.mrf.mxu0
    %v1649 = vadd.f32 %v1530, %v1648
    %1650 = vdwg.mxu0
    %1651 = vmatpush.msra.mxu0 0.0
    %1652 = vmatpush.msra.mxu0 0.0
    %1653 = vmatpush.msra.mxu0 0.0
    %1654 = vmatpush.msra.mxu0 0.0
    %1655 = vmatpush.msra.mxu0 0.0
    %1656 = vmatpush.msra.mxu0 0.0
    %1657 = vmatpush.msra.mxu0 0.0
    %1658 = vmatpush.msra.mxu0 0.0
    %1659 = vmatpush.msra.mxu0 0.0
    %1660 = vmatpush.msra.mxu0 0.0
    %1661 = vmatpush.msra.mxu0 0.0
    %1662 = vmatpush.msra.mxu0 0.0
    %1663 = vmatpush.msra.mxu0 %v1547
    %1664 = vmatpush.msra.mxu0 %v1493
    %1665 = vmatpush.msra.mxu0 %v1475
    %1666 = vmatpush.msra.mxu0 %v1457
    %1667 = vmatmul.f32.gmra.mxu0 %v1534
    %v1668 = vpop.f32.mrf.mxu0
    %v1669 = vadd.f32 %v1530, %v1668
    %1670 = vdwg.mxu0
    %1671 = vmatpush.msra.mxu0 0.0
    %1672 = vmatpush.msra.mxu0 0.0
    %1673 = vmatpush.msra.mxu0 0.0
    %1674 = vmatpush.msra.mxu0 0.0
    %1675 = vmatpush.msra.mxu0 0.0
    %1676 = vmatpush.msra.mxu0 0.0
    %1677 = vmatpush.msra.mxu0 0.0
    %1678 = vmatpush.msra.mxu0 0.0
    %1679 = vmatpush.msra.mxu0 0.0
    %1680 = vmatpush.msra.mxu0 0.0
    %1681 = vmatpush.msra.mxu0 0.0
    %1682 = vmatpush.msra.mxu0 0.0
    %1683 = vmatpush.msra.mxu0 %v1550
    %1684 = vmatpush.msra.mxu0 %v1494
    %1685 = vmatpush.msra.mxu0 %v1476
    %1686 = vmatpush.msra.mxu0 %v1458
    %1687 = vmatmul.f32.gmra.mxu0 %v1534
    %v1688 = vpop.f32.mrf.mxu0
    %v1689 = vadd.f32 %v1530, %v1688
    %1690 = vdwg.mxu0
    %1691 = vmatpush.msra.mxu0 0.0
    %1692 = vmatpush.msra.mxu0 0.0
    %1693 = vmatpush.msra.mxu0 0.0
    %1694 = vmatpush.msra.mxu0 0.0
    %1695 = vmatpush.msra.mxu0 0.0
    %1696 = vmatpush.msra.mxu0 0.0
    %1697 = vmatpush.msra.mxu0 0.0
    %1698 = vmatpush.msra.mxu0 0.0
    %1699 = vmatpush.msra.mxu0 0.0
    %1700 = vmatpush.msra.mxu0 0.0
    %1701 = vmatpush.msra.mxu0 0.0
    %1702 = vmatpush.msra.mxu0 0.0
    %1703 = vmatpush.msra.mxu0 %v1553
    %1704 = vmatpush.msra.mxu0 %v1495
    %1705 = vmatpush.msra.mxu0 %v1477
    %1706 = vmatpush.msra.mxu0 %v1459
    %1707 = vmatmul.f32.gmra.mxu0 %v1534
    %v1708 = vpop.f32.mrf.mxu0
    %v1709 = vadd.f32 %v1530, %v1708
    %1710 = vdwg.mxu0
    %1711 = vmatpush.msra.mxu0 0.0
    %1712 = vmatpush.msra.mxu0 0.0
    %1713 = vmatpush.msra.mxu0 0.0
    %1714 = vmatpush.msra.mxu0 0.0
    %1715 = vmatpush.msra.mxu0 0.0
    %1716 = vmatpush.msra.mxu0 0.0
    %1717 = vmatpush.msra.mxu0 0.0
    %1718 = vmatpush.msra.mxu0 0.0
    %1719 = vmatpush.msra.mxu0 0.0
    %1720 = vmatpush.msra.mxu0 0.0
    %1721 = vmatpush.msra.mxu0 0.0
    %1722 = vmatpush.msra.mxu0 0.0
    %1723 = vmatpush.msra.mxu0 %v1556
    %1724 = vmatpush.msra.mxu0 %v1496
    %1725 = vmatpush.msra.mxu0 %v1478
    %1726 = vmatpush.msra.mxu0 %v1460
    %1727 = vmatmul.f32.gmra.mxu0 %v1534
    %v1728 = vpop.f32.mrf.mxu0
    %v1729 = vadd.f32 %v1530, %v1728
    %1730 = vdwg.mxu0
    %1731 = vmatpush.msra.mxu0 0.0
    %1732 = vmatpush.msra.mxu0 0.0
    %1733 = vmatpush.msra.mxu0 0.0
    %1734 = vmatpush.msra.mxu0 0.0
    %1735 = vmatpush.msra.mxu0 0.0
    %1736 = vmatpush.msra.mxu0 0.0
    %1737 = vmatpush.msra.mxu0 0.0
    %1738 = vmatpush.msra.mxu0 0.0
    %1739 = vmatpush.msra.mxu0 0.0
    %1740 = vmatpush.msra.mxu0 0.0
    %1741 = vmatpush.msra.mxu0 0.0
    %1742 = vmatpush.msra.mxu0 0.0
    %1743 = vmatpush.msra.mxu0 %v1559
    %1744 = vmatpush.msra.mxu0 %v1497
    %1745 = vmatpush.msra.mxu0 %v1479
    %1746 = vmatpush.msra.mxu0 %v1461
    %1747 = vmatmul.f32.gmra.mxu0 %v1534
    %v1748 = vpop.f32.mrf.mxu0
    %v1749 = vadd.f32 %v1530, %v1748
    %1750 = vdwg.mxu0
    %1751 = vmatpush.msra.mxu0 0.0
    %1752 = vmatpush.msra.mxu0 0.0
    %1753 = vmatpush.msra.mxu0 0.0
    %1754 = vmatpush.msra.mxu0 0.0
    %1755 = vmatpush.msra.mxu0 0.0
    %1756 = vmatpush.msra.mxu0 0.0
    %1757 = vmatpush.msra.mxu0 0.0
    %1758 = vmatpush.msra.mxu0 0.0
    %1759 = vmatpush.msra.mxu0 0.0
    %1760 = vmatpush.msra.mxu0 0.0
    %1761 = vmatpush.msra.mxu0 0.0
    %1762 = vmatpush.msra.mxu0 0.0
    %1763 = vmatpush.msra.mxu0 %v1562
    %1764 = vmatpush.msra.mxu0 %v1498
    %1765 = vmatpush.msra.mxu0 %v1480
    %1766 = vmatpush.msra.mxu0 %v1462
    %1767 = vmatmul.f32.gmra.mxu0 %v1534
    %v1768 = vpop.f32.mrf.mxu0
    %v1769 = vadd.f32 %v1530, %v1768
    %1770 = vdwg.mxu0
    %1771 = vmatpush.msra.mxu0 0.0
    %1772 = vmatpush.msra.mxu0 0.0
    %1773 = vmatpush.msra.mxu0 0.0
    %1774 = vmatpush.msra.mxu0 0.0
    %1775 = vmatpush.msra.mxu0 0.0
    %1776 = vmatpush.msra.mxu0 0.0
    %1777 = vmatpush.msra.mxu0 0.0
    %1778 = vmatpush.msra.mxu0 0.0
    %1779 = vmatpush.msra.mxu0 0.0
    %1780 = vmatpush.msra.mxu0 0.0
    %1781 = vmatpush.msra.mxu0 0.0
    %1782 = vmatpush.msra.mxu0 0.0
    %1783 = vmatpush.msra.mxu0 %v1565
    %1784 = vmatpush.msra.mxu0 %v1499
    %1785 = vmatpush.msra.mxu0 %v1481
    %1786 = vmatpush.msra.mxu0 %v1463
    %1787 = vmatmul.f32.gmra.mxu0 %v1534
    %v1788 = vpop.f32.mrf.mxu0
    %v1789 = vadd.f32 %v1530, %v1788
    %1790 = vdwg.mxu0
    %1791 = vmatpush.msra.mxu0 0.0
    %1792 = vmatpush.msra.mxu0 0.0
    %1793 = vmatpush.msra.mxu0 0.0
    %1794 = vmatpush.msra.mxu0 0.0
    %1795 = vmatpush.msra.mxu0 0.0
    %1796 = vmatpush.msra.mxu0 0.0
    %1797 = vmatpush.msra.mxu0 0.0
    %1798 = vmatpush.msra.mxu0 0.0
    %1799 = vmatpush.msra.mxu0 0.0
    %1800 = vmatpush.msra.mxu0 0.0
    %1801 = vmatpush.msra.mxu0 0.0
    %1802 = vmatpush.msra.mxu0 0.0
    %1803 = vmatpush.msra.mxu0 %v1568
    %1804 = vmatpush.msra.mxu0 %v1500
    %1805 = vmatpush.msra.mxu0 %v1482
    %1806 = vmatpush.msra.mxu0 %v1464
    %1807 = vmatmul.f32.gmra.mxu0 %v1534
    %v1808 = vpop.f32.mrf.mxu0
    %v1809 = vadd.f32 %v1530, %v1808
    %1810 = vdwg.mxu0
    %1811 = vmatpush.msra.mxu0 0.0
    %1812 = vmatpush.msra.mxu0 0.0
    %1813 = vmatpush.msra.mxu0 0.0
    %1814 = vmatpush.msra.mxu0 0.0
    %1815 = vmatpush.msra.mxu0 0.0
    %1816 = vmatpush.msra.mxu0 0.0
    %1817 = vmatpush.msra.mxu0 0.0
    %1818 = vmatpush.msra.mxu0 0.0
    %1819 = vmatpush.msra.mxu0 0.0
    %1820 = vmatpush.msra.mxu0 0.0
    %1821 = vmatpush.msra.mxu0 0.0
    %1822 = vmatpush.msra.mxu0 0.0
    %1823 = vmatpush.msra.mxu0 %v1571
    %1824 = vmatpush.msra.mxu0 %v1501
    %1825 = vmatpush.msra.mxu0 %v1483
    %1826 = vmatpush.msra.mxu0 %v1465
    %1827 = vmatmul.f32.gmra.mxu0 %v1534
    %v1828 = vpop.f32.mrf.mxu0
    %v1829 = vadd.f32 %v1530, %v1828
    %1830 = vdwg.mxu0
    %1831 = vmatpush.msra.mxu0 0.0
    %1832 = vmatpush.msra.mxu0 0.0
    %1833 = vmatpush.msra.mxu0 0.0
    %1834 = vmatpush.msra.mxu0 0.0
    %1835 = vmatpush.msra.mxu0 0.0
    %1836 = vmatpush.msra.mxu0 0.0
    %1837 = vmatpush.msra.mxu0 0.0
    %1838 = vmatpush.msra.mxu0 0.0
    %1839 = vmatpush.msra.mxu0 0.0
    %1840 = vmatpush.msra.mxu0 0.0
    %1841 = vmatpush.msra.mxu0 0.0
    %1842 = vmatpush.msra.mxu0 0.0
    %1843 = vmatpush.msra.mxu0 %v1574
    %1844 = vmatpush.msra.mxu0 %v1502
    %1845 = vmatpush.msra.mxu0 %v1484
    %1846 = vmatpush.msra.mxu0 %v1466
    %1847 = vmatmul.f32.gmra.mxu0 %v1534
    %v1848 = vpop.f32.mrf.mxu0
    %v1849 = vadd.f32 %v1530, %v1848
    %1850 = vdwg.mxu0
    %1851 = vmatpush.msra.mxu0 0.0
    %1852 = vmatpush.msra.mxu0 0.0
    %1853 = vmatpush.msra.mxu0 0.0
    %1854 = vmatpush.msra.mxu0 0.0
    %1855 = vmatpush.msra.mxu0 0.0
    %1856 = vmatpush.msra.mxu0 0.0
    %1857 = vmatpush.msra.mxu0 0.0
    %1858 = vmatpush.msra.mxu0 0.0
    %1859 = vmatpush.msra.mxu0 0.0
    %1860 = vmatpush.msra.mxu0 0.0
    %1861 = vmatpush.msra.mxu0 0.0
    %1862 = vmatpush.msra.mxu0 0.0
    %1863 = vmatpush.msra.mxu0 %v1577
    %1864 = vmatpush.msra.mxu0 %v1503
    %1865 = vmatpush.msra.mxu0 %v1485
    %1866 = vmatpush.msra.mxu0 %v1467
    %1867 = vmatmul.f32.gmra.mxu0 %v1534
    %v1868 = vpop.f32.mrf.mxu0
    %v1869 = vadd.f32 %v1530, %v1868
    %1870 = vdwg.mxu0
    %1871 = vmatpush.msra.mxu0 0.0
    %1872 = vmatpush.msra.mxu0 0.0
    %1873 = vmatpush.msra.mxu0 0.0
    %1874 = vmatpush.msra.mxu0 0.0
    %1875 = vmatpush.msra.mxu0 0.0
    %1876 = vmatpush.msra.mxu0 0.0
    %1877 = vmatpush.msra.mxu0 0.0
    %1878 = vmatpush.msra.mxu0 0.0
    %1879 = vmatpush.msra.mxu0 0.0
    %1880 = vmatpush.msra.mxu0 0.0
    %1881 = vmatpush.msra.mxu0 0.0
    %1882 = vmatpush.msra.mxu0 0.0
    %1883 = vmatpush.msra.mxu0 %v1580
    %1884 = vmatpush.msra.mxu0 %v1504
    %1885 = vmatpush.msra.mxu0 %v1486
    %1886 = vmatpush.msra.mxu0 %v1468
    %1887 = vmatmul.f32.gmra.mxu0 %v1534
    %v1888 = vpop.f32.mrf.mxu0
    %v1889 = vadd.f32 %v1530, %v1888
    %1890 = vdwg.mxu0
    %1891 = vmatpush.msra.mxu0 0.0
    %1892 = vmatpush.msra.mxu0 0.0
    %1893 = vmatpush.msra.mxu0 0.0
    %1894 = vmatpush.msra.mxu0 0.0
    %1895 = vmatpush.msra.mxu0 0.0
    %1896 = vmatpush.msra.mxu0 0.0
    %1897 = vmatpush.msra.mxu0 0.0
    %1898 = vmatpush.msra.mxu0 0.0
    %1899 = vmatpush.msra.mxu0 0.0
    %1900 = vmatpush.msra.mxu0 0.0
    %1901 = vmatpush.msra.mxu0 0.0
    %1902 = vmatpush.msra.mxu0 0.0
    %1903 = vmatpush.msra.mxu0 %v1583
    %1904 = vmatpush.msra.mxu0 %v1505
    %1905 = vmatpush.msra.mxu0 %v1487
    %1906 = vmatpush.msra.mxu0 %v1469
    %1907 = vmatmul.f32.gmra.mxu0 %v1534
    %v1908 = vpop.f32.mrf.mxu0
    %v1909 = vadd.f32 %v1530, %v1908
    %1910 = vdwg.mxu0
    %1911 = vmatpush.msra.mxu0 0.0
    %1912 = vmatpush.msra.mxu0 0.0
    %1913 = vmatpush.msra.mxu0 0.0
    %1914 = vmatpush.msra.mxu0 0.0
    %1915 = vmatpush.msra.mxu0 0.0
    %1916 = vmatpush.msra.mxu0 0.0
    %1917 = vmatpush.msra.mxu0 0.0
    %1918 = vmatpush.msra.mxu0 0.0
    %1919 = vmatpush.msra.mxu0 0.0
    %1920 = vmatpush.msra.mxu0 0.0
    %1921 = vmatpush.msra.mxu0 0.0
    %1922 = vmatpush.msra.mxu0 0.0
    %1923 = vmatpush.msra.mxu0 %v1586
    %1924 = vmatpush.msra.mxu0 %v1506
    %1925 = vmatpush.msra.mxu0 %v1488
    %1926 = vmatpush.msra.mxu0 %v1470
    %1927 = vmatmul.f32.gmra.mxu0 %v1534
    %v1928 = vpop.f32.mrf.mxu0
    %v1929 = vadd.f32 %v1530, %v1928
    %1930 = vdwg.mxu0
    %1931 = vmatpush.msra.mxu0 0.0
    %1932 = vmatpush.msra.mxu0 0.0
    %1933 = vmatpush.msra.mxu0 0.0
    %1934 = vmatpush.msra.mxu0 0.0
    %1935 = vmatpush.msra.mxu0 0.0
    %1936 = vmatpush.msra.mxu0 0.0
    %1937 = vmatpush.msra.mxu0 0.0
    %1938 = vmatpush.msra.mxu0 0.0
    %1939 = vmatpush.msra.mxu0 0.0
    %1940 = vmatpush.msra.mxu0 0.0
    %1941 = vmatpush.msra.mxu0 0.0
    %1942 = vmatpush.msra.mxu0 0.0
    %1943 = vmatpush.msra.mxu0 %v1589
    %1944 = vmatpush.msra.mxu0 %v1507
    %1945 = vmatpush.msra.mxu0 %v1489
    %1946 = vmatpush.msra.mxu0 %v1471
    %1947 = vmatmul.f32.gmra.mxu0 %v1534
    %v1948 = vpop.f32.mrf.mxu0
    %v1949 = vadd.f32 %v1530, %v1948
    %1950 = vdwg.mxu0
    %v1951 = vmax.f32 %v1609, 0.0
    %v1952 = vmax.f32 %v1629, 0.0
    %v1953 = vmax.f32 %v1649, 0.0
    %v1954 = vmax.f32 %v1669, 0.0
    %v1955 = vmax.f32 %v1689, 0.0
    %v1956 = vmax.f32 %v1709, 0.0
    %v1957 = vmax.f32 %v1729, 0.0
    %v1958 = vmax.f32 %v1749, 0.0
    %v1959 = vmax.f32 %v1769, 0.0
    %v1960 = vmax.f32 %v1789, 0.0
    %v1961 = vmax.f32 %v1809, 0.0
    %v1962 = vmax.f32 %v1829, 0.0
    %v1963 = vmax.f32 %v1849, 0.0
    %v1964 = vmax.f32 %v1869, 0.0
    %v1965 = vmax.f32 %v1889, 0.0
    %v1966 = vmax.f32 %v1909, 0.0
    %v1967 = vmax.f32 %v1929, 0.0
    %v1968 = vmax.f32 %v1949, 0.0
    %1969 = vst [vmem:[#allocation3] sm:$0xff] %v1951
    %1970 = vst [vmem:[#allocation3 + $0x8] sm:$0xff] %v1952
    %1971 = vst [vmem:[#allocation3 + $0x10] sm:$0xff] %v1953
    %1972 = vst [vmem:[#allocation3 + $0x18] sm:$0xff] %v1954
    %1973 = vst [vmem:[#allocation3 + $0x20] sm:$0xff] %v1955
    %1974 = vst [vmem:[#allocation3 + $0x28] sm:$0xff] %v1956
    %1975 = vst [vmem:[#allocation3 + $0x30] sm:$0xff] %v1957
    %1976 = vst [vmem:[#allocation3 + $0x38] sm:$0xff] %v1958
    %1977 = vst [vmem:[#allocation3 + $0x40] sm:$0xff] %v1959
    %1978 = vst [vmem:[#allocation3 + $0x48] sm:$0xff] %v1960
    %1979 = vst [vmem:[#allocation3 + $0x50] sm:$0xff] %v1961
    %1980 = vst [vmem:[#allocation3 + $0x58] sm:$0xff] %v1962
    %1981 = vst [vmem:[#allocation3 + $0x60] sm:$0xff] %v1963
    %1982 = vst [vmem:[#allocation3 + $0x68] sm:$0xff] %v1964
    %1983 = vst [vmem:[#allocation3 + $0x70] sm:$0xff] %v1965
    %1984 = vst [vmem:[#allocation3 + $0x78] sm:$0xff] %v1966
    %1985 = vst [vmem:[#allocation3 + $0x80] sm:$0xff] %v1967
    %1986 = vst [vmem:[#allocation3 + $0x88] sm:$0xff] %v1968
    %1987 = vst [vmem:[#allocation3 + $0x90] sm:$0xff] 0.0
    %1988 = vst [vmem:[#allocation3 + $0x98] sm:$0xff] 0.0
    %v1989 = vld [vmem:[#allocation3] sm:$0xff]
    %v1990 = vld [vmem:[#allocation3 + $0x8] sm:$0xff]
    %v1991 = vld [vmem:[#allocation3 + $0x10] sm:$0xff]
    %v1992 = vld [vmem:[#allocation3 + $0x18] sm:$0xff]
    %v1993 = vld [vmem:[#allocation3 + $0x20] sm:$0xff]
    %v1994 = vld [vmem:[#allocation3 + $0x28] sm:$0xff]
    %v1995 = vld [vmem:[#allocation3 + $0x30] sm:$0xff]
    %v1996 = vld [vmem:[#allocation3 + $0x38] sm:$0xff]
    %v1997 = vld [vmem:[#allocation3 + $0x40] sm:$0xff]
    %v1998 = vld [vmem:[#allocation3 + $0x48] sm:$0xff]
    %v1999 = vld [vmem:[#allocation3 + $0x50] sm:$0xff]
    %v2000 = vld [vmem:[#allocation3 + $0x58] sm:$0xff]
    %v2001 = vld [vmem:[#allocation3 + $0x60] sm:$0xff]
    %v2002 = vld [vmem:[#allocation3 + $0x68] sm:$0xff]
    %v2003 = vld [vmem:[#allocation3 + $0x70] sm:$0xff]
    %v2004 = vld [vmem:[#allocation3 + $0x78] sm:$0xff]
    %v2005 = vld [vmem:[#allocation3 + $0x80] sm:$0xff]
    %v2006 = vld [vmem:[#allocation3 + $0x88] sm:$0xff]
    %v2007 = vld [vmem:[#allocation3 + $0x90] sm:$0xff]
    %2027 = vrot.lane.b32.xlu0 %v1989, 127
    %v2028 = vpop.permute.xlu0 %2027
    %2029 = vrot.lane.b32.xlu0 %v1990, 127
    %v2030 = vpop.permute.xlu0 %2029
    %2031 = vrot.lane.b32.xlu0 %v1991, 127
    %v2032 = vpop.permute.xlu0 %2031
    %2033 = vrot.lane.b32.xlu0 %v1992, 127
    %v2034 = vpop.permute.xlu0 %2033
    %2035 = vrot.lane.b32.xlu0 %v1993, 127
    %v2036 = vpop.permute.xlu0 %2035
    %2037 = vrot.lane.b32.xlu0 %v1994, 127
    %v2038 = vpop.permute.xlu0 %2037
    %2039 = vrot.lane.b32.xlu0 %v1995, 127
    %v2040 = vpop.permute.xlu0 %2039
    %2041 = vrot.lane.b32.xlu0 %v1996, 127
    %v2042 = vpop.permute.xlu0 %2041
    %2043 = vrot.lane.b32.xlu0 %v1997, 127
    %v2044 = vpop.permute.xlu0 %2043
    %2045 = vrot.lane.b32.xlu0 %v1998, 127
    %v2046 = vpop.permute.xlu0 %2045
    %2047 = vrot.lane.b32.xlu0 %v1999, 127
    %v2048 = vpop.permute.xlu0 %2047
    %2049 = vrot.lane.b32.xlu0 %v2000, 127
    %v2050 = vpop.permute.xlu0 %2049
    %2051 = vrot.lane.b32.xlu0 %v2001, 127
    %v2052 = vpop.permute.xlu0 %2051
    %2053 = vrot.lane.b32.xlu0 %v2002, 127
    %v2054 = vpop.permute.xlu0 %2053
    %2055 = vrot.lane.b32.xlu0 %v2003, 127
    %v2056 = vpop.permute.xlu0 %2055
    %2057 = vrot.lane.b32.xlu0 %v2004, 127
    %v2058 = vpop.permute.xlu0 %2057
    %2059 = vrot.lane.b32.xlu0 %v2005, 127
    %v2060 = vpop.permute.xlu0 %2059
    %2061 = vrot.lane.b32.xlu0 %v2006, 127
    %v2062 = vpop.permute.xlu0 %2061
    %2063 = vrot.lane.b32.xlu0 %v2007, 127
    %v2064 = vpop.permute.xlu0 %2063
    %v2065 = vsel %vm251, %v2028, %v2030
    %v2066 = vsel %vm251, %v2030, %v2032
    %v2067 = vsel %vm251, %v2032, %v2034
    %v2068 = vsel %vm251, %v2034, %v2036
    %v2069 = vsel %vm251, %v2036, %v2038
    %v2070 = vsel %vm251, %v2038, %v2040
    %v2071 = vsel %vm251, %v2040, %v2042
    %v2072 = vsel %vm251, %v2042, %v2044
    %v2073 = vsel %vm251, %v2044, %v2046
    %v2074 = vsel %vm251, %v2046, %v2048
    %v2075 = vsel %vm251, %v2048, %v2050
    %v2076 = vsel %vm251, %v2050, %v2052
    %v2077 = vsel %vm251, %v2052, %v2054
    %v2078 = vsel %vm251, %v2054, %v2056
    %v2079 = vsel %vm251, %v2056, %v2058
    %v2080 = vsel %vm251, %v2058, %v2060
    %v2081 = vsel %vm251, %v2060, %v2062
    %v2082 = vsel %vm251, %v2062, %v2064
    %v2101 = vmax.f32 %v1989, %v2065
    %v2102 = vmax.f32 %v1990, %v2066
    %v2103 = vmax.f32 %v1991, %v2067
    %v2104 = vmax.f32 %v1992, %v2068
    %v2105 = vmax.f32 %v1993, %v2069
    %v2106 = vmax.f32 %v1994, %v2070
    %v2107 = vmax.f32 %v1995, %v2071
    %v2108 = vmax.f32 %v1996, %v2072
    %v2109 = vmax.f32 %v1997, %v2073
    %v2110 = vmax.f32 %v1998, %v2074
    %v2111 = vmax.f32 %v1999, %v2075
    %v2112 = vmax.f32 %v2000, %v2076
    %v2113 = vmax.f32 %v2001, %v2077
    %v2114 = vmax.f32 %v2002, %v2078
    %v2115 = vmax.f32 %v2003, %v2079
    %v2116 = vmax.f32 %v2004, %v2080
    %v2117 = vmax.f32 %v2005, %v2081
    %v2118 = vmax.f32 %v2006, %v2082
    %v2120 = vmax.f32 %v2007, %v2064
    %2140 = vrot.lane.b32.xlu0 %v2101, 96
    %v2141 = vpop.permute.xlu0 %2140
    %2142 = vrot.lane.b32.xlu0 %v2102, 96
    %v2143 = vpop.permute.xlu0 %2142
    %2144 = vrot.lane.b32.xlu0 %v2103, 96
    %v2145 = vpop.permute.xlu0 %2144
    %2146 = vrot.lane.b32.xlu0 %v2104, 96
    %v2147 = vpop.permute.xlu0 %2146
    %2148 = vrot.lane.b32.xlu0 %v2105, 96
    %v2149 = vpop.permute.xlu0 %2148
    %2150 = vrot.lane.b32.xlu0 %v2106, 96
    %v2151 = vpop.permute.xlu0 %2150
    %2152 = vrot.lane.b32.xlu0 %v2107, 96
    %v2153 = vpop.permute.xlu0 %2152
    %2154 = vrot.lane.b32.xlu0 %v2108, 96
    %v2155 = vpop.permute.xlu0 %2154
    %2156 = vrot.lane.b32.xlu0 %v2109, 96
    %v2157 = vpop.permute.xlu0 %2156
    %2158 = vrot.lane.b32.xlu0 %v2110, 96
    %v2159 = vpop.permute.xlu0 %2158
    %2160 = vrot.lane.b32.xlu0 %v2111, 96
    %v2161 = vpop.permute.xlu0 %2160
    %2162 = vrot.lane.b32.xlu0 %v2112, 96
    %v2163 = vpop.permute.xlu0 %2162
    %2164 = vrot.lane.b32.xlu0 %v2113, 96
    %v2165 = vpop.permute.xlu0 %2164
    %2166 = vrot.lane.b32.xlu0 %v2114, 96
    %v2167 = vpop.permute.xlu0 %2166
    %2168 = vrot.lane.b32.xlu0 %v2115, 96
    %v2169 = vpop.permute.xlu0 %2168
    %2170 = vrot.lane.b32.xlu0 %v2116, 96
    %v2171 = vpop.permute.xlu0 %2170
    %2172 = vrot.lane.b32.xlu0 %v2117, 96
    %v2173 = vpop.permute.xlu0 %2172
    %2174 = vrot.lane.b32.xlu0 %v2118, 96
    %v2175 = vpop.permute.xlu0 %2174
    %2176 = vrot.lane.b32.xlu0 %v2120, 96
    %v2177 = vpop.permute.xlu0 %2176
    %v2178 = vsel %vm597, %v2141, %v2143
    %v2179 = vsel %vm597, %v2143, %v2145
    %v2180 = vsel %vm597, %v2145, %v2147
    %v2181 = vsel %vm597, %v2147, %v2149
    %v2182 = vsel %vm597, %v2149, %v2151
    %v2183 = vsel %vm597, %v2151, %v2153
    %v2184 = vsel %vm597, %v2153, %v2155
    %v2185 = vsel %vm597, %v2155, %v2157
    %v2186 = vsel %vm597, %v2157, %v2159
    %v2187 = vsel %vm597, %v2159, %v2161
    %v2188 = vsel %vm597, %v2161, %v2163
    %v2189 = vsel %vm597, %v2163, %v2165
    %v2190 = vsel %vm597, %v2165, %v2167
    %v2191 = vsel %vm597, %v2167, %v2169
    %v2192 = vsel %vm597, %v2169, %v2171
    %v2193 = vsel %vm597, %v2171, %v2173
    %v2194 = vsel %vm597, %v2173, %v2175
    %v2195 = vsel %vm597, %v2175, %v2177
    %v2214 = vmax.f32 %v2101, %v2178
    %v2215 = vmax.f32 %v2102, %v2179
    %v2216 = vmax.f32 %v2103, %v2180
    %v2217 = vmax.f32 %v2104, %v2181
    %v2218 = vmax.f32 %v2105, %v2182
    %v2219 = vmax.f32 %v2106, %v2183
    %v2220 = vmax.f32 %v2107, %v2184
    %v2221 = vmax.f32 %v2108, %v2185
    %v2222 = vmax.f32 %v2109, %v2186
    %v2223 = vmax.f32 %v2110, %v2187
    %v2224 = vmax.f32 %v2111, %v2188
    %v2225 = vmax.f32 %v2112, %v2189
    %v2226 = vmax.f32 %v2113, %v2190
    %v2227 = vmax.f32 %v2114, %v2191
    %v2228 = vmax.f32 %v2115, %v2192
    %v2229 = vmax.f32 %v2116, %v2193
    %v2230 = vmax.f32 %v2117, %v2194
    %v2231 = vmax.f32 %v2118, %v2195
    %2232 = vst [vmem:[#allocation4] sm:$0xff] %v2214
    %2233 = vst [vmem:[#allocation4 + $0x8] sm:$0xff] %v2215
    %2234 = vst [vmem:[#allocation4 + $0x10] sm:$0xff] %v2216
    %2235 = vst [vmem:[#allocation4 + $0x18] sm:$0xff] %v2217
    %2236 = vst [vmem:[#allocation4 + $0x20] sm:$0xff] %v2218
    %2237 = vst [vmem:[#allocation4 + $0x28] sm:$0xff] %v2219
    %2238 = vst [vmem:[#allocation4 + $0x30] sm:$0xff] %v2220
    %2239 = vst [vmem:[#allocation4 + $0x38] sm:$0xff] %v2221
    %2240 = vst [vmem:[#allocation4 + $0x40] sm:$0xff] %v2222
    %2241 = vst [vmem:[#allocation4 + $0x48] sm:$0xff] %v2223
    %2242 = vst [vmem:[#allocation4 + $0x50] sm:$0xff] %v2224
    %2243 = vst [vmem:[#allocation4 + $0x58] sm:$0xff] %v2225
    %2244 = vst [vmem:[#allocation4 + $0x60] sm:$0xff] %v2226
    %2245 = vst [vmem:[#allocation4 + $0x68] sm:$0xff] %v2227
    %2246 = vst [vmem:[#allocation4 + $0x70] sm:$0xff] %v2228
    %2247 = vst [vmem:[#allocation4 + $0x78] sm:$0xff] %v2229
    %2248 = vst [vmem:[#allocation4 + $0x80] sm:$0xff] %v2230
    %2249 = vst [vmem:[#allocation4 + $0x88] sm:$0xff] %v2231
    %2250 = vst [vmem:[#allocation4 + $0x90] sm:$0xff] 0.0
    %2251 = vst [vmem:[#allocation4 + $0x98] sm:$0xff] 0.0
    %v2252 = vld [vmem:[#allocation4] sm:$0xff]
    %v2253 = vld [vmem:[#allocation4 + $0x8] sm:$0xff]
    %v2254 = vld [vmem:[#allocation4 + $0x10] sm:$0xff]
    %v2255 = vld [vmem:[#allocation4 + $0x18] sm:$0xff]
    %v2256 = vld [vmem:[#allocation4 + $0x20] sm:$0xff]
    %v2257 = vld [vmem:[#allocation4 + $0x28] sm:$0xff]
    %v2258 = vld [vmem:[#allocation4 + $0x30] sm:$0xff]
    %v2259 = vld [vmem:[#allocation4 + $0x38] sm:$0xff]
    %v2260 = vld [vmem:[#allocation4 + $0x40] sm:$0xff]
    %v2261 = vld [vmem:[#allocation4 + $0x48] sm:$0xff]
    %v2262 = vld [vmem:[#allocation4 + $0x50] sm:$0xff]
    %v2263 = vld [vmem:[#allocation4 + $0x58] sm:$0xff]
    %v2264 = vld [vmem:[#allocation4 + $0x60] sm:$0xff]
    %v2265 = vld [vmem:[#allocation4 + $0x68] sm:$0xff]
    %v2266 = vld [vmem:[#allocation4 + $0x70] sm:$0xff]
    %v2267 = vld [vmem:[#allocation4 + $0x78] sm:$0xff]
    %v2268 = vld [vmem:[#allocation4 + $0x80] sm:$0xff]
    %v2269 = vld [vmem:[#allocation4 + $0x88] sm:$0xff]
    %2270 = vst [vmem:[#allocation5] sm:$0xff] %v2252
    %2271 = vst [vmem:[#allocation5 + $0x8] sm:$0xff] %v2253
    %2272 = vst [vmem:[#allocation5 + $0x10] sm:$0xff] %v2254
    %2273 = vst [vmem:[#allocation5 + $0x18] sm:$0xff] %v2255
    %2274 = vst [vmem:[#allocation5 + $0x20] sm:$0xff] %v2256
    %2275 = vst [vmem:[#allocation5 + $0x28] sm:$0xff] %v2257
    %2276 = vst [vmem:[#allocation5 + $0x30] sm:$0xff] %v2258
    %2277 = vst [vmem:[#allocation5 + $0x38] sm:$0xff] %v2259
    %2278 = vst [vmem:[#allocation5 + $0x40] sm:$0xff] %v2260
    %2279 = vst [vmem:[#allocation5 + $0x48] sm:$0xff] %v2261
    %2280 = vst [vmem:[#allocation5 + $0x50] sm:$0xff] %v2262
    %2281 = vst [vmem:[#allocation5 + $0x58] sm:$0xff] %v2263
    %2282 = vst [vmem:[#allocation5 + $0x60] sm:$0xff] %v2264
    %2283 = vst [vmem:[#allocation5 + $0x68] sm:$0xff] %v2265
    %2284 = vst [vmem:[#allocation5 + $0x70] sm:$0xff] %v2266
    %2285 = vst [vmem:[#allocation5 + $0x78] sm:$0xff] %v2267
    %2286 = vst [vmem:[#allocation5 + $0x80] sm:$0xff] %v2268
    %2287 = vst [vmem:[#allocation5 + $0x88] sm:$0xff] %v2269
    %v2288 = vld [vmem:[#allocation4] sm:$0xff]
    %v2289 = vld [vmem:[#allocation4 + $0x8] sm:$0xff]
    %v2290 = vld [vmem:[#allocation4 + $0x10] sm:$0xff]
    %v2291 = vld [vmem:[#allocation4 + $0x18] sm:$0xff]
    %v2292 = vld [vmem:[#allocation4 + $0x20] sm:$0xff]
    %v2293 = vld [vmem:[#allocation4 + $0x28] sm:$0xff]
    %v2294 = vld [vmem:[#allocation4 + $0x30] sm:$0xff]
    %v2295 = vld [vmem:[#allocation4 + $0x38] sm:$0xff]
    %v2296 = vld [vmem:[#allocation4 + $0x40] sm:$0xff]
    %v2297 = vld [vmem:[#allocation4 + $0x48] sm:$0xff]
    %v2298 = vld [vmem:[#allocation4 + $0x50] sm:$0xff]
    %v2299 = vld [vmem:[#allocation4 + $0x58] sm:$0xff]
    %v2300 = vld [vmem:[#allocation4 + $0x60] sm:$0xff]
    %v2301 = vld [vmem:[#allocation4 + $0x68] sm:$0xff]
    %v2302 = vld [vmem:[#allocation4 + $0x70] sm:$0xff]
    %v2303 = vld [vmem:[#allocation4 + $0x78] sm:$0xff]
    %v2304 = vld [vmem:[#allocation4 + $0x80] sm:$0xff]
    %v2305 = vld [vmem:[#allocation4 + $0x88] sm:$0xff]
    %v2306 = vld [vmem:[#allocation4 + $0x90] sm:$0xff]
    %2326 = vrot.lane.b32.xlu0 %v2288, 126
    %v2327 = vpop.permute.xlu0 %2326
    %2328 = vrot.lane.b32.xlu0 %v2289, 126
    %v2329 = vpop.permute.xlu0 %2328
    %2330 = vrot.lane.b32.xlu0 %v2290, 126
    %v2331 = vpop.permute.xlu0 %2330
    %2332 = vrot.lane.b32.xlu0 %v2291, 126
    %v2333 = vpop.permute.xlu0 %2332
    %2334 = vrot.lane.b32.xlu0 %v2292, 126
    %v2335 = vpop.permute.xlu0 %2334
    %2336 = vrot.lane.b32.xlu0 %v2293, 126
    %v2337 = vpop.permute.xlu0 %2336
    %2338 = vrot.lane.b32.xlu0 %v2294, 126
    %v2339 = vpop.permute.xlu0 %2338
    %2340 = vrot.lane.b32.xlu0 %v2295, 126
    %v2341 = vpop.permute.xlu0 %2340
    %2342 = vrot.lane.b32.xlu0 %v2296, 126
    %v2343 = vpop.permute.xlu0 %2342
    %2344 = vrot.lane.b32.xlu0 %v2297, 126
    %v2345 = vpop.permute.xlu0 %2344
    %2346 = vrot.lane.b32.xlu0 %v2298, 126
    %v2347 = vpop.permute.xlu0 %2346
    %2348 = vrot.lane.b32.xlu0 %v2299, 126
    %v2349 = vpop.permute.xlu0 %2348
    %2350 = vrot.lane.b32.xlu0 %v2300, 126
    %v2351 = vpop.permute.xlu0 %2350
    %2352 = vrot.lane.b32.xlu0 %v2301, 126
    %v2353 = vpop.permute.xlu0 %2352
    %2354 = vrot.lane.b32.xlu0 %v2302, 126
    %v2355 = vpop.permute.xlu0 %2354
    %2356 = vrot.lane.b32.xlu0 %v2303, 126
    %v2357 = vpop.permute.xlu0 %2356
    %2358 = vrot.lane.b32.xlu0 %v2304, 126
    %v2359 = vpop.permute.xlu0 %2358
    %2360 = vrot.lane.b32.xlu0 %v2305, 126
    %v2361 = vpop.permute.xlu0 %2360
    %2362 = vrot.lane.b32.xlu0 %v2306, 126
    %v2363 = vpop.permute.xlu0 %2362
    %v2364 = vsel %vm415, %v2327, %v2329
    %v2365 = vsel %vm415, %v2329, %v2331
    %v2366 = vsel %vm415, %v2331, %v2333
    %v2367 = vsel %vm415, %v2333, %v2335
    %v2368 = vsel %vm415, %v2335, %v2337
    %v2369 = vsel %vm415, %v2337, %v2339
    %v2370 = vsel %vm415, %v2339, %v2341
    %v2371 = vsel %vm415, %v2341, %v2343
    %v2372 = vsel %vm415, %v2343, %v2345
    %v2373 = vsel %vm415, %v2345, %v2347
    %v2374 = vsel %vm415, %v2347, %v2349
    %v2375 = vsel %vm415, %v2349, %v2351
    %v2376 = vsel %vm415, %v2351, %v2353
    %v2377 = vsel %vm415, %v2353, %v2355
    %v2378 = vsel %vm415, %v2355, %v2357
    %v2379 = vsel %vm415, %v2357, %v2359
    %v2380 = vsel %vm415, %v2359, %v2361
    %v2381 = vsel %vm415, %v2361, %v2363
    %2400 = vst [vmem:[#allocation5 + $0x90] sm:$0xff] %v2364
    %2401 = vst [vmem:[#allocation5 + $0x98] sm:$0xff] %v2365
    %2402 = vst [vmem:[#allocation5 + $0xa0] sm:$0xff] %v2366
    %2403 = vst [vmem:[#allocation5 + $0xa8] sm:$0xff] %v2367
    %2404 = vst [vmem:[#allocation5 + $0xb0] sm:$0xff] %v2368
    %2405 = vst [vmem:[#allocation5 + $0xb8] sm:$0xff] %v2369
    %2406 = vst [vmem:[#allocation5 + $0xc0] sm:$0xff] %v2370
    %2407 = vst [vmem:[#allocation5 + $0xc8] sm:$0xff] %v2371
    %2408 = vst [vmem:[#allocation5 + $0xd0] sm:$0xff] %v2372
    %2409 = vst [vmem:[#allocation5 + $0xd8] sm:$0xff] %v2373
    %2410 = vst [vmem:[#allocation5 + $0xe0] sm:$0xff] %v2374
    %2411 = vst [vmem:[#allocation5 + $0xe8] sm:$0xff] %v2375
    %2412 = vst [vmem:[#allocation5 + $0xf0] sm:$0xff] %v2376
    %2413 = vst [vmem:[#allocation5 + $0xf8] sm:$0xff] %v2377
    %2414 = vst [vmem:[#allocation5 + $0x100] sm:$0xff] %v2378
    %2415 = vst [vmem:[#allocation5 + $0x108] sm:$0xff] %v2379
    %2416 = vst [vmem:[#allocation5 + $0x110] sm:$0xff] %v2380
    %2417 = vst [vmem:[#allocation5 + $0x118] sm:$0xff] %v2381
    %v2418 = vld [vmem:[#allocation4] sm:$0xff]
    %v2419 = vld [vmem:[#allocation4 + $0x8] sm:$0xff]
    %v2420 = vld [vmem:[#allocation4 + $0x10] sm:$0xff]
    %v2421 = vld [vmem:[#allocation4 + $0x18] sm:$0xff]
    %v2422 = vld [vmem:[#allocation4 + $0x20] sm:$0xff]
    %v2423 = vld [vmem:[#allocation4 + $0x28] sm:$0xff]
    %v2424 = vld [vmem:[#allocation4 + $0x30] sm:$0xff]
    %v2425 = vld [vmem:[#allocation4 + $0x38] sm:$0xff]
    %v2426 = vld [vmem:[#allocation4 + $0x40] sm:$0xff]
    %v2427 = vld [vmem:[#allocation4 + $0x48] sm:$0xff]
    %v2428 = vld [vmem:[#allocation4 + $0x50] sm:$0xff]
    %v2429 = vld [vmem:[#allocation4 + $0x58] sm:$0xff]
    %v2430 = vld [vmem:[#allocation4 + $0x60] sm:$0xff]
    %v2431 = vld [vmem:[#allocation4 + $0x68] sm:$0xff]
    %v2432 = vld [vmem:[#allocation4 + $0x70] sm:$0xff]
    %v2433 = vld [vmem:[#allocation4 + $0x78] sm:$0xff]
    %v2434 = vld [vmem:[#allocation4 + $0x80] sm:$0xff]
    %v2435 = vld [vmem:[#allocation4 + $0x88] sm:$0xff]
    %v2436 = vld [vmem:[#allocation4 + $0x90] sm:$0xff]
    %2456 = vrot.lane.b32.xlu0 %v2418, 124
    %v2457 = vpop.permute.xlu0 %2456
    %2458 = vrot.lane.b32.xlu0 %v2419, 124
    %v2459 = vpop.permute.xlu0 %2458
    %2460 = vrot.lane.b32.xlu0 %v2420, 124
    %v2461 = vpop.permute.xlu0 %2460
    %2462 = vrot.lane.b32.xlu0 %v2421, 124
    %v2463 = vpop.permute.xlu0 %2462
    %2464 = vrot.lane.b32.xlu0 %v2422, 124
    %v2465 = vpop.permute.xlu0 %2464
    %2466 = vrot.lane.b32.xlu0 %v2423, 124
    %v2467 = vpop.permute.xlu0 %2466
    %2468 = vrot.lane.b32.xlu0 %v2424, 124
    %v2469 = vpop.permute.xlu0 %2468
    %2470 = vrot.lane.b32.xlu0 %v2425, 124
    %v2471 = vpop.permute.xlu0 %2470
    %2472 = vrot.lane.b32.xlu0 %v2426, 124
    %v2473 = vpop.permute.xlu0 %2472
    %2474 = vrot.lane.b32.xlu0 %v2427, 124
    %v2475 = vpop.permute.xlu0 %2474
    %2476 = vrot.lane.b32.xlu0 %v2428, 124
    %v2477 = vpop.permute.xlu0 %2476
    %2478 = vrot.lane.b32.xlu0 %v2429, 124
    %v2479 = vpop.permute.xlu0 %2478
    %2480 = vrot.lane.b32.xlu0 %v2430, 124
    %v2481 = vpop.permute.xlu0 %2480
    %2482 = vrot.lane.b32.xlu0 %v2431, 124
    %v2483 = vpop.permute.xlu0 %2482
    %2484 = vrot.lane.b32.xlu0 %v2432, 124
    %v2485 = vpop.permute.xlu0 %2484
    %2486 = vrot.lane.b32.xlu0 %v2433, 124
    %v2487 = vpop.permute.xlu0 %2486
    %2488 = vrot.lane.b32.xlu0 %v2434, 124
    %v2489 = vpop.permute.xlu0 %2488
    %2490 = vrot.lane.b32.xlu0 %v2435, 124
    %v2491 = vpop.permute.xlu0 %2490
    %2492 = vrot.lane.b32.xlu0 %v2436, 124
    %v2493 = vpop.permute.xlu0 %2492
    %vm2494 = vcmask 1014784
    %v2495 = vsel %vm2494, %v2457, %v2459
    %v2496 = vsel %vm2494, %v2459, %v2461
    %v2497 = vsel %vm2494, %v2461, %v2463
    %v2498 = vsel %vm2494, %v2463, %v2465
    %v2499 = vsel %vm2494, %v2465, %v2467
    %v2500 = vsel %vm2494, %v2467, %v2469
    %v2501 = vsel %vm2494, %v2469, %v2471
    %v2502 = vsel %vm2494, %v2471, %v2473
    %v2503 = vsel %vm2494, %v2473, %v2475
    %v2504 = vsel %vm2494, %v2475, %v2477
    %v2505 = vsel %vm2494, %v2477, %v2479
    %v2506 = vsel %vm2494, %v2479, %v2481
    %v2507 = vsel %vm2494, %v2481, %v2483
    %v2508 = vsel %vm2494, %v2483, %v2485
    %v2509 = vsel %vm2494, %v2485, %v2487
    %v2510 = vsel %vm2494, %v2487, %v2489
    %v2511 = vsel %vm2494, %v2489, %v2491
    %v2512 = vsel %vm2494, %v2491, %v2493
    %2531 = vst [vmem:[#allocation5 + $0x120] sm:$0xff] %v2495
    %2532 = vst [vmem:[#allocation5 + $0x128] sm:$0xff] %v2496
    %2533 = vst [vmem:[#allocation5 + $0x130] sm:$0xff] %v2497
    %2534 = vst [vmem:[#allocation5 + $0x138] sm:$0xff] %v2498
    %2535 = vst [vmem:[#allocation5 + $0x140] sm:$0xff] %v2499
    %2536 = vst [vmem:[#allocation5 + $0x148] sm:$0xff] %v2500
    %2537 = vst [vmem:[#allocation5 + $0x150] sm:$0xff] %v2501
    %2538 = vst [vmem:[#allocation5 + $0x158] sm:$0xff] %v2502
    %2539 = vst [vmem:[#allocation5 + $0x160] sm:$0xff] %v2503
    %2540 = vst [vmem:[#allocation5 + $0x168] sm:$0xff] %v2504
    %2541 = vst [vmem:[#allocation5 + $0x170] sm:$0xff] %v2505
    %2542 = vst [vmem:[#allocation5 + $0x178] sm:$0xff] %v2506
    %2543 = vst [vmem:[#allocation5 + $0x180] sm:$0xff] %v2507
    %2544 = vst [vmem:[#allocation5 + $0x188] sm:$0xff] %v2508
    %2545 = vst [vmem:[#allocation5 + $0x190] sm:$0xff] %v2509
    %2546 = vst [vmem:[#allocation5 + $0x198] sm:$0xff] %v2510
    %2547 = vst [vmem:[#allocation5 + $0x1a0] sm:$0xff] %v2511
    %2548 = vst [vmem:[#allocation5 + $0x1a8] sm:$0xff] %v2512
    %v2549 = vld [vmem:[#allocation4] sm:$0xff]
    %v2550 = vld [vmem:[#allocation4 + $0x8] sm:$0xff]
    %v2551 = vld [vmem:[#allocation4 + $0x10] sm:$0xff]
    %v2552 = vld [vmem:[#allocation4 + $0x18] sm:$0xff]
    %v2553 = vld [vmem:[#allocation4 + $0x20] sm:$0xff]
    %v2554 = vld [vmem:[#allocation4 + $0x28] sm:$0xff]
    %v2555 = vld [vmem:[#allocation4 + $0x30] sm:$0xff]
    %v2556 = vld [vmem:[#allocation4 + $0x38] sm:$0xff]
    %v2557 = vld [vmem:[#allocation4 + $0x40] sm:$0xff]
    %v2558 = vld [vmem:[#allocation4 + $0x48] sm:$0xff]
    %v2559 = vld [vmem:[#allocation4 + $0x50] sm:$0xff]
    %v2560 = vld [vmem:[#allocation4 + $0x58] sm:$0xff]
    %v2561 = vld [vmem:[#allocation4 + $0x60] sm:$0xff]
    %v2562 = vld [vmem:[#allocation4 + $0x68] sm:$0xff]
    %v2563 = vld [vmem:[#allocation4 + $0x70] sm:$0xff]
    %v2564 = vld [vmem:[#allocation4 + $0x78] sm:$0xff]
    %v2565 = vld [vmem:[#allocation4 + $0x80] sm:$0xff]
    %v2566 = vld [vmem:[#allocation4 + $0x88] sm:$0xff]
    %v2567 = vld [vmem:[#allocation4 + $0x90] sm:$0xff]
    %2587 = vrot.lane.b32.xlu0 %v2549, 64
    %v2588 = vpop.permute.xlu0 %2587
    %2589 = vrot.lane.b32.xlu0 %v2550, 64
    %v2590 = vpop.permute.xlu0 %2589
    %2591 = vrot.lane.b32.xlu0 %v2551, 64
    %v2592 = vpop.permute.xlu0 %2591
    %2593 = vrot.lane.b32.xlu0 %v2552, 64
    %v2594 = vpop.permute.xlu0 %2593
    %2595 = vrot.lane.b32.xlu0 %v2553, 64
    %v2596 = vpop.permute.xlu0 %2595
    %2597 = vrot.lane.b32.xlu0 %v2554, 64
    %v2598 = vpop.permute.xlu0 %2597
    %2599 = vrot.lane.b32.xlu0 %v2555, 64
    %v2600 = vpop.permute.xlu0 %2599
    %2601 = vrot.lane.b32.xlu0 %v2556, 64
    %v2602 = vpop.permute.xlu0 %2601
    %2603 = vrot.lane.b32.xlu0 %v2557, 64
    %v2604 = vpop.permute.xlu0 %2603
    %2605 = vrot.lane.b32.xlu0 %v2558, 64
    %v2606 = vpop.permute.xlu0 %2605
    %2607 = vrot.lane.b32.xlu0 %v2559, 64
    %v2608 = vpop.permute.xlu0 %2607
    %2609 = vrot.lane.b32.xlu0 %v2560, 64
    %v2610 = vpop.permute.xlu0 %2609
    %2611 = vrot.lane.b32.xlu0 %v2561, 64
    %v2612 = vpop.permute.xlu0 %2611
    %2613 = vrot.lane.b32.xlu0 %v2562, 64
    %v2614 = vpop.permute.xlu0 %2613
    %2615 = vrot.lane.b32.xlu0 %v2563, 64
    %v2616 = vpop.permute.xlu0 %2615
    %2617 = vrot.lane.b32.xlu0 %v2564, 64
    %v2618 = vpop.permute.xlu0 %2617
    %2619 = vrot.lane.b32.xlu0 %v2565, 64
    %v2620 = vpop.permute.xlu0 %2619
    %2621 = vrot.lane.b32.xlu0 %v2566, 64
    %v2622 = vpop.permute.xlu0 %2621
    %2623 = vrot.lane.b32.xlu0 %v2567, 64
    %v2624 = vpop.permute.xlu0 %2623
    %v2625 = vsel %vm1089, %v2588, %v2590
    %v2626 = vsel %vm1089, %v2590, %v2592
    %v2627 = vsel %vm1089, %v2592, %v2594
    %v2628 = vsel %vm1089, %v2594, %v2596
    %v2629 = vsel %vm1089, %v2596, %v2598
    %v2630 = vsel %vm1089, %v2598, %v2600
    %v2631 = vsel %vm1089, %v2600, %v2602
    %v2632 = vsel %vm1089, %v2602, %v2604
    %v2633 = vsel %vm1089, %v2604, %v2606
    %v2634 = vsel %vm1089, %v2606, %v2608
    %v2635 = vsel %vm1089, %v2608, %v2610
    %v2636 = vsel %vm1089, %v2610, %v2612
    %v2637 = vsel %vm1089, %v2612, %v2614
    %v2638 = vsel %vm1089, %v2614, %v2616
    %v2639 = vsel %vm1089, %v2616, %v2618
    %v2640 = vsel %vm1089, %v2618, %v2620
    %v2641 = vsel %vm1089, %v2620, %v2622
    %v2642 = vsel %vm1089, %v2622, %v2624
    %2661 = vst [vmem:[#allocation5 + $0x1b0] sm:$0xff] %v2625
    %2662 = vst [vmem:[#allocation5 + $0x1b8] sm:$0xff] %v2626
    %2663 = vst [vmem:[#allocation5 + $0x1c0] sm:$0xff] %v2627
    %2664 = vst [vmem:[#allocation5 + $0x1c8] sm:$0xff] %v2628
    %2665 = vst [vmem:[#allocation5 + $0x1d0] sm:$0xff] %v2629
    %2666 = vst [vmem:[#allocation5 + $0x1d8] sm:$0xff] %v2630
    %2667 = vst [vmem:[#allocation5 + $0x1e0] sm:$0xff] %v2631
    %2668 = vst [vmem:[#allocation5 + $0x1e8] sm:$0xff] %v2632
    %2669 = vst [vmem:[#allocation5 + $0x1f0] sm:$0xff] %v2633
    %2670 = vst [vmem:[#allocation5 + $0x1f8] sm:$0xff] %v2634
    %2671 = vst [vmem:[#allocation5 + $0x200] sm:$0xff] %v2635
    %2672 = vst [vmem:[#allocation5 + $0x208] sm:$0xff] %v2636
    %2673 = vst [vmem:[#allocation5 + $0x210] sm:$0xff] %v2637
    %2674 = vst [vmem:[#allocation5 + $0x218] sm:$0xff] %v2638
    %2675 = vst [vmem:[#allocation5 + $0x220] sm:$0xff] %v2639
    %2676 = vst [vmem:[#allocation5 + $0x228] sm:$0xff] %v2640
    %2677 = vst [vmem:[#allocation5 + $0x230] sm:$0xff] %v2641
    %2678 = vst [vmem:[#allocation5 + $0x238] sm:$0xff] %v2642
    %v2679 = vld [vmem:[#allocation4] sm:$0xff]
    %v2680 = vld [vmem:[#allocation4 + $0x8] sm:$0xff]
    %v2681 = vld [vmem:[#allocation4 + $0x10] sm:$0xff]
    %v2682 = vld [vmem:[#allocation4 + $0x18] sm:$0xff]
    %v2683 = vld [vmem:[#allocation4 + $0x20] sm:$0xff]
    %v2684 = vld [vmem:[#allocation4 + $0x28] sm:$0xff]
    %v2685 = vld [vmem:[#allocation4 + $0x30] sm:$0xff]
    %v2686 = vld [vmem:[#allocation4 + $0x38] sm:$0xff]
    %v2687 = vld [vmem:[#allocation4 + $0x40] sm:$0xff]
    %v2688 = vld [vmem:[#allocation4 + $0x48] sm:$0xff]
    %v2689 = vld [vmem:[#allocation4 + $0x50] sm:$0xff]
    %v2690 = vld [vmem:[#allocation4 + $0x58] sm:$0xff]
    %v2691 = vld [vmem:[#allocation4 + $0x60] sm:$0xff]
    %v2692 = vld [vmem:[#allocation4 + $0x68] sm:$0xff]
    %v2693 = vld [vmem:[#allocation4 + $0x70] sm:$0xff]
    %v2694 = vld [vmem:[#allocation4 + $0x78] sm:$0xff]
    %v2695 = vld [vmem:[#allocation4 + $0x80] sm:$0xff]
    %v2696 = vld [vmem:[#allocation4 + $0x88] sm:$0xff]
    %v2697 = vld [vmem:[#allocation4 + $0x90] sm:$0xff]
    %2717 = vrot.lane.b32.xlu0 %v2679, 62
    %v2718 = vpop.permute.xlu0 %2717
    %2719 = vrot.lane.b32.xlu0 %v2680, 62
    %v2720 = vpop.permute.xlu0 %2719
    %2721 = vrot.lane.b32.xlu0 %v2681, 62
    %v2722 = vpop.permute.xlu0 %2721
    %2723 = vrot.lane.b32.xlu0 %v2682, 62
    %v2724 = vpop.permute.xlu0 %2723
    %2725 = vrot.lane.b32.xlu0 %v2683, 62
    %v2726 = vpop.permute.xlu0 %2725
    %2727 = vrot.lane.b32.xlu0 %v2684, 62
    %v2728 = vpop.permute.xlu0 %2727
    %2729 = vrot.lane.b32.xlu0 %v2685, 62
    %v2730 = vpop.permute.xlu0 %2729
    %2731 = vrot.lane.b32.xlu0 %v2686, 62
    %v2732 = vpop.permute.xlu0 %2731
    %2733 = vrot.lane.b32.xlu0 %v2687, 62
    %v2734 = vpop.permute.xlu0 %2733
    %2735 = vrot.lane.b32.xlu0 %v2688, 62
    %v2736 = vpop.permute.xlu0 %2735
    %2737 = vrot.lane.b32.xlu0 %v2689, 62
    %v2738 = vpop.permute.xlu0 %2737
    %2739 = vrot.lane.b32.xlu0 %v2690, 62
    %v2740 = vpop.permute.xlu0 %2739
    %2741 = vrot.lane.b32.xlu0 %v2691, 62
    %v2742 = vpop.permute.xlu0 %2741
    %2743 = vrot.lane.b32.xlu0 %v2692, 62
    %v2744 = vpop.permute.xlu0 %2743
    %2745 = vrot.lane.b32.xlu0 %v2693, 62
    %v2746 = vpop.permute.xlu0 %2745
    %2747 = vrot.lane.b32.xlu0 %v2694, 62
    %v2748 = vpop.permute.xlu0 %2747
    %2749 = vrot.lane.b32.xlu0 %v2695, 62
    %v2750 = vpop.permute.xlu0 %2749
    %2751 = vrot.lane.b32.xlu0 %v2696, 62
    %v2752 = vpop.permute.xlu0 %2751
    %2753 = vrot.lane.b32.xlu0 %v2697, 62
    %v2754 = vpop.permute.xlu0 %2753
    %v2755 = vsel %vm1398, %v2718, %v2720
    %v2756 = vsel %vm1398, %v2720, %v2722
    %v2757 = vsel %vm1398, %v2722, %v2724
    %v2758 = vsel %vm1398, %v2724, %v2726
    %v2759 = vsel %vm1398, %v2726, %v2728
    %v2760 = vsel %vm1398, %v2728, %v2730
    %v2761 = vsel %vm1398, %v2730, %v2732
    %v2762 = vsel %vm1398, %v2732, %v2734
    %v2763 = vsel %vm1398, %v2734, %v2736
    %v2764 = vsel %vm1398, %v2736, %v2738
    %v2765 = vsel %vm1398, %v2738, %v2740
    %v2766 = vsel %vm1398, %v2740, %v2742
    %v2767 = vsel %vm1398, %v2742, %v2744
    %v2768 = vsel %vm1398, %v2744, %v2746
    %v2769 = vsel %vm1398, %v2746, %v2748
    %v2770 = vsel %vm1398, %v2748, %v2750
    %v2771 = vsel %vm1398, %v2750, %v2752
    %v2772 = vsel %vm1398, %v2752, %v2754
    %2791 = vst [vmem:[#allocation5 + $0x240] sm:$0xff] %v2755
    %2792 = vst [vmem:[#allocation5 + $0x248] sm:$0xff] %v2756
    %2793 = vst [vmem:[#allocation5 + $0x250] sm:$0xff] %v2757
    %2794 = vst [vmem:[#allocation5 + $0x258] sm:$0xff] %v2758
    %2795 = vst [vmem:[#allocation5 + $0x260] sm:$0xff] %v2759
    %2796 = vst [vmem:[#allocation5 + $0x268] sm:$0xff] %v2760
    %2797 = vst [vmem:[#allocation5 + $0x270] sm:$0xff] %v2761
    %2798 = vst [vmem:[#allocation5 + $0x278] sm:$0xff] %v2762
    %2799 = vst [vmem:[#allocation5 + $0x280] sm:$0xff] %v2763
    %2800 = vst [vmem:[#allocation5 + $0x288] sm:$0xff] %v2764
    %2801 = vst [vmem:[#allocation5 + $0x290] sm:$0xff] %v2765
    %2802 = vst [vmem:[#allocation5 + $0x298] sm:$0xff] %v2766
    %2803 = vst [vmem:[#allocation5 + $0x2a0] sm:$0xff] %v2767
    %2804 = vst [vmem:[#allocation5 + $0x2a8] sm:$0xff] %v2768
    %2805 = vst [vmem:[#allocation5 + $0x2b0] sm:$0xff] %v2769
    %2806 = vst [vmem:[#allocation5 + $0x2b8] sm:$0xff] %v2770
    %2807 = vst [vmem:[#allocation5 + $0x2c0] sm:$0xff] %v2771
    %2808 = vst [vmem:[#allocation5 + $0x2c8] sm:$0xff] %v2772
    %v2809 = vld [vmem:[#allocation4] sm:$0xff]
    %v2810 = vld [vmem:[#allocation4 + $0x8] sm:$0xff]
    %v2811 = vld [vmem:[#allocation4 + $0x10] sm:$0xff]
    %v2812 = vld [vmem:[#allocation4 + $0x18] sm:$0xff]
    %v2813 = vld [vmem:[#allocation4 + $0x20] sm:$0xff]
    %v2814 = vld [vmem:[#allocation4 + $0x28] sm:$0xff]
    %v2815 = vld [vmem:[#allocation4 + $0x30] sm:$0xff]
    %v2816 = vld [vmem:[#allocation4 + $0x38] sm:$0xff]
    %v2817 = vld [vmem:[#allocation4 + $0x40] sm:$0xff]
    %v2818 = vld [vmem:[#allocation4 + $0x48] sm:$0xff]
    %v2819 = vld [vmem:[#allocation4 + $0x50] sm:$0xff]
    %v2820 = vld [vmem:[#allocation4 + $0x58] sm:$0xff]
    %v2821 = vld [vmem:[#allocation4 + $0x60] sm:$0xff]
    %v2822 = vld [vmem:[#allocation4 + $0x68] sm:$0xff]
    %v2823 = vld [vmem:[#allocation4 + $0x70] sm:$0xff]
    %v2824 = vld [vmem:[#allocation4 + $0x78] sm:$0xff]
    %v2825 = vld [vmem:[#allocation4 + $0x80] sm:$0xff]
    %v2826 = vld [vmem:[#allocation4 + $0x88] sm:$0xff]
    %v2827 = vld [vmem:[#allocation4 + $0x90] sm:$0xff]
    %2847 = vrot.lane.b32.xlu0 %v2809, 60
    %v2848 = vpop.permute.xlu0 %2847
    %2849 = vrot.lane.b32.xlu0 %v2810, 60
    %v2850 = vpop.permute.xlu0 %2849
    %2851 = vrot.lane.b32.xlu0 %v2811, 60
    %v2852 = vpop.permute.xlu0 %2851
    %2853 = vrot.lane.b32.xlu0 %v2812, 60
    %v2854 = vpop.permute.xlu0 %2853
    %2855 = vrot.lane.b32.xlu0 %v2813, 60
    %v2856 = vpop.permute.xlu0 %2855
    %2857 = vrot.lane.b32.xlu0 %v2814, 60
    %v2858 = vpop.permute.xlu0 %2857
    %2859 = vrot.lane.b32.xlu0 %v2815, 60
    %v2860 = vpop.permute.xlu0 %2859
    %2861 = vrot.lane.b32.xlu0 %v2816, 60
    %v2862 = vpop.permute.xlu0 %2861
    %2863 = vrot.lane.b32.xlu0 %v2817, 60
    %v2864 = vpop.permute.xlu0 %2863
    %2865 = vrot.lane.b32.xlu0 %v2818, 60
    %v2866 = vpop.permute.xlu0 %2865
    %2867 = vrot.lane.b32.xlu0 %v2819, 60
    %v2868 = vpop.permute.xlu0 %2867
    %2869 = vrot.lane.b32.xlu0 %v2820, 60
    %v2870 = vpop.permute.xlu0 %2869
    %2871 = vrot.lane.b32.xlu0 %v2821, 60
    %v2872 = vpop.permute.xlu0 %2871
    %2873 = vrot.lane.b32.xlu0 %v2822, 60
    %v2874 = vpop.permute.xlu0 %2873
    %2875 = vrot.lane.b32.xlu0 %v2823, 60
    %v2876 = vpop.permute.xlu0 %2875
    %2877 = vrot.lane.b32.xlu0 %v2824, 60
    %v2878 = vpop.permute.xlu0 %2877
    %2879 = vrot.lane.b32.xlu0 %v2825, 60
    %v2880 = vpop.permute.xlu0 %2879
    %2881 = vrot.lane.b32.xlu0 %v2826, 60
    %v2882 = vpop.permute.xlu0 %2881
    %2883 = vrot.lane.b32.xlu0 %v2827, 60
    %v2884 = vpop.permute.xlu0 %2883
    %vm2885 = vcmask 490496
    %v2886 = vsel %vm2885, %v2848, %v2850
    %v2887 = vsel %vm2885, %v2850, %v2852
    %v2888 = vsel %vm2885, %v2852, %v2854
    %v2889 = vsel %vm2885, %v2854, %v2856
    %v2890 = vsel %vm2885, %v2856, %v2858
    %v2891 = vsel %vm2885, %v2858, %v2860
    %v2892 = vsel %vm2885, %v2860, %v2862
    %v2893 = vsel %vm2885, %v2862, %v2864
    %v2894 = vsel %vm2885, %v2864, %v2866
    %v2895 = vsel %vm2885, %v2866, %v2868
    %v2896 = vsel %vm2885, %v2868, %v2870
    %v2897 = vsel %vm2885, %v2870, %v2872
    %v2898 = vsel %vm2885, %v2872, %v2874
    %v2899 = vsel %vm2885, %v2874, %v2876
    %v2900 = vsel %vm2885, %v2876, %v2878
    %v2901 = vsel %vm2885, %v2878, %v2880
    %v2902 = vsel %vm2885, %v2880, %v2882
    %v2903 = vsel %vm2885, %v2882, %v2884
    %2922 = vst [vmem:[#allocation5 + $0x2d0] sm:$0xff] %v2886
    %2923 = vst [vmem:[#allocation5 + $0x2d8] sm:$0xff] %v2887
    %2924 = vst [vmem:[#allocation5 + $0x2e0] sm:$0xff] %v2888
    %2925 = vst [vmem:[#allocation5 + $0x2e8] sm:$0xff] %v2889
    %2926 = vst [vmem:[#allocation5 + $0x2f0] sm:$0xff] %v2890
    %2927 = vst [vmem:[#allocation5 + $0x2f8] sm:$0xff] %v2891
    %2928 = vst [vmem:[#allocation5 + $0x300] sm:$0xff] %v2892
    %2929 = vst [vmem:[#allocation5 + $0x308] sm:$0xff] %v2893
    %2930 = vst [vmem:[#allocation5 + $0x310] sm:$0xff] %v2894
    %2931 = vst [vmem:[#allocation5 + $0x318] sm:$0xff] %v2895
    %2932 = vst [vmem:[#allocation5 + $0x320] sm:$0xff] %v2896
    %2933 = vst [vmem:[#allocation5 + $0x328] sm:$0xff] %v2897
    %2934 = vst [vmem:[#allocation5 + $0x330] sm:$0xff] %v2898
    %2935 = vst [vmem:[#allocation5 + $0x338] sm:$0xff] %v2899
    %2936 = vst [vmem:[#allocation5 + $0x340] sm:$0xff] %v2900
    %2937 = vst [vmem:[#allocation5 + $0x348] sm:$0xff] %v2901
    %2938 = vst [vmem:[#allocation5 + $0x350] sm:$0xff] %v2902
    %2939 = vst [vmem:[#allocation5 + $0x358] sm:$0xff] %v2903
    %v2940 = vld [vmem:[#allocation4 + $0x8] sm:$0xff]
    %v2941 = vld [vmem:[#allocation4 + $0x10] sm:$0xff]
    %v2942 = vld [vmem:[#allocation4 + $0x18] sm:$0xff]
    %v2943 = vld [vmem:[#allocation4 + $0x20] sm:$0xff]
    %v2944 = vld [vmem:[#allocation4 + $0x28] sm:$0xff]
    %v2945 = vld [vmem:[#allocation4 + $0x30] sm:$0xff]
    %v2946 = vld [vmem:[#allocation4 + $0x38] sm:$0xff]
    %v2947 = vld [vmem:[#allocation4 + $0x40] sm:$0xff]
    %v2948 = vld [vmem:[#allocation4 + $0x48] sm:$0xff]
    %v2949 = vld [vmem:[#allocation4 + $0x50] sm:$0xff]
    %v2950 = vld [vmem:[#allocation4 + $0x58] sm:$0xff]
    %v2951 = vld [vmem:[#allocation4 + $0x60] sm:$0xff]
    %v2952 = vld [vmem:[#allocation4 + $0x68] sm:$0xff]
    %v2953 = vld [vmem:[#allocation4 + $0x70] sm:$0xff]
    %v2954 = vld [vmem:[#allocation4 + $0x78] sm:$0xff]
    %v2955 = vld [vmem:[#allocation4 + $0x80] sm:$0xff]
    %v2956 = vld [vmem:[#allocation4 + $0x88] sm:$0xff]
    %v2957 = vld [vmem:[#allocation4 + $0x90] sm:$0xff]
    %2958 = vst [vmem:[#allocation5 + $0x360] sm:$0xff] %v2940
    %2959 = vst [vmem:[#allocation5 + $0x368] sm:$0xff] %v2941
    %2960 = vst [vmem:[#allocation5 + $0x370] sm:$0xff] %v2942
    %2961 = vst [vmem:[#allocation5 + $0x378] sm:$0xff] %v2943
    %2962 = vst [vmem:[#allocation5 + $0x380] sm:$0xff] %v2944
    %2963 = vst [vmem:[#allocation5 + $0x388] sm:$0xff] %v2945
    %2964 = vst [vmem:[#allocation5 + $0x390] sm:$0xff] %v2946
    %2965 = vst [vmem:[#allocation5 + $0x398] sm:$0xff] %v2947
    %2966 = vst [vmem:[#allocation5 + $0x3a0] sm:$0xff] %v2948
    %2967 = vst [vmem:[#allocation5 + $0x3a8] sm:$0xff] %v2949
    %2968 = vst [vmem:[#allocation5 + $0x3b0] sm:$0xff] %v2950
    %2969 = vst [vmem:[#allocation5 + $0x3b8] sm:$0xff] %v2951
    %2970 = vst [vmem:[#allocation5 + $0x3c0] sm:$0xff] %v2952
    %2971 = vst [vmem:[#allocation5 + $0x3c8] sm:$0xff] %v2953
    %2972 = vst [vmem:[#allocation5 + $0x3d0] sm:$0xff] %v2954
    %2973 = vst [vmem:[#allocation5 + $0x3d8] sm:$0xff] %v2955
    %2974 = vst [vmem:[#allocation5 + $0x3e0] sm:$0xff] %v2956
    %2975 = vst [vmem:[#allocation5 + $0x3e8] sm:$0xff] %v2957
    %v2976 = vld [vmem:[#allocation4 + $0x8] sm:$0xff]
    %v2977 = vld [vmem:[#allocation4 + $0x10] sm:$0xff]
    %v2978 = vld [vmem:[#allocation4 + $0x18] sm:$0xff]
    %v2979 = vld [vmem:[#allocation4 + $0x20] sm:$0xff]
    %v2980 = vld [vmem:[#allocation4 + $0x28] sm:$0xff]
    %v2981 = vld [vmem:[#allocation4 + $0x30] sm:$0xff]
    %v2982 = vld [vmem:[#allocation4 + $0x38] sm:$0xff]
    %v2983 = vld [vmem:[#allocation4 + $0x40] sm:$0xff]
    %v2984 = vld [vmem:[#allocation4 + $0x48] sm:$0xff]
    %v2985 = vld [vmem:[#allocation4 + $0x50] sm:$0xff]
    %v2986 = vld [vmem:[#allocation4 + $0x58] sm:$0xff]
    %v2987 = vld [vmem:[#allocation4 + $0x60] sm:$0xff]
    %v2988 = vld [vmem:[#allocation4 + $0x68] sm:$0xff]
    %v2989 = vld [vmem:[#allocation4 + $0x70] sm:$0xff]
    %v2990 = vld [vmem:[#allocation4 + $0x78] sm:$0xff]
    %v2991 = vld [vmem:[#allocation4 + $0x80] sm:$0xff]
    %v2992 = vld [vmem:[#allocation4 + $0x88] sm:$0xff]
    %v2993 = vld [vmem:[#allocation4 + $0x90] sm:$0xff]
    %v2994 = vld [vmem:[#allocation4 + $0x98] sm:$0xff]
    %3014 = vrot.lane.b32.xlu0 %v2976, 126
    %v3015 = vpop.permute.xlu0 %3014
    %3016 = vrot.lane.b32.xlu0 %v2977, 126
    %v3017 = vpop.permute.xlu0 %3016
    %3018 = vrot.lane.b32.xlu0 %v2978, 126
    %v3019 = vpop.permute.xlu0 %3018
    %3020 = vrot.lane.b32.xlu0 %v2979, 126
    %v3021 = vpop.permute.xlu0 %3020
    %3022 = vrot.lane.b32.xlu0 %v2980, 126
    %v3023 = vpop.permute.xlu0 %3022
    %3024 = vrot.lane.b32.xlu0 %v2981, 126
    %v3025 = vpop.permute.xlu0 %3024
    %3026 = vrot.lane.b32.xlu0 %v2982, 126
    %v3027 = vpop.permute.xlu0 %3026
    %3028 = vrot.lane.b32.xlu0 %v2983, 126
    %v3029 = vpop.permute.xlu0 %3028
    %3030 = vrot.lane.b32.xlu0 %v2984, 126
    %v3031 = vpop.permute.xlu0 %3030
    %3032 = vrot.lane.b32.xlu0 %v2985, 126
    %v3033 = vpop.permute.xlu0 %3032
    %3034 = vrot.lane.b32.xlu0 %v2986, 126
    %v3035 = vpop.permute.xlu0 %3034
    %3036 = vrot.lane.b32.xlu0 %v2987, 126
    %v3037 = vpop.permute.xlu0 %3036
    %3038 = vrot.lane.b32.xlu0 %v2988, 126
    %v3039 = vpop.permute.xlu0 %3038
    %3040 = vrot.lane.b32.xlu0 %v2989, 126
    %v3041 = vpop.permute.xlu0 %3040
    %3042 = vrot.lane.b32.xlu0 %v2990, 126
    %v3043 = vpop.permute.xlu0 %3042
    %3044 = vrot.lane.b32.xlu0 %v2991, 126
    %v3045 = vpop.permute.xlu0 %3044
    %3046 = vrot.lane.b32.xlu0 %v2992, 126
    %v3047 = vpop.permute.xlu0 %3046
    %3048 = vrot.lane.b32.xlu0 %v2993, 126
    %v3049 = vpop.permute.xlu0 %3048
    %3050 = vrot.lane.b32.xlu0 %v2994, 126
    %v3051 = vpop.permute.xlu0 %3050
    %v3052 = vsel %vm415, %v3015, %v3017
    %v3053 = vsel %vm415, %v3017, %v3019
    %v3054 = vsel %vm415, %v3019, %v3021
    %v3055 = vsel %vm415, %v3021, %v3023
    %v3056 = vsel %vm415, %v3023, %v3025
    %v3057 = vsel %vm415, %v3025, %v3027
    %v3058 = vsel %vm415, %v3027, %v3029
    %v3059 = vsel %vm415, %v3029, %v3031
    %v3060 = vsel %vm415, %v3031, %v3033
    %v3061 = vsel %vm415, %v3033, %v3035
    %v3062 = vsel %vm415, %v3035, %v3037
    %v3063 = vsel %vm415, %v3037, %v3039
    %v3064 = vsel %vm415, %v3039, %v3041
    %v3065 = vsel %vm415, %v3041, %v3043
    %v3066 = vsel %vm415, %v3043, %v3045
    %v3067 = vsel %vm415, %v3045, %v3047
    %v3068 = vsel %vm415, %v3047, %v3049
    %v3069 = vsel %vm415, %v3049, %v3051
    %3088 = vst [vmem:[#allocation5 + $0x3f0] sm:$0xff] %v3052
    %3089 = vst [vmem:[#allocation5 + $0x3f8] sm:$0xff] %v3053
    %3090 = vst [vmem:[#allocation5 + $0x400] sm:$0xff] %v3054
    %3091 = vst [vmem:[#allocation5 + $0x408] sm:$0xff] %v3055
    %3092 = vst [vmem:[#allocation5 + $0x410] sm:$0xff] %v3056
    %3093 = vst [vmem:[#allocation5 + $0x418] sm:$0xff] %v3057
    %3094 = vst [vmem:[#allocation5 + $0x420] sm:$0xff] %v3058
    %3095 = vst [vmem:[#allocation5 + $0x428] sm:$0xff] %v3059
    %3096 = vst [vmem:[#allocation5 + $0x430] sm:$0xff] %v3060
    %3097 = vst [vmem:[#allocation5 + $0x438] sm:$0xff] %v3061
    %3098 = vst [vmem:[#allocation5 + $0x440] sm:$0xff] %v3062
    %3099 = vst [vmem:[#allocation5 + $0x448] sm:$0xff] %v3063
    %3100 = vst [vmem:[#allocation5 + $0x450] sm:$0xff] %v3064
    %3101 = vst [vmem:[#allocation5 + $0x458] sm:$0xff] %v3065
    %3102 = vst [vmem:[#allocation5 + $0x460] sm:$0xff] %v3066
    %3103 = vst [vmem:[#allocation5 + $0x468] sm:$0xff] %v3067
    %3104 = vst [vmem:[#allocation5 + $0x470] sm:$0xff] %v3068
    %3105 = vst [vmem:[#allocation5 + $0x478] sm:$0xff] %v3069
    %v3106 = vld [vmem:[#allocation4 + $0x8] sm:$0xff]
    %v3107 = vld [vmem:[#allocation4 + $0x10] sm:$0xff]
    %v3108 = vld [vmem:[#allocation4 + $0x18] sm:$0xff]
    %v3109 = vld [vmem:[#allocation4 + $0x20] sm:$0xff]
    %v3110 = vld [vmem:[#allocation4 + $0x28] sm:$0xff]
    %v3111 = vld [vmem:[#allocation4 + $0x30] sm:$0xff]
    %v3112 = vld [vmem:[#allocation4 + $0x38] sm:$0xff]
    %v3113 = vld [vmem:[#allocation4 + $0x40] sm:$0xff]
    %v3114 = vld [vmem:[#allocation4 + $0x48] sm:$0xff]
    %v3115 = vld [vmem:[#allocation4 + $0x50] sm:$0xff]
    %v3116 = vld [vmem:[#allocation4 + $0x58] sm:$0xff]
    %v3117 = vld [vmem:[#allocation4 + $0x60] sm:$0xff]
    %v3118 = vld [vmem:[#allocation4 + $0x68] sm:$0xff]
    %v3119 = vld [vmem:[#allocation4 + $0x70] sm:$0xff]
    %v3120 = vld [vmem:[#allocation4 + $0x78] sm:$0xff]
    %v3121 = vld [vmem:[#allocation4 + $0x80] sm:$0xff]
    %v3122 = vld [vmem:[#allocation4 + $0x88] sm:$0xff]
    %v3123 = vld [vmem:[#allocation4 + $0x90] sm:$0xff]
    %v3124 = vld [vmem:[#allocation4 + $0x98] sm:$0xff]
    %3144 = vrot.lane.b32.xlu0 %v3106, 124
    %v3145 = vpop.permute.xlu0 %3144
    %3146 = vrot.lane.b32.xlu0 %v3107, 124
    %v3147 = vpop.permute.xlu0 %3146
    %3148 = vrot.lane.b32.xlu0 %v3108, 124
    %v3149 = vpop.permute.xlu0 %3148
    %3150 = vrot.lane.b32.xlu0 %v3109, 124
    %v3151 = vpop.permute.xlu0 %3150
    %3152 = vrot.lane.b32.xlu0 %v3110, 124
    %v3153 = vpop.permute.xlu0 %3152
    %3154 = vrot.lane.b32.xlu0 %v3111, 124
    %v3155 = vpop.permute.xlu0 %3154
    %3156 = vrot.lane.b32.xlu0 %v3112, 124
    %v3157 = vpop.permute.xlu0 %3156
    %3158 = vrot.lane.b32.xlu0 %v3113, 124
    %v3159 = vpop.permute.xlu0 %3158
    %3160 = vrot.lane.b32.xlu0 %v3114, 124
    %v3161 = vpop.permute.xlu0 %3160
    %3162 = vrot.lane.b32.xlu0 %v3115, 124
    %v3163 = vpop.permute.xlu0 %3162
    %3164 = vrot.lane.b32.xlu0 %v3116, 124
    %v3165 = vpop.permute.xlu0 %3164
    %3166 = vrot.lane.b32.xlu0 %v3117, 124
    %v3167 = vpop.permute.xlu0 %3166
    %3168 = vrot.lane.b32.xlu0 %v3118, 124
    %v3169 = vpop.permute.xlu0 %3168
    %3170 = vrot.lane.b32.xlu0 %v3119, 124
    %v3171 = vpop.permute.xlu0 %3170
    %3172 = vrot.lane.b32.xlu0 %v3120, 124
    %v3173 = vpop.permute.xlu0 %3172
    %3174 = vrot.lane.b32.xlu0 %v3121, 124
    %v3175 = vpop.permute.xlu0 %3174
    %3176 = vrot.lane.b32.xlu0 %v3122, 124
    %v3177 = vpop.permute.xlu0 %3176
    %3178 = vrot.lane.b32.xlu0 %v3123, 124
    %v3179 = vpop.permute.xlu0 %3178
    %3180 = vrot.lane.b32.xlu0 %v3124, 124
    %v3181 = vpop.permute.xlu0 %3180
    %v3182 = vsel %vm2494, %v3145, %v3147
    %v3183 = vsel %vm2494, %v3147, %v3149
    %v3184 = vsel %vm2494, %v3149, %v3151
    %v3185 = vsel %vm2494, %v3151, %v3153
    %v3186 = vsel %vm2494, %v3153, %v3155
    %v3187 = vsel %vm2494, %v3155, %v3157
    %v3188 = vsel %vm2494, %v3157, %v3159
    %v3189 = vsel %vm2494, %v3159, %v3161
    %v3190 = vsel %vm2494, %v3161, %v3163
    %v3191 = vsel %vm2494, %v3163, %v3165
    %v3192 = vsel %vm2494, %v3165, %v3167
    %v3193 = vsel %vm2494, %v3167, %v3169
    %v3194 = vsel %vm2494, %v3169, %v3171
    %v3195 = vsel %vm2494, %v3171, %v3173
    %v3196 = vsel %vm2494, %v3173, %v3175
    %v3197 = vsel %vm2494, %v3175, %v3177
    %v3198 = vsel %vm2494, %v3177, %v3179
    %v3199 = vsel %vm2494, %v3179, %v3181
    %3218 = vst [vmem:[#allocation5 + $0x480] sm:$0xff] %v3182
    %3219 = vst [vmem:[#allocation5 + $0x488] sm:$0xff] %v3183
    %3220 = vst [vmem:[#allocation5 + $0x490] sm:$0xff] %v3184
    %3221 = vst [vmem:[#allocation5 + $0x498] sm:$0xff] %v3185
    %3222 = vst [vmem:[#allocation5 + $0x4a0] sm:$0xff] %v3186
    %3223 = vst [vmem:[#allocation5 + $0x4a8] sm:$0xff] %v3187
    %3224 = vst [vmem:[#allocation5 + $0x4b0] sm:$0xff] %v3188
    %3225 = vst [vmem:[#allocation5 + $0x4b8] sm:$0xff] %v3189
    %3226 = vst [vmem:[#allocation5 + $0x4c0] sm:$0xff] %v3190
    %3227 = vst [vmem:[#allocation5 + $0x4c8] sm:$0xff] %v3191
    %3228 = vst [vmem:[#allocation5 + $0x4d0] sm:$0xff] %v3192
    %3229 = vst [vmem:[#allocation5 + $0x4d8] sm:$0xff] %v3193
    %3230 = vst [vmem:[#allocation5 + $0x4e0] sm:$0xff] %v3194
    %3231 = vst [vmem:[#allocation5 + $0x4e8] sm:$0xff] %v3195
    %3232 = vst [vmem:[#allocation5 + $0x4f0] sm:$0xff] %v3196
    %3233 = vst [vmem:[#allocation5 + $0x4f8] sm:$0xff] %v3197
    %3234 = vst [vmem:[#allocation5 + $0x500] sm:$0xff] %v3198
    %3235 = vst [vmem:[#allocation5 + $0x508] sm:$0xff] %v3199
    %v3236 = vld [vmem:[%s3] sm:$0xff]
    %v3237 = vld [vmem:[%s3 + $0x8] sm:$0xff]
    %v3238 = vld [vmem:[#allocation5] sm:$0xff]
    %v3239 = vld [vmem:[#allocation5 + $0x8] sm:$0xff]
    %v3240 = vld [vmem:[#allocation5 + $0x10] sm:$0xff]
    %v3241 = vld [vmem:[#allocation5 + $0x18] sm:$0xff]
    %v3242 = vld [vmem:[#allocation5 + $0x20] sm:$0xff]
    %v3243 = vld [vmem:[#allocation5 + $0x28] sm:$0xff]
    %v3244 = vld [vmem:[#allocation5 + $0x30] sm:$0xff]
    %v3245 = vld [vmem:[#allocation5 + $0x38] sm:$0xff]
    %v3246 = vld [vmem:[#allocation5 + $0x40] sm:$0xff]
    %v3247 = vld [vmem:[#allocation5 + $0x48] sm:$0xff]
    %v3248 = vld [vmem:[#allocation5 + $0x50] sm:$0xff]
    %v3249 = vld [vmem:[#allocation5 + $0x58] sm:$0xff]
    %v3250 = vld [vmem:[#allocation5 + $0x60] sm:$0xff]
    %v3251 = vld [vmem:[#allocation5 + $0x68] sm:$0xff]
    %v3252 = vld [vmem:[#allocation5 + $0x70] sm:$0xff]
    %v3253 = vld [vmem:[#allocation5 + $0x78] sm:$0xff]
    %v3254 = vld [vmem:[#allocation5 + $0x80] sm:$0xff]
    %v3255 = vld [vmem:[#allocation5 + $0x88] sm:$0xff]
    %v3256 = vld [vmem:[#allocation5 + $0x90] sm:$0xff]
    %v3257 = vld [vmem:[#allocation5 + $0x98] sm:$0xff]
    %v3258 = vld [vmem:[#allocation5 + $0xa0] sm:$0xff]
    %v3259 = vld [vmem:[#allocation5 + $0xa8] sm:$0xff]
    %v3260 = vld [vmem:[#allocation5 + $0xb0] sm:$0xff]
    %v3261 = vld [vmem:[#allocation5 + $0xb8] sm:$0xff]
    %v3262 = vld [vmem:[#allocation5 + $0xc0] sm:$0xff]
    %v3263 = vld [vmem:[#allocation5 + $0xc8] sm:$0xff]
    %v3264 = vld [vmem:[#allocation5 + $0xd0] sm:$0xff]
    %v3265 = vld [vmem:[#allocation5 + $0xd8] sm:$0xff]
    %v3266 = vld [vmem:[#allocation5 + $0xe0] sm:$0xff]
    %v3267 = vld [vmem:[#allocation5 + $0xe8] sm:$0xff]
    %v3268 = vld [vmem:[#allocation5 + $0xf0] sm:$0xff]
    %v3269 = vld [vmem:[#allocation5 + $0xf8] sm:$0xff]
    %v3270 = vld [vmem:[#allocation5 + $0x100] sm:$0xff]
    %v3271 = vld [vmem:[#allocation5 + $0x108] sm:$0xff]
    %v3272 = vld [vmem:[#allocation5 + $0x110] sm:$0xff]
    %v3273 = vld [vmem:[#allocation5 + $0x118] sm:$0xff]
    %v3274 = vld [vmem:[#allocation5 + $0x120] sm:$0xff]
    %v3275 = vld [vmem:[#allocation5 + $0x128] sm:$0xff]
    %v3276 = vld [vmem:[#allocation5 + $0x130] sm:$0xff]
    %v3277 = vld [vmem:[#allocation5 + $0x138] sm:$0xff]
    %v3278 = vld [vmem:[#allocation5 + $0x140] sm:$0xff]
    %v3279 = vld [vmem:[#allocation5 + $0x148] sm:$0xff]
    %v3280 = vld [vmem:[#allocation5 + $0x150] sm:$0xff]
    %v3281 = vld [vmem:[#allocation5 + $0x158] sm:$0xff]
    %v3282 = vld [vmem:[#allocation5 + $0x160] sm:$0xff]
    %v3283 = vld [vmem:[#allocation5 + $0x168] sm:$0xff]
    %v3284 = vld [vmem:[#allocation5 + $0x170] sm:$0xff]
    %v3285 = vld [vmem:[#allocation5 + $0x178] sm:$0xff]
    %v3286 = vld [vmem:[#allocation5 + $0x180] sm:$0xff]
    %v3287 = vld [vmem:[#allocation5 + $0x188] sm:$0xff]
    %v3288 = vld [vmem:[#allocation5 + $0x190] sm:$0xff]
    %v3289 = vld [vmem:[#allocation5 + $0x198] sm:$0xff]
    %v3290 = vld [vmem:[#allocation5 + $0x1a0] sm:$0xff]
    %v3291 = vld [vmem:[#allocation5 + $0x1a8] sm:$0xff]
    %v3292 = vld [vmem:[#allocation5 + $0x1b0] sm:$0xff]
    %v3293 = vld [vmem:[#allocation5 + $0x1b8] sm:$0xff]
    %v3294 = vld [vmem:[#allocation5 + $0x1c0] sm:$0xff]
    %v3295 = vld [vmem:[#allocation5 + $0x1c8] sm:$0xff]
    %v3296 = vld [vmem:[#allocation5 + $0x1d0] sm:$0xff]
    %v3297 = vld [vmem:[#allocation5 + $0x1d8] sm:$0xff]
    %v3298 = vld [vmem:[#allocation5 + $0x1e0] sm:$0xff]
    %v3299 = vld [vmem:[#allocation5 + $0x1e8] sm:$0xff]
    %v3300 = vld [vmem:[#allocation5 + $0x1f0] sm:$0xff]
    %v3301 = vld [vmem:[#allocation5 + $0x1f8] sm:$0xff]
    %v3302 = vld [vmem:[#allocation5 + $0x200] sm:$0xff]
    %v3303 = vld [vmem:[#allocation5 + $0x208] sm:$0xff]
    %v3304 = vld [vmem:[#allocation5 + $0x210] sm:$0xff]
    %v3305 = vld [vmem:[#allocation5 + $0x218] sm:$0xff]
    %v3306 = vld [vmem:[#allocation5 + $0x220] sm:$0xff]
    %v3307 = vld [vmem:[#allocation5 + $0x228] sm:$0xff]
    %v3308 = vld [vmem:[#allocation5 + $0x230] sm:$0xff]
    %v3309 = vld [vmem:[#allocation5 + $0x238] sm:$0xff]
    %v3310 = vld [vmem:[#allocation5 + $0x240] sm:$0xff]
    %v3311 = vld [vmem:[#allocation5 + $0x248] sm:$0xff]
    %v3312 = vld [vmem:[#allocation5 + $0x250] sm:$0xff]
    %v3313 = vld [vmem:[#allocation5 + $0x258] sm:$0xff]
    %v3314 = vld [vmem:[#allocation5 + $0x260] sm:$0xff]
    %v3315 = vld [vmem:[#allocation5 + $0x268] sm:$0xff]
    %v3316 = vld [vmem:[#allocation5 + $0x270] sm:$0xff]
    %v3317 = vld [vmem:[#allocation5 + $0x278] sm:$0xff]
    %v3318 = vld [vmem:[#allocation5 + $0x280] sm:$0xff]
    %v3319 = vld [vmem:[#allocation5 + $0x288] sm:$0xff]
    %v3320 = vld [vmem:[#allocation5 + $0x290] sm:$0xff]
    %v3321 = vld [vmem:[#allocation5 + $0x298] sm:$0xff]
    %v3322 = vld [vmem:[#allocation5 + $0x2a0] sm:$0xff]
    %v3323 = vld [vmem:[#allocation5 + $0x2a8] sm:$0xff]
    %v3324 = vld [vmem:[#allocation5 + $0x2b0] sm:$0xff]
    %v3325 = vld [vmem:[#allocation5 + $0x2b8] sm:$0xff]
    %v3326 = vld [vmem:[#allocation5 + $0x2c0] sm:$0xff]
    %v3327 = vld [vmem:[#allocation5 + $0x2c8] sm:$0xff]
    %v3328 = vld [vmem:[#allocation5 + $0x2d0] sm:$0xff]
    %v3329 = vld [vmem:[#allocation5 + $0x2d8] sm:$0xff]
    %v3330 = vld [vmem:[#allocation5 + $0x2e0] sm:$0xff]
    %v3331 = vld [vmem:[#allocation5 + $0x2e8] sm:$0xff]
    %v3332 = vld [vmem:[#allocation5 + $0x2f0] sm:$0xff]
    %v3333 = vld [vmem:[#allocation5 + $0x2f8] sm:$0xff]
    %v3334 = vld [vmem:[#allocation5 + $0x300] sm:$0xff]
    %v3335 = vld [vmem:[#allocation5 + $0x308] sm:$0xff]
    %v3336 = vld [vmem:[#allocation5 + $0x310] sm:$0xff]
    %v3337 = vld [vmem:[#allocation5 + $0x318] sm:$0xff]
    %v3338 = vld [vmem:[#allocation5 + $0x320] sm:$0xff]
    %v3339 = vld [vmem:[#allocation5 + $0x328] sm:$0xff]
    %v3340 = vld [vmem:[#allocation5 + $0x330] sm:$0xff]
    %v3341 = vld [vmem:[#allocation5 + $0x338] sm:$0xff]
    %v3342 = vld [vmem:[#allocation5 + $0x340] sm:$0xff]
    %v3343 = vld [vmem:[#allocation5 + $0x348] sm:$0xff]
    %v3344 = vld [vmem:[#allocation5 + $0x350] sm:$0xff]
    %v3345 = vld [vmem:[#allocation5 + $0x358] sm:$0xff]
    %v3346 = vld [vmem:[#allocation5 + $0x360] sm:$0xff]
    %v3347 = vld [vmem:[#allocation5 + $0x368] sm:$0xff]
    %v3348 = vld [vmem:[#allocation5 + $0x370] sm:$0xff]
    %v3349 = vld [vmem:[#allocation5 + $0x378] sm:$0xff]
    %v3350 = vld [vmem:[#allocation5 + $0x380] sm:$0xff]
    %v3351 = vld [vmem:[#allocation5 + $0x388] sm:$0xff]
    %v3352 = vld [vmem:[#allocation5 + $0x390] sm:$0xff]
    %v3353 = vld [vmem:[#allocation5 + $0x398] sm:$0xff]
    %v3354 = vld [vmem:[#allocation5 + $0x3a0] sm:$0xff]
    %v3355 = vld [vmem:[#allocation5 + $0x3a8] sm:$0xff]
    %v3356 = vld [vmem:[#allocation5 + $0x3b0] sm:$0xff]
    %v3357 = vld [vmem:[#allocation5 + $0x3b8] sm:$0xff]
    %v3358 = vld [vmem:[#allocation5 + $0x3c0] sm:$0xff]
    %v3359 = vld [vmem:[#allocation5 + $0x3c8] sm:$0xff]
    %v3360 = vld [vmem:[#allocation5 + $0x3d0] sm:$0xff]
    %v3361 = vld [vmem:[#allocation5 + $0x3d8] sm:$0xff]
    %v3362 = vld [vmem:[#allocation5 + $0x3e0] sm:$0xff]
    %v3363 = vld [vmem:[#allocation5 + $0x3e8] sm:$0xff]
    %v3364 = vld [vmem:[#allocation5 + $0x3f0] sm:$0xff]
    %v3365 = vld [vmem:[#allocation5 + $0x3f8] sm:$0xff]
    %v3366 = vld [vmem:[#allocation5 + $0x400] sm:$0xff]
    %v3367 = vld [vmem:[#allocation5 + $0x408] sm:$0xff]
    %v3368 = vld [vmem:[#allocation5 + $0x410] sm:$0xff]
    %v3369 = vld [vmem:[#allocation5 + $0x418] sm:$0xff]
    %v3370 = vld [vmem:[#allocation5 + $0x420] sm:$0xff]
    %v3371 = vld [vmem:[#allocation5 + $0x428] sm:$0xff]
    %v3372 = vld [vmem:[#allocation5 + $0x430] sm:$0xff]
    %v3373 = vld [vmem:[#allocation5 + $0x438] sm:$0xff]
    %v3374 = vld [vmem:[#allocation5 + $0x440] sm:$0xff]
    %v3375 = vld [vmem:[#allocation5 + $0x448] sm:$0xff]
    %v3376 = vld [vmem:[#allocation5 + $0x450] sm:$0xff]
    %v3377 = vld [vmem:[#allocation5 + $0x458] sm:$0xff]
    %v3378 = vld [vmem:[#allocation5 + $0x460] sm:$0xff]
    %v3379 = vld [vmem:[#allocation5 + $0x468] sm:$0xff]
    %v3380 = vld [vmem:[#allocation5 + $0x470] sm:$0xff]
    %v3381 = vld [vmem:[#allocation5 + $0x478] sm:$0xff]
    %v3382 = vld [vmem:[#allocation5 + $0x480] sm:$0xff]
    %v3383 = vld [vmem:[#allocation5 + $0x488] sm:$0xff]
    %v3384 = vld [vmem:[#allocation5 + $0x490] sm:$0xff]
    %v3385 = vld [vmem:[#allocation5 + $0x498] sm:$0xff]
    %v3386 = vld [vmem:[#allocation5 + $0x4a0] sm:$0xff]
    %v3387 = vld [vmem:[#allocation5 + $0x4a8] sm:$0xff]
    %v3388 = vld [vmem:[#allocation5 + $0x4b0] sm:$0xff]
    %v3389 = vld [vmem:[#allocation5 + $0x4b8] sm:$0xff]
    %v3390 = vld [vmem:[#allocation5 + $0x4c0] sm:$0xff]
    %v3391 = vld [vmem:[#allocation5 + $0x4c8] sm:$0xff]
    %v3392 = vld [vmem:[#allocation5 + $0x4d0] sm:$0xff]
    %v3393 = vld [vmem:[#allocation5 + $0x4d8] sm:$0xff]
    %v3394 = vld [vmem:[#allocation5 + $0x4e0] sm:$0xff]
    %v3395 = vld [vmem:[#allocation5 + $0x4e8] sm:$0xff]
    %v3396 = vld [vmem:[#allocation5 + $0x4f0] sm:$0xff]
    %v3397 = vld [vmem:[#allocation5 + $0x4f8] sm:$0xff]
    %v3398 = vld [vmem:[#allocation5 + $0x500] sm:$0xff]
    %v3399 = vld [vmem:[#allocation5 + $0x508] sm:$0xff]
    %v3400 = vld [vmem:[%s4] sm:$0xff]
    %v3401 = vld [vmem:[%s4 + $0x8] sm:$0xff]
    %3403 = vset.pattern.permute.xlu0 0
    %3404 = vperm.xlu0 %3403, %v3400
    %v3405 = vpop.permute.xlu0 %3404
    %3408 = vset.pattern.permute.xlu0 0
    %3409 = vperm.xlu0 %3408, %v3401
    %v3410 = vpop.permute.xlu0 %3409
    %vm3412 = vcmask 588800
    %v3414 = vsel %vm3412, %v3236, 0
    %v3417 = vsel %vm3412, %v3237, 0
    %3419 = vmatpush.msra.mxu0 0.0
    %3420 = vmatpush.msra.mxu0 0.0
    %3421 = vmatpush.msra.mxu0 0.0
    %3422 = vmatpush.msra.mxu0 0.0
    %3423 = vmatpush.msra.mxu0 0.0
    %3424 = vmatpush.msra.mxu0 0.0
    %3425 = vmatpush.msra.mxu0 0.0
    %3426 = vmatpush.msra.mxu0 %v3382
    %3427 = vmatpush.msra.mxu0 %v3364
    %3428 = vmatpush.msra.mxu0 %v3346
    %3429 = vmatpush.msra.mxu0 %v3328
    %3430 = vmatpush.msra.mxu0 %v3310
    %3431 = vmatpush.msra.mxu0 %v3292
    %3432 = vmatpush.msra.mxu0 %v3274
    %3433 = vmatpush.msra.mxu0 %v3256
    %3434 = vmatpush.msra.mxu0 %v3238
    %3435 = vmatmul.f32.gmra.mxu0 %v3414
    %v3436 = vpop.f32.mrf.mxu0
    %v3437 = vadd.f32 %v3405, %v3436
    %3438 = vmatmul.f32.gmra.mxu0 %v3417
    %v3439 = vpop.f32.mrf.mxu0
    %v3440 = vadd.f32 %v3410, %v3439
    %3441 = vdwg.mxu0
    %3442 = vmatpush.msra.mxu0 0.0
    %3443 = vmatpush.msra.mxu0 0.0
    %3444 = vmatpush.msra.mxu0 0.0
    %3445 = vmatpush.msra.mxu0 0.0
    %3446 = vmatpush.msra.mxu0 0.0
    %3447 = vmatpush.msra.mxu0 0.0
    %3448 = vmatpush.msra.mxu0 0.0
    %3449 = vmatpush.msra.mxu0 %v3383
    %3450 = vmatpush.msra.mxu0 %v3365
    %3451 = vmatpush.msra.mxu0 %v3347
    %3452 = vmatpush.msra.mxu0 %v3329
    %3453 = vmatpush.msra.mxu0 %v3311
    %3454 = vmatpush.msra.mxu0 %v3293
    %3455 = vmatpush.msra.mxu0 %v3275
    %3456 = vmatpush.msra.mxu0 %v3257
    %3457 = vmatpush.msra.mxu0 %v3239
    %3458 = vmatmul.f32.gmra.mxu0 %v3414
    %v3459 = vpop.f32.mrf.mxu0
    %v3460 = vadd.f32 %v3405, %v3459
    %3461 = vmatmul.f32.gmra.mxu0 %v3417
    %v3462 = vpop.f32.mrf.mxu0
    %v3463 = vadd.f32 %v3410, %v3462
    %3464 = vdwg.mxu0
    %3465 = vmatpush.msra.mxu0 0.0
    %3466 = vmatpush.msra.mxu0 0.0
    %3467 = vmatpush.msra.mxu0 0.0
    %3468 = vmatpush.msra.mxu0 0.0
    %3469 = vmatpush.msra.mxu0 0.0
    %3470 = vmatpush.msra.mxu0 0.0
    %3471 = vmatpush.msra.mxu0 0.0
    %3472 = vmatpush.msra.mxu0 %v3384
    %3473 = vmatpush.msra.mxu0 %v3366
    %3474 = vmatpush.msra.mxu0 %v3348
    %3475 = vmatpush.msra.mxu0 %v3330
    %3476 = vmatpush.msra.mxu0 %v3312
    %3477 = vmatpush.msra.mxu0 %v3294
    %3478 = vmatpush.msra.mxu0 %v3276
    %3479 = vmatpush.msra.mxu0 %v3258
    %3480 = vmatpush.msra.mxu0 %v3240
    %3481 = vmatmul.f32.gmra.mxu0 %v3414
    %v3482 = vpop.f32.mrf.mxu0
    %v3483 = vadd.f32 %v3405, %v3482
    %3484 = vmatmul.f32.gmra.mxu0 %v3417
    %v3485 = vpop.f32.mrf.mxu0
    %v3486 = vadd.f32 %v3410, %v3485
    %3487 = vdwg.mxu0
    %3488 = vmatpush.msra.mxu0 0.0
    %3489 = vmatpush.msra.mxu0 0.0
    %3490 = vmatpush.msra.mxu0 0.0
    %3491 = vmatpush.msra.mxu0 0.0
    %3492 = vmatpush.msra.mxu0 0.0
    %3493 = vmatpush.msra.mxu0 0.0
    %3494 = vmatpush.msra.mxu0 0.0
    %3495 = vmatpush.msra.mxu0 %v3385
    %3496 = vmatpush.msra.mxu0 %v3367
    %3497 = vmatpush.msra.mxu0 %v3349
    %3498 = vmatpush.msra.mxu0 %v3331
    %3499 = vmatpush.msra.mxu0 %v3313
    %3500 = vmatpush.msra.mxu0 %v3295
    %3501 = vmatpush.msra.mxu0 %v3277
    %3502 = vmatpush.msra.mxu0 %v3259
    %3503 = vmatpush.msra.mxu0 %v3241
    %3504 = vmatmul.f32.gmra.mxu0 %v3414
    %v3505 = vpop.f32.mrf.mxu0
    %v3506 = vadd.f32 %v3405, %v3505
    %3507 = vmatmul.f32.gmra.mxu0 %v3417
    %v3508 = vpop.f32.mrf.mxu0
    %v3509 = vadd.f32 %v3410, %v3508
    %3510 = vdwg.mxu0
    %3511 = vmatpush.msra.mxu0 0.0
    %3512 = vmatpush.msra.mxu0 0.0
    %3513 = vmatpush.msra.mxu0 0.0
    %3514 = vmatpush.msra.mxu0 0.0
    %3515 = vmatpush.msra.mxu0 0.0
    %3516 = vmatpush.msra.mxu0 0.0
    %3517 = vmatpush.msra.mxu0 0.0
    %3518 = vmatpush.msra.mxu0 %v3386
    %3519 = vmatpush.msra.mxu0 %v3368
    %3520 = vmatpush.msra.mxu0 %v3350
    %3521 = vmatpush.msra.mxu0 %v3332
    %3522 = vmatpush.msra.mxu0 %v3314
    %3523 = vmatpush.msra.mxu0 %v3296
    %3524 = vmatpush.msra.mxu0 %v3278
    %3525 = vmatpush.msra.mxu0 %v3260
    %3526 = vmatpush.msra.mxu0 %v3242
    %3527 = vmatmul.f32.gmra.mxu0 %v3414
    %v3528 = vpop.f32.mrf.mxu0
    %v3529 = vadd.f32 %v3405, %v3528
    %3530 = vmatmul.f32.gmra.mxu0 %v3417
    %v3531 = vpop.f32.mrf.mxu0
    %v3532 = vadd.f32 %v3410, %v3531
    %3533 = vdwg.mxu0
    %3534 = vmatpush.msra.mxu0 0.0
    %3535 = vmatpush.msra.mxu0 0.0
    %3536 = vmatpush.msra.mxu0 0.0
    %3537 = vmatpush.msra.mxu0 0.0
    %3538 = vmatpush.msra.mxu0 0.0
    %3539 = vmatpush.msra.mxu0 0.0
    %3540 = vmatpush.msra.mxu0 0.0
    %3541 = vmatpush.msra.mxu0 %v3387
    %3542 = vmatpush.msra.mxu0 %v3369
    %3543 = vmatpush.msra.mxu0 %v3351
    %3544 = vmatpush.msra.mxu0 %v3333
    %3545 = vmatpush.msra.mxu0 %v3315
    %3546 = vmatpush.msra.mxu0 %v3297
    %3547 = vmatpush.msra.mxu0 %v3279
    %3548 = vmatpush.msra.mxu0 %v3261
    %3549 = vmatpush.msra.mxu0 %v3243
    %3550 = vmatmul.f32.gmra.mxu0 %v3414
    %v3551 = vpop.f32.mrf.mxu0
    %v3552 = vadd.f32 %v3405, %v3551
    %3553 = vmatmul.f32.gmra.mxu0 %v3417
    %v3554 = vpop.f32.mrf.mxu0
    %v3555 = vadd.f32 %v3410, %v3554
    %3556 = vdwg.mxu0
    %3557 = vmatpush.msra.mxu0 0.0
    %3558 = vmatpush.msra.mxu0 0.0
    %3559 = vmatpush.msra.mxu0 0.0
    %3560 = vmatpush.msra.mxu0 0.0
    %3561 = vmatpush.msra.mxu0 0.0
    %3562 = vmatpush.msra.mxu0 0.0
    %3563 = vmatpush.msra.mxu0 0.0
    %3564 = vmatpush.msra.mxu0 %v3388
    %3565 = vmatpush.msra.mxu0 %v3370
    %3566 = vmatpush.msra.mxu0 %v3352
    %3567 = vmatpush.msra.mxu0 %v3334
    %3568 = vmatpush.msra.mxu0 %v3316
    %3569 = vmatpush.msra.mxu0 %v3298
    %3570 = vmatpush.msra.mxu0 %v3280
    %3571 = vmatpush.msra.mxu0 %v3262
    %3572 = vmatpush.msra.mxu0 %v3244
    %3573 = vmatmul.f32.gmra.mxu0 %v3414
    %v3574 = vpop.f32.mrf.mxu0
    %v3575 = vadd.f32 %v3405, %v3574
    %3576 = vmatmul.f32.gmra.mxu0 %v3417
    %v3577 = vpop.f32.mrf.mxu0
    %v3578 = vadd.f32 %v3410, %v3577
    %3579 = vdwg.mxu0
    %3580 = vmatpush.msra.mxu0 0.0
    %3581 = vmatpush.msra.mxu0 0.0
    %3582 = vmatpush.msra.mxu0 0.0
    %3583 = vmatpush.msra.mxu0 0.0
    %3584 = vmatpush.msra.mxu0 0.0
    %3585 = vmatpush.msra.mxu0 0.0
    %3586 = vmatpush.msra.mxu0 0.0
    %3587 = vmatpush.msra.mxu0 %v3389
    %3588 = vmatpush.msra.mxu0 %v3371
    %3589 = vmatpush.msra.mxu0 %v3353
    %3590 = vmatpush.msra.mxu0 %v3335
    %3591 = vmatpush.msra.mxu0 %v3317
    %3592 = vmatpush.msra.mxu0 %v3299
    %3593 = vmatpush.msra.mxu0 %v3281
    %3594 = vmatpush.msra.mxu0 %v3263
    %3595 = vmatpush.msra.mxu0 %v3245
    %3596 = vmatmul.f32.gmra.mxu0 %v3414
    %v3597 = vpop.f32.mrf.mxu0
    %v3598 = vadd.f32 %v3405, %v3597
    %3599 = vmatmul.f32.gmra.mxu0 %v3417
    %v3600 = vpop.f32.mrf.mxu0
    %v3601 = vadd.f32 %v3410, %v3600
    %3602 = vdwg.mxu0
    %3603 = vmatpush.msra.mxu0 0.0
    %3604 = vmatpush.msra.mxu0 0.0
    %3605 = vmatpush.msra.mxu0 0.0
    %3606 = vmatpush.msra.mxu0 0.0
    %3607 = vmatpush.msra.mxu0 0.0
    %3608 = vmatpush.msra.mxu0 0.0
    %3609 = vmatpush.msra.mxu0 0.0
    %3610 = vmatpush.msra.mxu0 %v3390
    %3611 = vmatpush.msra.mxu0 %v3372
    %3612 = vmatpush.msra.mxu0 %v3354
    %3613 = vmatpush.msra.mxu0 %v3336
    %3614 = vmatpush.msra.mxu0 %v3318
    %3615 = vmatpush.msra.mxu0 %v3300
    %3616 = vmatpush.msra.mxu0 %v3282
    %3617 = vmatpush.msra.mxu0 %v3264
    %3618 = vmatpush.msra.mxu0 %v3246
    %3619 = vmatmul.f32.gmra.mxu0 %v3414
    %v3620 = vpop.f32.mrf.mxu0
    %v3621 = vadd.f32 %v3405, %v3620
    %3622 = vmatmul.f32.gmra.mxu0 %v3417
    %v3623 = vpop.f32.mrf.mxu0
    %v3624 = vadd.f32 %v3410, %v3623
    %3625 = vdwg.mxu0
    %3626 = vmatpush.msra.mxu0 0.0
    %3627 = vmatpush.msra.mxu0 0.0
    %3628 = vmatpush.msra.mxu0 0.0
    %3629 = vmatpush.msra.mxu0 0.0
    %3630 = vmatpush.msra.mxu0 0.0
    %3631 = vmatpush.msra.mxu0 0.0
    %3632 = vmatpush.msra.mxu0 0.0
    %3633 = vmatpush.msra.mxu0 %v3391
    %3634 = vmatpush.msra.mxu0 %v3373
    %3635 = vmatpush.msra.mxu0 %v3355
    %3636 = vmatpush.msra.mxu0 %v3337
    %3637 = vmatpush.msra.mxu0 %v3319
    %3638 = vmatpush.msra.mxu0 %v3301
    %3639 = vmatpush.msra.mxu0 %v3283
    %3640 = vmatpush.msra.mxu0 %v3265
    %3641 = vmatpush.msra.mxu0 %v3247
    %3642 = vmatmul.f32.gmra.mxu0 %v3414
    %v3643 = vpop.f32.mrf.mxu0
    %v3644 = vadd.f32 %v3405, %v3643
    %3645 = vmatmul.f32.gmra.mxu0 %v3417
    %v3646 = vpop.f32.mrf.mxu0
    %v3647 = vadd.f32 %v3410, %v3646
    %3648 = vdwg.mxu0
    %3649 = vmatpush.msra.mxu0 0.0
    %3650 = vmatpush.msra.mxu0 0.0
    %3651 = vmatpush.msra.mxu0 0.0
    %3652 = vmatpush.msra.mxu0 0.0
    %3653 = vmatpush.msra.mxu0 0.0
    %3654 = vmatpush.msra.mxu0 0.0
    %3655 = vmatpush.msra.mxu0 0.0
    %3656 = vmatpush.msra.mxu0 %v3392
    %3657 = vmatpush.msra.mxu0 %v3374
    %3658 = vmatpush.msra.mxu0 %v3356
    %3659 = vmatpush.msra.mxu0 %v3338
    %3660 = vmatpush.msra.mxu0 %v3320
    %3661 = vmatpush.msra.mxu0 %v3302
    %3662 = vmatpush.msra.mxu0 %v3284
    %3663 = vmatpush.msra.mxu0 %v3266
    %3664 = vmatpush.msra.mxu0 %v3248
    %3665 = vmatmul.f32.gmra.mxu0 %v3414
    %v3666 = vpop.f32.mrf.mxu0
    %v3667 = vadd.f32 %v3405, %v3666
    %3668 = vmatmul.f32.gmra.mxu0 %v3417
    %v3669 = vpop.f32.mrf.mxu0
    %v3670 = vadd.f32 %v3410, %v3669
    %3671 = vdwg.mxu0
    %3672 = vmatpush.msra.mxu0 0.0
    %3673 = vmatpush.msra.mxu0 0.0
    %3674 = vmatpush.msra.mxu0 0.0
    %3675 = vmatpush.msra.mxu0 0.0
    %3676 = vmatpush.msra.mxu0 0.0
    %3677 = vmatpush.msra.mxu0 0.0
    %3678 = vmatpush.msra.mxu0 0.0
    %3679 = vmatpush.msra.mxu0 %v3393
    %3680 = vmatpush.msra.mxu0 %v3375
    %3681 = vmatpush.msra.mxu0 %v3357
    %3682 = vmatpush.msra.mxu0 %v3339
    %3683 = vmatpush.msra.mxu0 %v3321
    %3684 = vmatpush.msra.mxu0 %v3303
    %3685 = vmatpush.msra.mxu0 %v3285
    %3686 = vmatpush.msra.mxu0 %v3267
    %3687 = vmatpush.msra.mxu0 %v3249
    %3688 = vmatmul.f32.gmra.mxu0 %v3414
    %v3689 = vpop.f32.mrf.mxu0
    %v3690 = vadd.f32 %v3405, %v3689
    %3691 = vmatmul.f32.gmra.mxu0 %v3417
    %v3692 = vpop.f32.mrf.mxu0
    %v3693 = vadd.f32 %v3410, %v3692
    %3694 = vdwg.mxu0
    %3695 = vmatpush.msra.mxu0 0.0
    %3696 = vmatpush.msra.mxu0 0.0
    %3697 = vmatpush.msra.mxu0 0.0
    %3698 = vmatpush.msra.mxu0 0.0
    %3699 = vmatpush.msra.mxu0 0.0
    %3700 = vmatpush.msra.mxu0 0.0
    %3701 = vmatpush.msra.mxu0 0.0
    %3702 = vmatpush.msra.mxu0 %v3394
    %3703 = vmatpush.msra.mxu0 %v3376
    %3704 = vmatpush.msra.mxu0 %v3358
    %3705 = vmatpush.msra.mxu0 %v3340
    %3706 = vmatpush.msra.mxu0 %v3322
    %3707 = vmatpush.msra.mxu0 %v3304
    %3708 = vmatpush.msra.mxu0 %v3286
    %3709 = vmatpush.msra.mxu0 %v3268
    %3710 = vmatpush.msra.mxu0 %v3250
    %3711 = vmatmul.f32.gmra.mxu0 %v3414
    %v3712 = vpop.f32.mrf.mxu0
    %v3713 = vadd.f32 %v3405, %v3712
    %3714 = vmatmul.f32.gmra.mxu0 %v3417
    %v3715 = vpop.f32.mrf.mxu0
    %v3716 = vadd.f32 %v3410, %v3715
    %3717 = vdwg.mxu0
    %3718 = vmatpush.msra.mxu0 0.0
    %3719 = vmatpush.msra.mxu0 0.0
    %3720 = vmatpush.msra.mxu0 0.0
    %3721 = vmatpush.msra.mxu0 0.0
    %3722 = vmatpush.msra.mxu0 0.0
    %3723 = vmatpush.msra.mxu0 0.0
    %3724 = vmatpush.msra.mxu0 0.0
    %3725 = vmatpush.msra.mxu0 %v3395
    %3726 = vmatpush.msra.mxu0 %v3377
    %3727 = vmatpush.msra.mxu0 %v3359
    %3728 = vmatpush.msra.mxu0 %v3341
    %3729 = vmatpush.msra.mxu0 %v3323
    %3730 = vmatpush.msra.mxu0 %v3305
    %3731 = vmatpush.msra.mxu0 %v3287
    %3732 = vmatpush.msra.mxu0 %v3269
    %3733 = vmatpush.msra.mxu0 %v3251
    %3734 = vmatmul.f32.gmra.mxu0 %v3414
    %v3735 = vpop.f32.mrf.mxu0
    %v3736 = vadd.f32 %v3405, %v3735
    %3737 = vmatmul.f32.gmra.mxu0 %v3417
    %v3738 = vpop.f32.mrf.mxu0
    %v3739 = vadd.f32 %v3410, %v3738
    %3740 = vdwg.mxu0
    %3741 = vmatpush.msra.mxu0 0.0
    %3742 = vmatpush.msra.mxu0 0.0
    %3743 = vmatpush.msra.mxu0 0.0
    %3744 = vmatpush.msra.mxu0 0.0
    %3745 = vmatpush.msra.mxu0 0.0
    %3746 = vmatpush.msra.mxu0 0.0
    %3747 = vmatpush.msra.mxu0 0.0
    %3748 = vmatpush.msra.mxu0 %v3396
    %3749 = vmatpush.msra.mxu0 %v3378
    %3750 = vmatpush.msra.mxu0 %v3360
    %3751 = vmatpush.msra.mxu0 %v3342
    %3752 = vmatpush.msra.mxu0 %v3324
    %3753 = vmatpush.msra.mxu0 %v3306
    %3754 = vmatpush.msra.mxu0 %v3288
    %3755 = vmatpush.msra.mxu0 %v3270
    %3756 = vmatpush.msra.mxu0 %v3252
    %3757 = vmatmul.f32.gmra.mxu0 %v3414
    %v3758 = vpop.f32.mrf.mxu0
    %v3759 = vadd.f32 %v3405, %v3758
    %3760 = vmatmul.f32.gmra.mxu0 %v3417
    %v3761 = vpop.f32.mrf.mxu0
    %v3762 = vadd.f32 %v3410, %v3761
    %3763 = vdwg.mxu0
    %3764 = vmatpush.msra.mxu0 0.0
    %3765 = vmatpush.msra.mxu0 0.0
    %3766 = vmatpush.msra.mxu0 0.0
    %3767 = vmatpush.msra.mxu0 0.0
    %3768 = vmatpush.msra.mxu0 0.0
    %3769 = vmatpush.msra.mxu0 0.0
    %3770 = vmatpush.msra.mxu0 0.0
    %3771 = vmatpush.msra.mxu0 %v3397
    %3772 = vmatpush.msra.mxu0 %v3379
    %3773 = vmatpush.msra.mxu0 %v3361
    %3774 = vmatpush.msra.mxu0 %v3343
    %3775 = vmatpush.msra.mxu0 %v3325
    %3776 = vmatpush.msra.mxu0 %v3307
    %3777 = vmatpush.msra.mxu0 %v3289
    %3778 = vmatpush.msra.mxu0 %v3271
    %3779 = vmatpush.msra.mxu0 %v3253
    %3780 = vmatmul.f32.gmra.mxu0 %v3414
    %v3781 = vpop.f32.mrf.mxu0
    %v3782 = vadd.f32 %v3405, %v3781
    %3783 = vmatmul.f32.gmra.mxu0 %v3417
    %v3784 = vpop.f32.mrf.mxu0
    %v3785 = vadd.f32 %v3410, %v3784
    %3786 = vdwg.mxu0
    %3787 = vmatpush.msra.mxu0 0.0
    %3788 = vmatpush.msra.mxu0 0.0
    %3789 = vmatpush.msra.mxu0 0.0
    %3790 = vmatpush.msra.mxu0 0.0
    %3791 = vmatpush.msra.mxu0 0.0
    %3792 = vmatpush.msra.mxu0 0.0
    %3793 = vmatpush.msra.mxu0 0.0
    %3794 = vmatpush.msra.mxu0 %v3398
    %3795 = vmatpush.msra.mxu0 %v3380
    %3796 = vmatpush.msra.mxu0 %v3362
    %3797 = vmatpush.msra.mxu0 %v3344
    %3798 = vmatpush.msra.mxu0 %v3326
    %3799 = vmatpush.msra.mxu0 %v3308
    %3800 = vmatpush.msra.mxu0 %v3290
    %3801 = vmatpush.msra.mxu0 %v3272
    %3802 = vmatpush.msra.mxu0 %v3254
    %3803 = vmatmul.f32.gmra.mxu0 %v3414
    %v3804 = vpop.f32.mrf.mxu0
    %v3805 = vadd.f32 %v3405, %v3804
    %3806 = vmatmul.f32.gmra.mxu0 %v3417
    %v3807 = vpop.f32.mrf.mxu0
    %v3808 = vadd.f32 %v3410, %v3807
    %3809 = vdwg.mxu0
    %3810 = vmatpush.msra.mxu0 0.0
    %3811 = vmatpush.msra.mxu0 0.0
    %3812 = vmatpush.msra.mxu0 0.0
    %3813 = vmatpush.msra.mxu0 0.0
    %3814 = vmatpush.msra.mxu0 0.0
    %3815 = vmatpush.msra.mxu0 0.0
    %3816 = vmatpush.msra.mxu0 0.0
    %3817 = vmatpush.msra.mxu0 %v3399
    %3818 = vmatpush.msra.mxu0 %v3381
    %3819 = vmatpush.msra.mxu0 %v3363
    %3820 = vmatpush.msra.mxu0 %v3345
    %3821 = vmatpush.msra.mxu0 %v3327
    %3822 = vmatpush.msra.mxu0 %v3309
    %3823 = vmatpush.msra.mxu0 %v3291
    %3824 = vmatpush.msra.mxu0 %v3273
    %3825 = vmatpush.msra.mxu0 %v3255
    %3826 = vmatmul.f32.gmra.mxu0 %v3414
    %v3827 = vpop.f32.mrf.mxu0
    %v3828 = vadd.f32 %v3405, %v3827
    %3829 = vmatmul.f32.gmra.mxu0 %v3417
    %v3830 = vpop.f32.mrf.mxu0
    %v3831 = vadd.f32 %v3410, %v3830
    %3832 = vdwg.mxu0
    %v3833 = vmax.f32 %v3437, 0.0
    %v3834 = vmax.f32 %v3460, 0.0
    %v3835 = vmax.f32 %v3483, 0.0
    %v3836 = vmax.f32 %v3506, 0.0
    %v3837 = vmax.f32 %v3529, 0.0
    %v3838 = vmax.f32 %v3552, 0.0
    %v3839 = vmax.f32 %v3575, 0.0
    %v3840 = vmax.f32 %v3598, 0.0
    %v3841 = vmax.f32 %v3621, 0.0
    %v3842 = vmax.f32 %v3644, 0.0
    %v3843 = vmax.f32 %v3667, 0.0
    %v3844 = vmax.f32 %v3690, 0.0
    %v3845 = vmax.f32 %v3713, 0.0
    %v3846 = vmax.f32 %v3736, 0.0
    %v3847 = vmax.f32 %v3759, 0.0
    %v3848 = vmax.f32 %v3782, 0.0
    %v3849 = vmax.f32 %v3805, 0.0
    %v3850 = vmax.f32 %v3828, 0.0
    %v3851 = vmax.f32 %v3440, 0.0
    %v3852 = vmax.f32 %v3463, 0.0
    %v3853 = vmax.f32 %v3486, 0.0
    %v3854 = vmax.f32 %v3509, 0.0
    %v3855 = vmax.f32 %v3532, 0.0
    %v3856 = vmax.f32 %v3555, 0.0
    %v3857 = vmax.f32 %v3578, 0.0
    %v3858 = vmax.f32 %v3601, 0.0
    %v3859 = vmax.f32 %v3624, 0.0
    %v3860 = vmax.f32 %v3647, 0.0
    %v3861 = vmax.f32 %v3670, 0.0
    %v3862 = vmax.f32 %v3693, 0.0
    %v3863 = vmax.f32 %v3716, 0.0
    %v3864 = vmax.f32 %v3739, 0.0
    %v3865 = vmax.f32 %v3762, 0.0
    %v3866 = vmax.f32 %v3785, 0.0
    %v3867 = vmax.f32 %v3808, 0.0
    %v3868 = vmax.f32 %v3831, 0.0
    %3869 = vst [vmem:[#allocation6] sm:$0xff] %v3833
    %3870 = vst [vmem:[#allocation6 + $0x8] sm:$0xff] %v3834
    %3871 = vst [vmem:[#allocation6 + $0x10] sm:$0xff] %v3835
    %3872 = vst [vmem:[#allocation6 + $0x18] sm:$0xff] %v3836
    %3873 = vst [vmem:[#allocation6 + $0x20] sm:$0xff] %v3837
    %3874 = vst [vmem:[#allocation6 + $0x28] sm:$0xff] %v3838
    %3875 = vst [vmem:[#allocation6 + $0x30] sm:$0xff] %v3839
    %3876 = vst [vmem:[#allocation6 + $0x38] sm:$0xff] %v3840
    %3877 = vst [vmem:[#allocation6 + $0x40] sm:$0xff] %v3841
    %3878 = vst [vmem:[#allocation6 + $0x48] sm:$0xff] %v3842
    %3879 = vst [vmem:[#allocation6 + $0x50] sm:$0xff] %v3843
    %3880 = vst [vmem:[#allocation6 + $0x58] sm:$0xff] %v3844
    %3881 = vst [vmem:[#allocation6 + $0x60] sm:$0xff] %v3845
    %3882 = vst [vmem:[#allocation6 + $0x68] sm:$0xff] %v3846
    %3883 = vst [vmem:[#allocation6 + $0x70] sm:$0xff] %v3847
    %3884 = vst [vmem:[#allocation6 + $0x78] sm:$0xff] %v3848
    %3885 = vst [vmem:[#allocation6 + $0x80] sm:$0xff] %v3849
    %3886 = vst [vmem:[#allocation6 + $0x88] sm:$0xff] %v3850
    %3887 = vst [vmem:[#allocation6 + $0xa0] sm:$0xff] %v3851
    %3888 = vst [vmem:[#allocation6 + $0xa8] sm:$0xff] %v3852
    %3889 = vst [vmem:[#allocation6 + $0xb0] sm:$0xff] %v3853
    %3890 = vst [vmem:[#allocation6 + $0xb8] sm:$0xff] %v3854
    %3891 = vst [vmem:[#allocation6 + $0xc0] sm:$0xff] %v3855
    %3892 = vst [vmem:[#allocation6 + $0xc8] sm:$0xff] %v3856
    %3893 = vst [vmem:[#allocation6 + $0xd0] sm:$0xff] %v3857
    %3894 = vst [vmem:[#allocation6 + $0xd8] sm:$0xff] %v3858
    %3895 = vst [vmem:[#allocation6 + $0xe0] sm:$0xff] %v3859
    %3896 = vst [vmem:[#allocation6 + $0xe8] sm:$0xff] %v3860
    %3897 = vst [vmem:[#allocation6 + $0xf0] sm:$0xff] %v3861
    %3898 = vst [vmem:[#allocation6 + $0xf8] sm:$0xff] %v3862
    %3899 = vst [vmem:[#allocation6 + $0x100] sm:$0xff] %v3863
    %3900 = vst [vmem:[#allocation6 + $0x108] sm:$0xff] %v3864
    %3901 = vst [vmem:[#allocation6 + $0x110] sm:$0xff] %v3865
    %3902 = vst [vmem:[#allocation6 + $0x118] sm:$0xff] %v3866
    %3903 = vst [vmem:[#allocation6 + $0x120] sm:$0xff] %v3867
    %3904 = vst [vmem:[#allocation6 + $0x128] sm:$0xff] %v3868
    %3905 = vst [vmem:[#allocation6 + $0x90] sm:$0xff] 0.0
    %3906 = vst [vmem:[#allocation6 + $0x98] sm:$0xff] 0.0
    %3907 = vst [vmem:[#allocation6 + $0x130] sm:$0xff] 0.0
    %3908 = vst [vmem:[#allocation6 + $0x138] sm:$0xff] 0.0
    %v3909 = vld [vmem:[#allocation6] sm:$0xff]
    %v3910 = vld [vmem:[#allocation6 + $0x8] sm:$0xff]
    %v3911 = vld [vmem:[#allocation6 + $0x10] sm:$0xff]
    %v3912 = vld [vmem:[#allocation6 + $0x18] sm:$0xff]
    %v3913 = vld [vmem:[#allocation6 + $0x20] sm:$0xff]
    %v3914 = vld [vmem:[#allocation6 + $0x28] sm:$0xff]
    %v3915 = vld [vmem:[#allocation6 + $0x30] sm:$0xff]
    %v3916 = vld [vmem:[#allocation6 + $0x38] sm:$0xff]
    %v3917 = vld [vmem:[#allocation6 + $0x40] sm:$0xff]
    %v3918 = vld [vmem:[#allocation6 + $0x48] sm:$0xff]
    %v3919 = vld [vmem:[#allocation6 + $0x50] sm:$0xff]
    %v3920 = vld [vmem:[#allocation6 + $0x58] sm:$0xff]
    %v3921 = vld [vmem:[#allocation6 + $0x60] sm:$0xff]
    %v3922 = vld [vmem:[#allocation6 + $0x68] sm:$0xff]
    %v3923 = vld [vmem:[#allocation6 + $0x70] sm:$0xff]
    %v3924 = vld [vmem:[#allocation6 + $0x78] sm:$0xff]
    %v3925 = vld [vmem:[#allocation6 + $0x80] sm:$0xff]
    %v3926 = vld [vmem:[#allocation6 + $0x88] sm:$0xff]
    %v3927 = vld [vmem:[#allocation6 + $0xa0] sm:$0xff]
    %v3928 = vld [vmem:[#allocation6 + $0xa8] sm:$0xff]
    %v3929 = vld [vmem:[#allocation6 + $0xb0] sm:$0xff]
    %v3930 = vld [vmem:[#allocation6 + $0xb8] sm:$0xff]
    %v3931 = vld [vmem:[#allocation6 + $0xc0] sm:$0xff]
    %v3932 = vld [vmem:[#allocation6 + $0xc8] sm:$0xff]
    %v3933 = vld [vmem:[#allocation6 + $0xd0] sm:$0xff]
    %v3934 = vld [vmem:[#allocation6 + $0xd8] sm:$0xff]
    %v3935 = vld [vmem:[#allocation6 + $0xe0] sm:$0xff]
    %v3936 = vld [vmem:[#allocation6 + $0xe8] sm:$0xff]
    %v3937 = vld [vmem:[#allocation6 + $0xf0] sm:$0xff]
    %v3938 = vld [vmem:[#allocation6 + $0xf8] sm:$0xff]
    %v3939 = vld [vmem:[#allocation6 + $0x100] sm:$0xff]
    %v3940 = vld [vmem:[#allocation6 + $0x108] sm:$0xff]
    %v3941 = vld [vmem:[#allocation6 + $0x110] sm:$0xff]
    %v3942 = vld [vmem:[#allocation6 + $0x118] sm:$0xff]
    %v3943 = vld [vmem:[#allocation6 + $0x120] sm:$0xff]
    %v3944 = vld [vmem:[#allocation6 + $0x128] sm:$0xff]
    %v3945 = vld [vmem:[#allocation6 + $0x90] sm:$0xff]
    %v3946 = vld [vmem:[#allocation6 + $0x130] sm:$0xff]
    %3985 = vrot.lane.b32.xlu0 %v3909, 126
    %v3986 = vpop.permute.xlu0 %3985
    %3987 = vrot.lane.b32.xlu0 %v3910, 126
    %v3988 = vpop.permute.xlu0 %3987
    %3989 = vrot.lane.b32.xlu0 %v3911, 126
    %v3990 = vpop.permute.xlu0 %3989
    %3991 = vrot.lane.b32.xlu0 %v3912, 126
    %v3992 = vpop.permute.xlu0 %3991
    %3993 = vrot.lane.b32.xlu0 %v3913, 126
    %v3994 = vpop.permute.xlu0 %3993
    %3995 = vrot.lane.b32.xlu0 %v3914, 126
    %v3996 = vpop.permute.xlu0 %3995
    %3997 = vrot.lane.b32.xlu0 %v3915, 126
    %v3998 = vpop.permute.xlu0 %3997
    %3999 = vrot.lane.b32.xlu0 %v3916, 126
    %v4000 = vpop.permute.xlu0 %3999
    %4001 = vrot.lane.b32.xlu0 %v3917, 126
    %v4002 = vpop.permute.xlu0 %4001
    %4003 = vrot.lane.b32.xlu0 %v3918, 126
    %v4004 = vpop.permute.xlu0 %4003
    %4005 = vrot.lane.b32.xlu0 %v3919, 126
    %v4006 = vpop.permute.xlu0 %4005
    %4007 = vrot.lane.b32.xlu0 %v3920, 126
    %v4008 = vpop.permute.xlu0 %4007
    %4009 = vrot.lane.b32.xlu0 %v3921, 126
    %v4010 = vpop.permute.xlu0 %4009
    %4011 = vrot.lane.b32.xlu0 %v3922, 126
    %v4012 = vpop.permute.xlu0 %4011
    %4013 = vrot.lane.b32.xlu0 %v3923, 126
    %v4014 = vpop.permute.xlu0 %4013
    %4015 = vrot.lane.b32.xlu0 %v3924, 126
    %v4016 = vpop.permute.xlu0 %4015
    %4017 = vrot.lane.b32.xlu0 %v3925, 126
    %v4018 = vpop.permute.xlu0 %4017
    %4019 = vrot.lane.b32.xlu0 %v3926, 126
    %v4020 = vpop.permute.xlu0 %4019
    %4021 = vrot.lane.b32.xlu0 %v3945, 126
    %v4022 = vpop.permute.xlu0 %4021
    %4023 = vrot.lane.b32.xlu0 %v3927, 126
    %v4024 = vpop.permute.xlu0 %4023
    %4025 = vrot.lane.b32.xlu0 %v3928, 126
    %v4026 = vpop.permute.xlu0 %4025
    %4027 = vrot.lane.b32.xlu0 %v3929, 126
    %v4028 = vpop.permute.xlu0 %4027
    %4029 = vrot.lane.b32.xlu0 %v3930, 126
    %v4030 = vpop.permute.xlu0 %4029
    %4031 = vrot.lane.b32.xlu0 %v3931, 126
    %v4032 = vpop.permute.xlu0 %4031
    %4033 = vrot.lane.b32.xlu0 %v3932, 126
    %v4034 = vpop.permute.xlu0 %4033
    %4035 = vrot.lane.b32.xlu0 %v3933, 126
    %v4036 = vpop.permute.xlu0 %4035
    %4037 = vrot.lane.b32.xlu0 %v3934, 126
    %v4038 = vpop.permute.xlu0 %4037
    %4039 = vrot.lane.b32.xlu0 %v3935, 126
    %v4040 = vpop.permute.xlu0 %4039
    %4041 = vrot.lane.b32.xlu0 %v3936, 126
    %v4042 = vpop.permute.xlu0 %4041
    %4043 = vrot.lane.b32.xlu0 %v3937, 126
    %v4044 = vpop.permute.xlu0 %4043
    %4045 = vrot.lane.b32.xlu0 %v3938, 126
    %v4046 = vpop.permute.xlu0 %4045
    %4047 = vrot.lane.b32.xlu0 %v3939, 126
    %v4048 = vpop.permute.xlu0 %4047
    %4049 = vrot.lane.b32.xlu0 %v3940, 126
    %v4050 = vpop.permute.xlu0 %4049
    %4051 = vrot.lane.b32.xlu0 %v3941, 126
    %v4052 = vpop.permute.xlu0 %4051
    %4053 = vrot.lane.b32.xlu0 %v3942, 126
    %v4054 = vpop.permute.xlu0 %4053
    %4055 = vrot.lane.b32.xlu0 %v3943, 126
    %v4056 = vpop.permute.xlu0 %4055
    %4057 = vrot.lane.b32.xlu0 %v3944, 126
    %v4058 = vpop.permute.xlu0 %4057
    %4059 = vrot.lane.b32.xlu0 %v3946, 126
    %v4060 = vpop.permute.xlu0 %4059
    %v4061 = vsel %vm415, %v3986, %v3988
    %v4062 = vsel %vm415, %v3988, %v3990
    %v4063 = vsel %vm415, %v3990, %v3992
    %v4064 = vsel %vm415, %v3992, %v3994
    %v4065 = vsel %vm415, %v3994, %v3996
    %v4066 = vsel %vm415, %v3996, %v3998
    %v4067 = vsel %vm415, %v3998, %v4000
    %v4068 = vsel %vm415, %v4000, %v4002
    %v4069 = vsel %vm415, %v4002, %v4004
    %v4070 = vsel %vm415, %v4004, %v4006
    %v4071 = vsel %vm415, %v4006, %v4008
    %v4072 = vsel %vm415, %v4008, %v4010
    %v4073 = vsel %vm415, %v4010, %v4012
    %v4074 = vsel %vm415, %v4012, %v4014
    %v4075 = vsel %vm415, %v4014, %v4016
    %v4076 = vsel %vm415, %v4016, %v4018
    %v4077 = vsel %vm415, %v4018, %v4020
    %v4078 = vsel %vm415, %v4020, %v4022
    %v4079 = vsel %vm415, %v4024, %v4026
    %v4080 = vsel %vm415, %v4026, %v4028
    %v4081 = vsel %vm415, %v4028, %v4030
    %v4082 = vsel %vm415, %v4030, %v4032
    %v4083 = vsel %vm415, %v4032, %v4034
    %v4084 = vsel %vm415, %v4034, %v4036
    %v4085 = vsel %vm415, %v4036, %v4038
    %v4086 = vsel %vm415, %v4038, %v4040
    %v4087 = vsel %vm415, %v4040, %v4042
    %v4088 = vsel %vm415, %v4042, %v4044
    %v4089 = vsel %vm415, %v4044, %v4046
    %v4090 = vsel %vm415, %v4046, %v4048
    %v4091 = vsel %vm415, %v4048, %v4050
    %v4092 = vsel %vm415, %v4050, %v4052
    %v4093 = vsel %vm415, %v4052, %v4054
    %v4094 = vsel %vm415, %v4054, %v4056
    %v4095 = vsel %vm415, %v4056, %v4058
    %v4096 = vsel %vm415, %v4058, %v4060
    %v4133 = vmax.f32 %v3909, %v4061
    %v4134 = vmax.f32 %v3910, %v4062
    %v4135 = vmax.f32 %v3911, %v4063
    %v4136 = vmax.f32 %v3912, %v4064
    %v4137 = vmax.f32 %v3913, %v4065
    %v4138 = vmax.f32 %v3914, %v4066
    %v4139 = vmax.f32 %v3915, %v4067
    %v4140 = vmax.f32 %v3916, %v4068
    %v4141 = vmax.f32 %v3917, %v4069
    %v4142 = vmax.f32 %v3918, %v4070
    %v4143 = vmax.f32 %v3919, %v4071
    %v4144 = vmax.f32 %v3920, %v4072
    %v4145 = vmax.f32 %v3921, %v4073
    %v4146 = vmax.f32 %v3922, %v4074
    %v4147 = vmax.f32 %v3923, %v4075
    %v4148 = vmax.f32 %v3924, %v4076
    %v4149 = vmax.f32 %v3925, %v4077
    %v4150 = vmax.f32 %v3926, %v4078
    %v4151 = vmax.f32 %v3927, %v4079
    %v4152 = vmax.f32 %v3928, %v4080
    %v4153 = vmax.f32 %v3929, %v4081
    %v4154 = vmax.f32 %v3930, %v4082
    %v4155 = vmax.f32 %v3931, %v4083
    %v4156 = vmax.f32 %v3932, %v4084
    %v4157 = vmax.f32 %v3933, %v4085
    %v4158 = vmax.f32 %v3934, %v4086
    %v4159 = vmax.f32 %v3935, %v4087
    %v4160 = vmax.f32 %v3936, %v4088
    %v4161 = vmax.f32 %v3937, %v4089
    %v4162 = vmax.f32 %v3938, %v4090
    %v4163 = vmax.f32 %v3939, %v4091
    %v4164 = vmax.f32 %v3940, %v4092
    %v4165 = vmax.f32 %v3941, %v4093
    %v4166 = vmax.f32 %v3942, %v4094
    %v4167 = vmax.f32 %v3943, %v4095
    %v4168 = vmax.f32 %v3944, %v4096
    %v4171 = vmax.f32 %v3945, %v4022
    %v4172 = vmax.f32 %v3946, %v4060
    %4211 = vrot.lane.b32.xlu0 %v4133, 64
    %v4212 = vpop.permute.xlu0 %4211
    %4213 = vrot.lane.b32.xlu0 %v4134, 64
    %v4214 = vpop.permute.xlu0 %4213
    %4215 = vrot.lane.b32.xlu0 %v4135, 64
    %v4216 = vpop.permute.xlu0 %4215
    %4217 = vrot.lane.b32.xlu0 %v4136, 64
    %v4218 = vpop.permute.xlu0 %4217
    %4219 = vrot.lane.b32.xlu0 %v4137, 64
    %v4220 = vpop.permute.xlu0 %4219
    %4221 = vrot.lane.b32.xlu0 %v4138, 64
    %v4222 = vpop.permute.xlu0 %4221
    %4223 = vrot.lane.b32.xlu0 %v4139, 64
    %v4224 = vpop.permute.xlu0 %4223
    %4225 = vrot.lane.b32.xlu0 %v4140, 64
    %v4226 = vpop.permute.xlu0 %4225
    %4227 = vrot.lane.b32.xlu0 %v4141, 64
    %v4228 = vpop.permute.xlu0 %4227
    %4229 = vrot.lane.b32.xlu0 %v4142, 64
    %v4230 = vpop.permute.xlu0 %4229
    %4231 = vrot.lane.b32.xlu0 %v4143, 64
    %v4232 = vpop.permute.xlu0 %4231
    %4233 = vrot.lane.b32.xlu0 %v4144, 64
    %v4234 = vpop.permute.xlu0 %4233
    %4235 = vrot.lane.b32.xlu0 %v4145, 64
    %v4236 = vpop.permute.xlu0 %4235
    %4237 = vrot.lane.b32.xlu0 %v4146, 64
    %v4238 = vpop.permute.xlu0 %4237
    %4239 = vrot.lane.b32.xlu0 %v4147, 64
    %v4240 = vpop.permute.xlu0 %4239
    %4241 = vrot.lane.b32.xlu0 %v4148, 64
    %v4242 = vpop.permute.xlu0 %4241
    %4243 = vrot.lane.b32.xlu0 %v4149, 64
    %v4244 = vpop.permute.xlu0 %4243
    %4245 = vrot.lane.b32.xlu0 %v4150, 64
    %v4246 = vpop.permute.xlu0 %4245
    %4247 = vrot.lane.b32.xlu0 %v4171, 64
    %v4248 = vpop.permute.xlu0 %4247
    %4249 = vrot.lane.b32.xlu0 %v4151, 64
    %v4250 = vpop.permute.xlu0 %4249
    %4251 = vrot.lane.b32.xlu0 %v4152, 64
    %v4252 = vpop.permute.xlu0 %4251
    %4253 = vrot.lane.b32.xlu0 %v4153, 64
    %v4254 = vpop.permute.xlu0 %4253
    %4255 = vrot.lane.b32.xlu0 %v4154, 64
    %v4256 = vpop.permute.xlu0 %4255
    %4257 = vrot.lane.b32.xlu0 %v4155, 64
    %v4258 = vpop.permute.xlu0 %4257
    %4259 = vrot.lane.b32.xlu0 %v4156, 64
    %v4260 = vpop.permute.xlu0 %4259
    %4261 = vrot.lane.b32.xlu0 %v4157, 64
    %v4262 = vpop.permute.xlu0 %4261
    %4263 = vrot.lane.b32.xlu0 %v4158, 64
    %v4264 = vpop.permute.xlu0 %4263
    %4265 = vrot.lane.b32.xlu0 %v4159, 64
    %v4266 = vpop.permute.xlu0 %4265
    %4267 = vrot.lane.b32.xlu0 %v4160, 64
    %v4268 = vpop.permute.xlu0 %4267
    %4269 = vrot.lane.b32.xlu0 %v4161, 64
    %v4270 = vpop.permute.xlu0 %4269
    %4271 = vrot.lane.b32.xlu0 %v4162, 64
    %v4272 = vpop.permute.xlu0 %4271
    %4273 = vrot.lane.b32.xlu0 %v4163, 64
    %v4274 = vpop.permute.xlu0 %4273
    %4275 = vrot.lane.b32.xlu0 %v4164, 64
    %v4276 = vpop.permute.xlu0 %4275
    %4277 = vrot.lane.b32.xlu0 %v4165, 64
    %v4278 = vpop.permute.xlu0 %4277
    %4279 = vrot.lane.b32.xlu0 %v4166, 64
    %v4280 = vpop.permute.xlu0 %4279
    %4281 = vrot.lane.b32.xlu0 %v4167, 64
    %v4282 = vpop.permute.xlu0 %4281
    %4283 = vrot.lane.b32.xlu0 %v4168, 64
    %v4284 = vpop.permute.xlu0 %4283
    %4285 = vrot.lane.b32.xlu0 %v4172, 64
    %v4286 = vpop.permute.xlu0 %4285
    %v4287 = vsel %vm1089, %v4212, %v4214
    %v4288 = vsel %vm1089, %v4214, %v4216
    %v4289 = vsel %vm1089, %v4216, %v4218
    %v4290 = vsel %vm1089, %v4218, %v4220
    %v4291 = vsel %vm1089, %v4220, %v4222
    %v4292 = vsel %vm1089, %v4222, %v4224
    %v4293 = vsel %vm1089, %v4224, %v4226
    %v4294 = vsel %vm1089, %v4226, %v4228
    %v4295 = vsel %vm1089, %v4228, %v4230
    %v4296 = vsel %vm1089, %v4230, %v4232
    %v4297 = vsel %vm1089, %v4232, %v4234
    %v4298 = vsel %vm1089, %v4234, %v4236
    %v4299 = vsel %vm1089, %v4236, %v4238
    %v4300 = vsel %vm1089, %v4238, %v4240
    %v4301 = vsel %vm1089, %v4240, %v4242
    %v4302 = vsel %vm1089, %v4242, %v4244
    %v4303 = vsel %vm1089, %v4244, %v4246
    %v4304 = vsel %vm1089, %v4246, %v4248
    %v4305 = vsel %vm1089, %v4250, %v4252
    %v4306 = vsel %vm1089, %v4252, %v4254
    %v4307 = vsel %vm1089, %v4254, %v4256
    %v4308 = vsel %vm1089, %v4256, %v4258
    %v4309 = vsel %vm1089, %v4258, %v4260
    %v4310 = vsel %vm1089, %v4260, %v4262
    %v4311 = vsel %vm1089, %v4262, %v4264
    %v4312 = vsel %vm1089, %v4264, %v4266
    %v4313 = vsel %vm1089, %v4266, %v4268
    %v4314 = vsel %vm1089, %v4268, %v4270
    %v4315 = vsel %vm1089, %v4270, %v4272
    %v4316 = vsel %vm1089, %v4272, %v4274
    %v4317 = vsel %vm1089, %v4274, %v4276
    %v4318 = vsel %vm1089, %v4276, %v4278
    %v4319 = vsel %vm1089, %v4278, %v4280
    %v4320 = vsel %vm1089, %v4280, %v4282
    %v4321 = vsel %vm1089, %v4282, %v4284
    %v4322 = vsel %vm1089, %v4284, %v4286
    %v4359 = vmax.f32 %v4133, %v4287
    %v4360 = vmax.f32 %v4134, %v4288
    %v4361 = vmax.f32 %v4135, %v4289
    %v4362 = vmax.f32 %v4136, %v4290
    %v4363 = vmax.f32 %v4137, %v4291
    %v4364 = vmax.f32 %v4138, %v4292
    %v4365 = vmax.f32 %v4139, %v4293
    %v4366 = vmax.f32 %v4140, %v4294
    %v4367 = vmax.f32 %v4141, %v4295
    %v4368 = vmax.f32 %v4142, %v4296
    %v4369 = vmax.f32 %v4143, %v4297
    %v4370 = vmax.f32 %v4144, %v4298
    %v4371 = vmax.f32 %v4145, %v4299
    %v4372 = vmax.f32 %v4146, %v4300
    %v4373 = vmax.f32 %v4147, %v4301
    %v4374 = vmax.f32 %v4148, %v4302
    %v4375 = vmax.f32 %v4149, %v4303
    %v4376 = vmax.f32 %v4150, %v4304
    %v4377 = vmax.f32 %v4151, %v4305
    %v4378 = vmax.f32 %v4152, %v4306
    %v4379 = vmax.f32 %v4153, %v4307
    %v4380 = vmax.f32 %v4154, %v4308
    %v4381 = vmax.f32 %v4155, %v4309
    %v4382 = vmax.f32 %v4156, %v4310
    %v4383 = vmax.f32 %v4157, %v4311
    %v4384 = vmax.f32 %v4158, %v4312
    %v4385 = vmax.f32 %v4159, %v4313
    %v4386 = vmax.f32 %v4160, %v4314
    %v4387 = vmax.f32 %v4161, %v4315
    %v4388 = vmax.f32 %v4162, %v4316
    %v4389 = vmax.f32 %v4163, %v4317
    %v4390 = vmax.f32 %v4164, %v4318
    %v4391 = vmax.f32 %v4165, %v4319
    %v4392 = vmax.f32 %v4166, %v4320
    %v4393 = vmax.f32 %v4167, %v4321
    %v4394 = vmax.f32 %v4168, %v4322
    %4395 = vst [vmem:[#allocation7] sm:$0xff] %v4359
    %4396 = vst [vmem:[#allocation7 + $0x8] sm:$0xff] %v4360
    %4397 = vst [vmem:[#allocation7 + $0x10] sm:$0xff] %v4361
    %4398 = vst [vmem:[#allocation7 + $0x18] sm:$0xff] %v4362
    %4399 = vst [vmem:[#allocation7 + $0x20] sm:$0xff] %v4363
    %4400 = vst [vmem:[#allocation7 + $0x28] sm:$0xff] %v4364
    %4401 = vst [vmem:[#allocation7 + $0x30] sm:$0xff] %v4365
    %4402 = vst [vmem:[#allocation7 + $0x38] sm:$0xff] %v4366
    %4403 = vst [vmem:[#allocation7 + $0x40] sm:$0xff] %v4367
    %4404 = vst [vmem:[#allocation7 + $0x48] sm:$0xff] %v4368
    %4405 = vst [vmem:[#allocation7 + $0x50] sm:$0xff] %v4369
    %4406 = vst [vmem:[#allocation7 + $0x58] sm:$0xff] %v4370
    %4407 = vst [vmem:[#allocation7 + $0x60] sm:$0xff] %v4371
    %4408 = vst [vmem:[#allocation7 + $0x68] sm:$0xff] %v4372
    %4409 = vst [vmem:[#allocation7 + $0x70] sm:$0xff] %v4373
    %4410 = vst [vmem:[#allocation7 + $0x78] sm:$0xff] %v4374
    %4411 = vst [vmem:[#allocation7 + $0x80] sm:$0xff] %v4375
    %4412 = vst [vmem:[#allocation7 + $0x88] sm:$0xff] %v4376
    %4413 = vst [vmem:[#allocation7 + $0xa0] sm:$0xff] %v4377
    %4414 = vst [vmem:[#allocation7 + $0xa8] sm:$0xff] %v4378
    %4415 = vst [vmem:[#allocation7 + $0xb0] sm:$0xff] %v4379
    %4416 = vst [vmem:[#allocation7 + $0xb8] sm:$0xff] %v4380
    %4417 = vst [vmem:[#allocation7 + $0xc0] sm:$0xff] %v4381
    %4418 = vst [vmem:[#allocation7 + $0xc8] sm:$0xff] %v4382
    %4419 = vst [vmem:[#allocation7 + $0xd0] sm:$0xff] %v4383
    %4420 = vst [vmem:[#allocation7 + $0xd8] sm:$0xff] %v4384
    %4421 = vst [vmem:[#allocation7 + $0xe0] sm:$0xff] %v4385
    %4422 = vst [vmem:[#allocation7 + $0xe8] sm:$0xff] %v4386
    %4423 = vst [vmem:[#allocation7 + $0xf0] sm:$0xff] %v4387
    %4424 = vst [vmem:[#allocation7 + $0xf8] sm:$0xff] %v4388
    %4425 = vst [vmem:[#allocation7 + $0x100] sm:$0xff] %v4389
    %4426 = vst [vmem:[#allocation7 + $0x108] sm:$0xff] %v4390
    %4427 = vst [vmem:[#allocation7 + $0x110] sm:$0xff] %v4391
    %4428 = vst [vmem:[#allocation7 + $0x118] sm:$0xff] %v4392
    %4429 = vst [vmem:[#allocation7 + $0x120] sm:$0xff] %v4393
    %4430 = vst [vmem:[#allocation7 + $0x128] sm:$0xff] %v4394
    %4431 = vst [vmem:[#allocation7 + $0x90] sm:$0xff] 0.0
    %4432 = vst [vmem:[#allocation7 + $0x98] sm:$0xff] 0.0
    %4433 = vst [vmem:[#allocation7 + $0x130] sm:$0xff] 0.0
    %4434 = vst [vmem:[#allocation7 + $0x138] sm:$0xff] 0.0
    %v4435 = vld [vmem:[#allocation7] sm:$0xff]
    %v4436 = vld [vmem:[#allocation7 + $0x8] sm:$0xff]
    %v4437 = vld [vmem:[#allocation7 + $0x10] sm:$0xff]
    %v4438 = vld [vmem:[#allocation7 + $0x18] sm:$0xff]
    %v4439 = vld [vmem:[#allocation7 + $0x20] sm:$0xff]
    %v4440 = vld [vmem:[#allocation7 + $0x28] sm:$0xff]
    %v4441 = vld [vmem:[#allocation7 + $0xa0] sm:$0xff]
    %v4442 = vld [vmem:[#allocation7 + $0xa8] sm:$0xff]
    %v4443 = vld [vmem:[#allocation7 + $0xb0] sm:$0xff]
    %v4444 = vld [vmem:[#allocation7 + $0xb8] sm:$0xff]
    %v4445 = vld [vmem:[#allocation7 + $0xc0] sm:$0xff]
    %v4446 = vld [vmem:[#allocation7 + $0xc8] sm:$0xff]
    %v4447 = vld [vmem:[#allocation9] sm:$0xff]
    %v4448 = vld [vmem:[#allocation9 + $0x8] sm:$0xff]
    %v4449 = vld [vmem:[#allocation9 + $0x10] sm:$0xff]
    %v4450 = vld [vmem:[#allocation9 + $0x18] sm:$0xff]
    %v4451 = vld [vmem:[#allocation9 + $0x20] sm:$0xff]
    %v4452 = vld [vmem:[#allocation9 + $0x28] sm:$0xff]
    %v4453 = vld [vmem:[#allocation9 + $0x30] sm:$0xff]
    %v4454 = vld [vmem:[#allocation9 + $0x38] sm:$0xff]
    %v4455 = vld [vmem:[#allocation9 + $0x40] sm:$0xff]
    %v4456 = vld [vmem:[#allocation9 + $0x48] sm:$0xff]
    %v4457 = vld [vmem:[#allocation9 + $0x50] sm:$0xff]
    %v4458 = vld [vmem:[#allocation9 + $0x58] sm:$0xff]
    %v4459 = vld [vmem:[#allocation9 + $0x60] sm:$0xff]
    %v4460 = vld [vmem:[#allocation9 + $0x68] sm:$0xff]
    %v4461 = vld [vmem:[#allocation9 + $0x70] sm:$0xff]
    %v4462 = vld [vmem:[#allocation9 + $0x78] sm:$0xff]
    %v4463 = vld [vmem:[#allocation9 + $0x80] sm:$0xff]
    %v4464 = vld [vmem:[#allocation9 + $0x88] sm:$0xff]
    %v4465 = vld [vmem:[#allocation9 + $0x90] sm:$0xff]
    %v4466 = vld [vmem:[#allocation9 + $0x98] sm:$0xff]
    %v4467 = vld [vmem:[#allocation9 + $0xa0] sm:$0xff]
    %v4468 = vld [vmem:[#allocation9 + $0xa8] sm:$0xff]
    %v4469 = vld [vmem:[#allocation9 + $0xb0] sm:$0xff]
    %v4470 = vld [vmem:[#allocation9 + $0xb8] sm:$0xff]
    %v4471 = vld [vmem:[#allocation9 + $0xc0] sm:$0xff]
    %v4472 = vld [vmem:[#allocation9 + $0xc8] sm:$0xff]
    %v4473 = vld [vmem:[#allocation9 + $0xd0] sm:$0xff]
    %v4474 = vld [vmem:[#allocation9 + $0xd8] sm:$0xff]
    %v4475 = vld [vmem:[#allocation9 + $0xe0] sm:$0xff]
    %v4476 = vld [vmem:[#allocation9 + $0xe8] sm:$0xff]
    %v4477 = vld [vmem:[#allocation9 + $0xf0] sm:$0xff]
    %v4478 = vld [vmem:[#allocation9 + $0xf8] sm:$0xff]
    %v4479 = vld [vmem:[#allocation9 + $0x100] sm:$0xff]
    %v4480 = vld [vmem:[#allocation9 + $0x108] sm:$0xff]
    %v4481 = vld [vmem:[#allocation9 + $0x110] sm:$0xff]
    %v4482 = vld [vmem:[#allocation9 + $0x118] sm:$0xff]
    %v4483 = vld [vmem:[#allocation9 + $0x120] sm:$0xff]
    %v4484 = vld [vmem:[#allocation9 + $0x128] sm:$0xff]
    %v4485 = vld [vmem:[#allocation9 + $0x130] sm:$0xff]
    %v4486 = vld [vmem:[#allocation9 + $0x138] sm:$0xff]
    %v4487 = vld [vmem:[#allocation9 + $0x140] sm:$0xff]
    %v4488 = vld [vmem:[#allocation9 + $0x148] sm:$0xff]
    %v4489 = vld [vmem:[#allocation9 + $0x150] sm:$0xff]
    %v4490 = vld [vmem:[#allocation9 + $0x158] sm:$0xff]
    %v4491 = vld [vmem:[#allocation9 + $0x160] sm:$0xff]
    %v4492 = vld [vmem:[#allocation9 + $0x168] sm:$0xff]
    %v4493 = vld [vmem:[#allocation9 + $0x170] sm:$0xff]
    %v4494 = vld [vmem:[#allocation9 + $0x178] sm:$0xff]
    %v4495 = vld [vmem:[#allocation9 + $0x180] sm:$0xff]
    %v4496 = vld [vmem:[#allocation9 + $0x188] sm:$0xff]
    %v4497 = vld [vmem:[#allocation9 + $0x190] sm:$0xff]
    %v4498 = vld [vmem:[#allocation9 + $0x198] sm:$0xff]
    %v4499 = vld [vmem:[#allocation9 + $0x1a0] sm:$0xff]
    %v4500 = vld [vmem:[#allocation9 + $0x1a8] sm:$0xff]
    %v4501 = vld [vmem:[#allocation9 + $0x1b0] sm:$0xff]
    %v4502 = vld [vmem:[#allocation9 + $0x1b8] sm:$0xff]
    %v4503 = vld [vmem:[#allocation9 + $0x1c0] sm:$0xff]
    %v4504 = vld [vmem:[#allocation9 + $0x1c8] sm:$0xff]
    %v4505 = vld [vmem:[#allocation9 + $0x1d0] sm:$0xff]
    %v4506 = vld [vmem:[#allocation9 + $0x1d8] sm:$0xff]
    %v4507 = vld [vmem:[#allocation9 + $0x1e0] sm:$0xff]
    %v4508 = vld [vmem:[#allocation9 + $0x1e8] sm:$0xff]
    %v4509 = vld [vmem:[#allocation9 + $0x1f0] sm:$0xff]
    %v4510 = vld [vmem:[#allocation9 + $0x1f8] sm:$0xff]
    %v4511 = vld [vmem:[#allocation9 + $0x200] sm:$0xff]
    %v4512 = vld [vmem:[#allocation9 + $0x208] sm:$0xff]
    %v4513 = vld [vmem:[#allocation9 + $0x210] sm:$0xff]
    %v4514 = vld [vmem:[#allocation9 + $0x218] sm:$0xff]
    %v4515 = vld [vmem:[#allocation9 + $0x220] sm:$0xff]
    %v4516 = vld [vmem:[#allocation9 + $0x228] sm:$0xff]
    %v4517 = vld [vmem:[#allocation9 + $0x230] sm:$0xff]
    %v4518 = vld [vmem:[#allocation9 + $0x238] sm:$0xff]
    %v4519 = vld [vmem:[#allocation9 + $0x240] sm:$0xff]
    %v4520 = vld [vmem:[#allocation9 + $0x248] sm:$0xff]
    %v4521 = vld [vmem:[#allocation9 + $0x250] sm:$0xff]
    %v4522 = vld [vmem:[#allocation9 + $0x258] sm:$0xff]
    %v4523 = vld [vmem:[#allocation9 + $0x260] sm:$0xff]
    %v4524 = vld [vmem:[#allocation9 + $0x268] sm:$0xff]
    %v4525 = vld [vmem:[#allocation9 + $0x270] sm:$0xff]
    %v4526 = vld [vmem:[#allocation9 + $0x278] sm:$0xff]
    %v4527 = vld [vmem:[#allocation9 + $0x280] sm:$0xff]
    %v4528 = vld [vmem:[#allocation9 + $0x288] sm:$0xff]
    %v4529 = vld [vmem:[#allocation9 + $0x290] sm:$0xff]
    %v4530 = vld [vmem:[#allocation9 + $0x298] sm:$0xff]
    %v4531 = vld [vmem:[#allocation9 + $0x2a0] sm:$0xff]
    %v4532 = vld [vmem:[#allocation9 + $0x2a8] sm:$0xff]
    %v4533 = vld [vmem:[#allocation9 + $0x2b0] sm:$0xff]
    %v4534 = vld [vmem:[#allocation9 + $0x2b8] sm:$0xff]
    %v4535 = vld [vmem:[#allocation9 + $0x2c0] sm:$0xff]
    %v4536 = vld [vmem:[#allocation9 + $0x2c8] sm:$0xff]
    %v4537 = vld [vmem:[#allocation9 + $0x2d0] sm:$0xff]
    %v4538 = vld [vmem:[#allocation9 + $0x2d8] sm:$0xff]
    %v4539 = vld [vmem:[#allocation9 + $0x2e0] sm:$0xff]
    %v4540 = vld [vmem:[#allocation9 + $0x2e8] sm:$0xff]
    %v4541 = vld [vmem:[#allocation9 + $0x2f0] sm:$0xff]
    %v4542 = vld [vmem:[#allocation9 + $0x2f8] sm:$0xff]
    %4543 = vmatpush.msra.mxu0 %v4462
    %4544 = vmatpush.msra.mxu0 %v4461
    %4545 = vmatpush.msra.mxu0 %v4460
    %4546 = vmatpush.msra.mxu0 %v4459
    %4547 = vmatpush.msra.mxu0 %v4458
    %4548 = vmatpush.msra.mxu0 %v4457
    %4549 = vmatpush.msra.mxu0 %v4456
    %4550 = vmatpush.msra.mxu0 %v4455
    %4551 = vmatpush.msra.mxu0 %v4454
    %4552 = vmatpush.msra.mxu0 %v4453
    %4553 = vmatpush.msra.mxu0 %v4452
    %4554 = vmatpush.msra.mxu0 %v4451
    %4555 = vmatpush.msra.mxu0 %v4450
    %4556 = vmatpush.msra.mxu0 %v4449
    %4557 = vmatpush.msra.mxu0 %v4448
    %4558 = vmatpush.msra.mxu0 %v4447
    %4559 = vmatmul.f32.gmra.mxu0 %v4435
    %v4560 = vpop.f32.mrf.mxu0
    %v4561 = vadd.f32 0.0, %v4560
    %4562 = vmatmul.f32.gmra.mxu0 %v4441
    %v4563 = vpop.f32.mrf.mxu0
    %v4564 = vadd.f32 0.0, %v4563
    %4565 = vdwg.mxu0
    %4566 = vmatpush.msra.mxu0 %v4478
    %4567 = vmatpush.msra.mxu0 %v4477
    %4568 = vmatpush.msra.mxu0 %v4476
    %4569 = vmatpush.msra.mxu0 %v4475
    %4570 = vmatpush.msra.mxu0 %v4474
    %4571 = vmatpush.msra.mxu0 %v4473
    %4572 = vmatpush.msra.mxu0 %v4472
    %4573 = vmatpush.msra.mxu0 %v4471
    %4574 = vmatpush.msra.mxu0 %v4470
    %4575 = vmatpush.msra.mxu0 %v4469
    %4576 = vmatpush.msra.mxu0 %v4468
    %4577 = vmatpush.msra.mxu0 %v4467
    %4578 = vmatpush.msra.mxu0 %v4466
    %4579 = vmatpush.msra.mxu0 %v4465
    %4580 = vmatpush.msra.mxu0 %v4464
    %4581 = vmatpush.msra.mxu0 %v4463
    %4582 = vmatmul.f32.gmra.mxu0 %v4436
    %v4583 = vpop.f32.mrf.mxu0
    %v4584 = vadd.f32 %v4561, %v4583
    %4585 = vmatmul.f32.gmra.mxu0 %v4442
    %v4586 = vpop.f32.mrf.mxu0
    %v4587 = vadd.f32 %v4564, %v4586
    %4588 = vdwg.mxu0
    %4589 = vmatpush.msra.mxu0 %v4494
    %4590 = vmatpush.msra.mxu0 %v4493
    %4591 = vmatpush.msra.mxu0 %v4492
    %4592 = vmatpush.msra.mxu0 %v4491
    %4593 = vmatpush.msra.mxu0 %v4490
    %4594 = vmatpush.msra.mxu0 %v4489
    %4595 = vmatpush.msra.mxu0 %v4488
    %4596 = vmatpush.msra.mxu0 %v4487
    %4597 = vmatpush.msra.mxu0 %v4486
    %4598 = vmatpush.msra.mxu0 %v4485
    %4599 = vmatpush.msra.mxu0 %v4484
    %4600 = vmatpush.msra.mxu0 %v4483
    %4601 = vmatpush.msra.mxu0 %v4482
    %4602 = vmatpush.msra.mxu0 %v4481
    %4603 = vmatpush.msra.mxu0 %v4480
    %4604 = vmatpush.msra.mxu0 %v4479
    %4605 = vmatmul.f32.gmra.mxu0 %v4437
    %v4606 = vpop.f32.mrf.mxu0
    %v4607 = vadd.f32 %v4584, %v4606
    %4608 = vmatmul.f32.gmra.mxu0 %v4443
    %v4609 = vpop.f32.mrf.mxu0
    %v4610 = vadd.f32 %v4587, %v4609
    %4611 = vdwg.mxu0
    %4612 = vmatpush.msra.mxu0 %v4510
    %4613 = vmatpush.msra.mxu0 %v4509
    %4614 = vmatpush.msra.mxu0 %v4508
    %4615 = vmatpush.msra.mxu0 %v4507
    %4616 = vmatpush.msra.mxu0 %v4506
    %4617 = vmatpush.msra.mxu0 %v4505
    %4618 = vmatpush.msra.mxu0 %v4504
    %4619 = vmatpush.msra.mxu0 %v4503
    %4620 = vmatpush.msra.mxu0 %v4502
    %4621 = vmatpush.msra.mxu0 %v4501
    %4622 = vmatpush.msra.mxu0 %v4500
    %4623 = vmatpush.msra.mxu0 %v4499
    %4624 = vmatpush.msra.mxu0 %v4498
    %4625 = vmatpush.msra.mxu0 %v4497
    %4626 = vmatpush.msra.mxu0 %v4496
    %4627 = vmatpush.msra.mxu0 %v4495
    %4628 = vmatmul.f32.gmra.mxu0 %v4438
    %v4629 = vpop.f32.mrf.mxu0
    %v4630 = vadd.f32 %v4607, %v4629
    %4631 = vmatmul.f32.gmra.mxu0 %v4444
    %v4632 = vpop.f32.mrf.mxu0
    %v4633 = vadd.f32 %v4610, %v4632
    %4634 = vdwg.mxu0
    %4635 = vmatpush.msra.mxu0 %v4526
    %4636 = vmatpush.msra.mxu0 %v4525
    %4637 = vmatpush.msra.mxu0 %v4524
    %4638 = vmatpush.msra.mxu0 %v4523
    %4639 = vmatpush.msra.mxu0 %v4522
    %4640 = vmatpush.msra.mxu0 %v4521
    %4641 = vmatpush.msra.mxu0 %v4520
    %4642 = vmatpush.msra.mxu0 %v4519
    %4643 = vmatpush.msra.mxu0 %v4518
    %4644 = vmatpush.msra.mxu0 %v4517
    %4645 = vmatpush.msra.mxu0 %v4516
    %4646 = vmatpush.msra.mxu0 %v4515
    %4647 = vmatpush.msra.mxu0 %v4514
    %4648 = vmatpush.msra.mxu0 %v4513
    %4649 = vmatpush.msra.mxu0 %v4512
    %4650 = vmatpush.msra.mxu0 %v4511
    %4651 = vmatmul.f32.gmra.mxu0 %v4439
    %v4652 = vpop.f32.mrf.mxu0
    %v4653 = vadd.f32 %v4630, %v4652
    %4654 = vmatmul.f32.gmra.mxu0 %v4445
    %v4655 = vpop.f32.mrf.mxu0
    %v4656 = vadd.f32 %v4633, %v4655
    %4657 = vdwg.mxu0
    %4658 = vmatpush.msra.mxu0 %v4542
    %4659 = vmatpush.msra.mxu0 %v4541
    %4660 = vmatpush.msra.mxu0 %v4540
    %4661 = vmatpush.msra.mxu0 %v4539
    %4662 = vmatpush.msra.mxu0 %v4538
    %4663 = vmatpush.msra.mxu0 %v4537
    %4664 = vmatpush.msra.mxu0 %v4536
    %4665 = vmatpush.msra.mxu0 %v4535
    %4666 = vmatpush.msra.mxu0 %v4534
    %4667 = vmatpush.msra.mxu0 %v4533
    %4668 = vmatpush.msra.mxu0 %v4532
    %4669 = vmatpush.msra.mxu0 %v4531
    %4670 = vmatpush.msra.mxu0 %v4530
    %4671 = vmatpush.msra.mxu0 %v4529
    %4672 = vmatpush.msra.mxu0 %v4528
    %4673 = vmatpush.msra.mxu0 %v4527
    %4674 = vmatmul.f32.gmra.mxu0 %v4440
    %v4675 = vpop.f32.mrf.mxu0
    %v4676 = vadd.f32 %v4653, %v4675
    %4677 = vmatmul.f32.gmra.mxu0 %v4446
    %v4678 = vpop.f32.mrf.mxu0
    %v4679 = vadd.f32 %v4656, %v4678
    %4680 = vdwg.mxu0
    %vm4681 = vcmask 286720
    %4682 = vst.msk [vmem:[#allocation8] sm:$0x1] %vm4681, %v4676
    %v4684 = vrot.slane %v4676, 7
    %v4685 = vrot.slane %v4684, 2
    %4686 = vrot.lane.b32.xlu0 %v4685, 36
    %v4687 = vpop.permute.xlu0 %4686
    %vm4689 = vcmask 581920
    %4690 = vst.msk [vmem:[#allocation8] sm:$0x1] %vm4689, %v4687
    %4691 = vst.sshfl [vmem:[#allocation1] sm:$0xff pattern:$0x73625140] %v4676
    %s4692 = scalar_lea.vmem [#allocation1], 1
    %v4693 = vld [vmem:[%s4692] ss:$4 sm:$0xff]
    %4694 = vrot.lane.b32.xlu0 %v4693, 72
    %v4695 = vpop.permute.xlu0 %4694
    %vm4697 = vcmask 877120
    %4698 = vst.msk [vmem:[#allocation8] sm:$0x1] %vm4697, %v4695
    %4699 = vst.sshfl [vmem:[#allocation1] sm:$0xff pattern:$0x73625140] %v4676
    %s4700 = scalar_lea.vmem [#allocation1], 1
    %v4701 = vld [vmem:[%s4700] ss:$4 sm:$0xff]
    %v4702 = vrot.slane %v4701, 7
    %v4703 = vrot.slane %v4702, 2
    %4704 = vrot.lane.b32.xlu0 %v4703, 108
    %v4705 = vpop.permute.xlu0 %4704
    %v4706 = vrot.slane %v4705, 6
    %vm4707 = vcmask 883712
    %v4708 = vsel %vm4707, %v4706, %v4705
    %vm4710 = vcmask 1041248
    %vm4711 = vcmask 124930
    %vm4712 = vmor %vm4711, %vm4710
    %4713 = vst.msk [vmem:[#allocation8] sm:$0x5] %vm4712, %v4708
    %4714 = vst.sshfl [vmem:[#allocation1] sm:$0xff pattern:$0x73625140] %v4676
    %s4715 = scalar_lea.vmem [#allocation1], 2
    %v4716 = vld [vmem:[%s4715] ss:$4 sm:$0xff]
    %4717 = vrot.lane.b32.xlu0 %v4716, 16
    %v4718 = vpop.permute.xlu0 %4717
    %vm4720 = vcmask 417920
    %4721 = vst.msk [vmem:[#allocation8 + $0x2] sm:$0x1] %vm4720, %v4718
    %4722 = vst.sshfl [vmem:[#allocation1] sm:$0xff pattern:$0x73625140] %v4676
    %s4723 = scalar_lea.vmem [#allocation1], 2
    %v4724 = vld [vmem:[%s4723] ss:$4 sm:$0xff]
    %v4725 = vrot.slane %v4724, 7
    %v4726 = vrot.slane %v4725, 2
    %4727 = vrot.lane.b32.xlu0 %v4726, 52
    %v4728 = vpop.permute.xlu0 %4727
    %vm4730 = vcmask 713120
    %4731 = vst.msk [vmem:[#allocation8 + $0x2] sm:$0x1] %vm4730, %v4728
    %4732 = vst.sshfl [vmem:[#allocation1] sm:$0xff pattern:$0x73625140] %v4676
    %s4733 = scalar_lea.vmem [#allocation1], 3
    %v4734 = vld [vmem:[%s4733] ss:$4 sm:$0xff]
    %4735 = vrot.lane.b32.xlu0 %v4734, 88
    %v4736 = vpop.permute.xlu0 %4735
    %vm4738 = vcmask 1008320
    %4739 = vst.msk [vmem:[#allocation8 + $0x2] sm:$0x1] %vm4738, %v4736
    %4740 = vst.sshfl [vmem:[#allocation1] sm:$0xff pattern:$0x73625140] %v4676
    %s4741 = scalar_lea.vmem [#allocation1], 3
    %v4742 = vld [vmem:[%s4741] ss:$4 sm:$0xff]
    %v4743 = vrot.slane %v4742, 7
    %v4744 = vrot.slane %v4743, 2
    %4745 = vrot.lane.b32.xlu0 %v4744, 124
    %v4746 = vpop.permute.xlu0 %4745
    %v4747 = vrot.slane %v4746, 6
    %v4748 = vsel %vm2494, %v4747, %v4746
    %vm4750 = vcmask 1041376
    %vm4751 = vcmask 256002
    %vm4752 = vmor %vm4751, %vm4750
    %4753 = vst.msk [vmem:[#allocation8 + $0x2] sm:$0x5] %vm4752, %v4748
    %4755 = vrot.lane.b32.xlu0 %v4679, 32
    %v4756 = vpop.permute.xlu0 %4755
    %vm4758 = vcmask 549120
    %4759 = vst.msk [vmem:[#allocation8 + $0x4] sm:$0x1] %vm4758, %v4756
    %v4760 = vrot.slane %v4679, 7
    %v4761 = vrot.slane %v4760, 2
    %4762 = vrot.lane.b32.xlu0 %v4761, 68
    %v4763 = vpop.permute.xlu0 %4762
    %vm4765 = vcmask 844320
    %4766 = vst.msk [vmem:[#allocation8 + $0x4] sm:$0x1] %vm4765, %v4763
    %4767 = vst.sshfl [vmem:[#allocation1] sm:$0xff pattern:$0x73625140] %v4679
    %s4768 = scalar_lea.vmem [#allocation1], 1
    %v4769 = vld [vmem:[%s4768] ss:$4 sm:$0xff]
    %4770 = vrot.lane.b32.xlu0 %v4769, 104
    %v4771 = vpop.permute.xlu0 %4770
    %v4772 = vrot.slane %v4771, 6
    %vm4773 = vcmask 850944
    %v4774 = vsel %vm4773, %v4772, %v4771
    %vm4776 = vcmask 1041216
    %vm4777 = vcmask 92162
    %vm4778 = vmor %vm4777, %vm4776
    %4779 = vst.msk [vmem:[#allocation8 + $0x4] sm:$0x5] %vm4778, %v4774
    %4780 = vst.sshfl [vmem:[#allocation1] sm:$0xff pattern:$0x73625140] %v4679
    %s4781 = scalar_lea.vmem [#allocation1], 1
    %v4782 = vld [vmem:[%s4781] ss:$4 sm:$0xff]
    %v4783 = vrot.slane %v4782, 7
    %v4784 = vrot.slane %v4783, 2
    %4785 = vrot.lane.b32.xlu0 %v4784, 12
    %v4786 = vpop.permute.xlu0 %4785
    %vm4788 = vcmask 385120
    %4789 = vst.msk [vmem:[#allocation8 + $0x6] sm:$0x1] %vm4788, %v4786
    %4790 = vst.sshfl [vmem:[#allocation1] sm:$0xff pattern:$0x73625140] %v4679
    %s4791 = scalar_lea.vmem [#allocation1], 2
    %v4792 = vld [vmem:[%s4791] ss:$4 sm:$0xff]
    %4793 = vrot.lane.b32.xlu0 %v4792, 48
    %v4794 = vpop.permute.xlu0 %4793
    %vm4796 = vcmask 680320
    %4797 = vst.msk [vmem:[#allocation8 + $0x6] sm:$0x1] %vm4796, %v4794
    %4798 = vst.sshfl [vmem:[#allocation1] sm:$0xff pattern:$0x73625140] %v4679
    %s4799 = scalar_lea.vmem [#allocation1], 2
    %v4800 = vld [vmem:[%s4799] ss:$4 sm:$0xff]
    %v4801 = vrot.slane %v4800, 7
    %v4802 = vrot.slane %v4801, 2
    %4803 = vrot.lane.b32.xlu0 %v4802, 84
    %v4804 = vpop.permute.xlu0 %4803
    %vm4806 = vcmask 975520
    %4807 = vst.msk [vmem:[#allocation8 + $0x6] sm:$0x1] %vm4806, %v4804
    %4808 = vst.sshfl [vmem:[#allocation1] sm:$0xff pattern:$0x73625140] %v4679
    %s4809 = scalar_lea.vmem [#allocation1], 3
    %v4810 = vld [vmem:[%s4809] ss:$4 sm:$0xff]
    %4811 = vrot.lane.b32.xlu0 %v4810, 120
    %v4812 = vpop.permute.xlu0 %4811
    %v4813 = vrot.slane %v4812, 6
    %vm4814 = vcmask 982016
    %v4815 = vsel %vm4814, %v4813, %v4812
    %vm4817 = vcmask 1041344
    %vm4818 = vcmask 223234
    %vm4819 = vmor %vm4818, %vm4817
    %4820 = vst.msk [vmem:[#allocation8 + $0x6] sm:$0x5] %vm4819, %v4815
    %4821 = vst.sshfl [vmem:[#allocation1] sm:$0xff pattern:$0x73625140] %v4679
    %s4822 = scalar_lea.vmem [#allocation1], 3
    %v4823 = vld [vmem:[%s4822] ss:$4 sm:$0xff]
    %v4824 = vrot.slane %v4823, 7
    %v4825 = vrot.slane %v4824, 2
    %4826 = vrot.lane.b32.xlu0 %v4825, 28
    %v4827 = vpop.permute.xlu0 %4826
    %vm4829 = vcmask 516320
    %4830 = vst.msk [vmem:[#allocation8 + $0x8] sm:$0x1] %vm4829, %v4827
    %v4831 = vld [vmem:[#allocation7 + $0x50] sm:$0xff]
    %v4832 = vld [vmem:[#allocation7 + $0x58] sm:$0xff]
    %v4833 = vld [vmem:[#allocation7 + $0x60] sm:$0xff]
    %v4834 = vld [vmem:[#allocation7 + $0x68] sm:$0xff]
    %v4835 = vld [vmem:[#allocation7 + $0x70] sm:$0xff]
    %v4836 = vld [vmem:[#allocation7 + $0x78] sm:$0xff]
    %v4837 = vld [vmem:[#allocation7 + $0xf0] sm:$0xff]
    %v4838 = vld [vmem:[#allocation7 + $0xf8] sm:$0xff]
    %v4839 = vld [vmem:[#allocation7 + $0x100] sm:$0xff]
    %v4840 = vld [vmem:[#allocation7 + $0x108] sm:$0xff]
    %v4841 = vld [vmem:[#allocation7 + $0x110] sm:$0xff]
    %v4842 = vld [vmem:[#allocation7 + $0x118] sm:$0xff]
    %v4843 = vld [vmem:[#allocation9] sm:$0xff]
    %v4844 = vld [vmem:[#allocation9 + $0x8] sm:$0xff]
    %v4845 = vld [vmem:[#allocation9 + $0x10] sm:$0xff]
    %v4846 = vld [vmem:[#allocation9 + $0x18] sm:$0xff]
    %v4847 = vld [vmem:[#allocation9 + $0x20] sm:$0xff]
    %v4848 = vld [vmem:[#allocation9 + $0x28] sm:$0xff]
    %v4849 = vld [vmem:[#allocation9 + $0x30] sm:$0xff]
    %v4850 = vld [vmem:[#allocation9 + $0x38] sm:$0xff]
    %v4851 = vld [vmem:[#allocation9 + $0x40] sm:$0xff]
    %v4852 = vld [vmem:[#allocation9 + $0x48] sm:$0xff]
    %v4853 = vld [vmem:[#allocation9 + $0x50] sm:$0xff]
    %v4854 = vld [vmem:[#allocation9 + $0x58] sm:$0xff]
    %v4855 = vld [vmem:[#allocation9 + $0x60] sm:$0xff]
    %v4856 = vld [vmem:[#allocation9 + $0x68] sm:$0xff]
    %v4857 = vld [vmem:[#allocation9 + $0x70] sm:$0xff]
    %v4858 = vld [vmem:[#allocation9 + $0x78] sm:$0xff]
    %v4859 = vld [vmem:[#allocation9 + $0x80] sm:$0xff]
    %v4860 = vld [vmem:[#allocation9 + $0x88] sm:$0xff]
    %v4861 = vld [vmem:[#allocation9 + $0x90] sm:$0xff]
    %v4862 = vld [vmem:[#allocation9 + $0x98] sm:$0xff]
    %v4863 = vld [vmem:[#allocation9 + $0xa0] sm:$0xff]
    %v4864 = vld [vmem:[#allocation9 + $0xa8] sm:$0xff]
    %v4865 = vld [vmem:[#allocation9 + $0xb0] sm:$0xff]
    %v4866 = vld [vmem:[#allocation9 + $0xb8] sm:$0xff]
    %v4867 = vld [vmem:[#allocation9 + $0xc0] sm:$0xff]
    %v4868 = vld [vmem:[#allocation9 + $0xc8] sm:$0xff]
    %v4869 = vld [vmem:[#allocation9 + $0xd0] sm:$0xff]
    %v4870 = vld [vmem:[#allocation9 + $0xd8] sm:$0xff]
    %v4871 = vld [vmem:[#allocation9 + $0xe0] sm:$0xff]
    %v4872 = vld [vmem:[#allocation9 + $0xe8] sm:$0xff]
    %v4873 = vld [vmem:[#allocation9 + $0xf0] sm:$0xff]
    %v4874 = vld [vmem:[#allocation9 + $0xf8] sm:$0xff]
    %v4875 = vld [vmem:[#allocation9 + $0x100] sm:$0xff]
    %v4876 = vld [vmem:[#allocation9 + $0x108] sm:$0xff]
    %v4877 = vld [vmem:[#allocation9 + $0x110] sm:$0xff]
    %v4878 = vld [vmem:[#allocation9 + $0x118] sm:$0xff]
    %v4879 = vld [vmem:[#allocation9 + $0x120] sm:$0xff]
    %v4880 = vld [vmem:[#allocation9 + $0x128] sm:$0xff]
    %v4881 = vld [vmem:[#allocation9 + $0x130] sm:$0xff]
    %v4882 = vld [vmem:[#allocation9 + $0x138] sm:$0xff]
    %v4883 = vld [vmem:[#allocation9 + $0x140] sm:$0xff]
    %v4884 = vld [vmem:[#allocation9 + $0x148] sm:$0xff]
    %v4885 = vld [vmem:[#allocation9 + $0x150] sm:$0xff]
    %v4886 = vld [vmem:[#allocation9 + $0x158] sm:$0xff]
    %v4887 = vld [vmem:[#allocation9 + $0x160] sm:$0xff]
    %v4888 = vld [vmem:[#allocation9 + $0x168] sm:$0xff]
    %v4889 = vld [vmem:[#allocation9 + $0x170] sm:$0xff]
    %v4890 = vld [vmem:[#allocation9 + $0x178] sm:$0xff]
    %v4891 = vld [vmem:[#allocation9 + $0x180] sm:$0xff]
    %v4892 = vld [vmem:[#allocation9 + $0x188] sm:$0xff]
    %v4893 = vld [vmem:[#allocation9 + $0x190] sm:$0xff]
    %v4894 = vld [vmem:[#allocation9 + $0x198] sm:$0xff]
    %v4895 = vld [vmem:[#allocation9 + $0x1a0] sm:$0xff]
    %v4896 = vld [vmem:[#allocation9 + $0x1a8] sm:$0xff]
    %v4897 = vld [vmem:[#allocation9 + $0x1b0] sm:$0xff]
    %v4898 = vld [vmem:[#allocation9 + $0x1b8] sm:$0xff]
    %v4899 = vld [vmem:[#allocation9 + $0x1c0] sm:$0xff]
    %v4900 = vld [vmem:[#allocation9 + $0x1c8] sm:$0xff]
    %v4901 = vld [vmem:[#allocation9 + $0x1d0] sm:$0xff]
    %v4902 = vld [vmem:[#allocation9 + $0x1d8] sm:$0xff]
    %v4903 = vld [vmem:[#allocation9 + $0x1e0] sm:$0xff]
    %v4904 = vld [vmem:[#allocation9 + $0x1e8] sm:$0xff]
    %v4905 = vld [vmem:[#allocation9 + $0x1f0] sm:$0xff]
    %v4906 = vld [vmem:[#allocation9 + $0x1f8] sm:$0xff]
    %v4907 = vld [vmem:[#allocation9 + $0x200] sm:$0xff]
    %v4908 = vld [vmem:[#allocation9 + $0x208] sm:$0xff]
    %v4909 = vld [vmem:[#allocation9 + $0x210] sm:$0xff]
    %v4910 = vld [vmem:[#allocation9 + $0x218] sm:$0xff]
    %v4911 = vld [vmem:[#allocation9 + $0x220] sm:$0xff]
    %v4912 = vld [vmem:[#allocation9 + $0x228] sm:$0xff]
    %v4913 = vld [vmem:[#allocation9 + $0x230] sm:$0xff]
    %v4914 = vld [vmem:[#allocation9 + $0x238] sm:$0xff]
    %v4915 = vld [vmem:[#allocation9 + $0x240] sm:$0xff]
    %v4916 = vld [vmem:[#allocation9 + $0x248] sm:$0xff]
    %v4917 = vld [vmem:[#allocation9 + $0x250] sm:$0xff]
    %v4918 = vld [vmem:[#allocation9 + $0x258] sm:$0xff]
    %v4919 = vld [vmem:[#allocation9 + $0x260] sm:$0xff]
    %v4920 = vld [vmem:[#allocation9 + $0x268] sm:$0xff]
    %v4921 = vld [vmem:[#allocation9 + $0x270] sm:$0xff]
    %v4922 = vld [vmem:[#allocation9 + $0x278] sm:$0xff]
    %v4923 = vld [vmem:[#allocation9 + $0x280] sm:$0xff]
    %v4924 = vld [vmem:[#allocation9 + $0x288] sm:$0xff]
    %v4925 = vld [vmem:[#allocation9 + $0x290] sm:$0xff]
    %v4926 = vld [vmem:[#allocation9 + $0x298] sm:$0xff]
    %v4927 = vld [vmem:[#allocation9 + $0x2a0] sm:$0xff]
    %v4928 = vld [vmem:[#allocation9 + $0x2a8] sm:$0xff]
    %v4929 = vld [vmem:[#allocation9 + $0x2b0] sm:$0xff]
    %v4930 = vld [vmem:[#allocation9 + $0x2b8] sm:$0xff]
    %v4931 = vld [vmem:[#allocation9 + $0x2c0] sm:$0xff]
    %v4932 = vld [vmem:[#allocation9 + $0x2c8] sm:$0xff]
    %v4933 = vld [vmem:[#allocation9 + $0x2d0] sm:$0xff]
    %v4934 = vld [vmem:[#allocation9 + $0x2d8] sm:$0xff]
    %v4935 = vld [vmem:[#allocation9 + $0x2e0] sm:$0xff]
    %v4936 = vld [vmem:[#allocation9 + $0x2e8] sm:$0xff]
    %v4937 = vld [vmem:[#allocation9 + $0x2f0] sm:$0xff]
    %v4938 = vld [vmem:[#allocation9 + $0x2f8] sm:$0xff]
    %4939 = vmatpush.msra.mxu0 %v4858
    %4940 = vmatpush.msra.mxu0 %v4857
    %4941 = vmatpush.msra.mxu0 %v4856
    %4942 = vmatpush.msra.mxu0 %v4855
    %4943 = vmatpush.msra.mxu0 %v4854
    %4944 = vmatpush.msra.mxu0 %v4853
    %4945 = vmatpush.msra.mxu0 %v4852
    %4946 = vmatpush.msra.mxu0 %v4851
    %4947 = vmatpush.msra.mxu0 %v4850
    %4948 = vmatpush.msra.mxu0 %v4849
    %4949 = vmatpush.msra.mxu0 %v4848
    %4950 = vmatpush.msra.mxu0 %v4847
    %4951 = vmatpush.msra.mxu0 %v4846
    %4952 = vmatpush.msra.mxu0 %v4845
    %4953 = vmatpush.msra.mxu0 %v4844
    %4954 = vmatpush.msra.mxu0 %v4843
    %4955 = vmatmul.f32.gmra.mxu0 %v4831
    %v4956 = vpop.f32.mrf.mxu0
    %v4957 = vadd.f32 0.0, %v4956
    %4958 = vmatmul.f32.gmra.mxu0 %v4837
    %v4959 = vpop.f32.mrf.mxu0
    %v4960 = vadd.f32 0.0, %v4959
    %4961 = vdwg.mxu0
    %4962 = vmatpush.msra.mxu0 %v4874
    %4963 = vmatpush.msra.mxu0 %v4873
    %4964 = vmatpush.msra.mxu0 %v4872
    %4965 = vmatpush.msra.mxu0 %v4871
    %4966 = vmatpush.msra.mxu0 %v4870
    %4967 = vmatpush.msra.mxu0 %v4869
    %4968 = vmatpush.msra.mxu0 %v4868
    %4969 = vmatpush.msra.mxu0 %v4867
    %4970 = vmatpush.msra.mxu0 %v4866
    %4971 = vmatpush.msra.mxu0 %v4865
    %4972 = vmatpush.msra.mxu0 %v4864
    %4973 = vmatpush.msra.mxu0 %v4863
    %4974 = vmatpush.msra.mxu0 %v4862
    %4975 = vmatpush.msra.mxu0 %v4861
    %4976 = vmatpush.msra.mxu0 %v4860
    %4977 = vmatpush.msra.mxu0 %v4859
    %4978 = vmatmul.f32.gmra.mxu0 %v4832
    %v4979 = vpop.f32.mrf.mxu0
    %v4980 = vadd.f32 %v4957, %v4979
    %4981 = vmatmul.f32.gmra.mxu0 %v4838
    %v4982 = vpop.f32.mrf.mxu0
    %v4983 = vadd.f32 %v4960, %v4982
    %4984 = vdwg.mxu0
    %4985 = vmatpush.msra.mxu0 %v4890
    %4986 = vmatpush.msra.mxu0 %v4889
    %4987 = vmatpush.msra.mxu0 %v4888
    %4988 = vmatpush.msra.mxu0 %v4887
    %4989 = vmatpush.msra.mxu0 %v4886
    %4990 = vmatpush.msra.mxu0 %v4885
    %4991 = vmatpush.msra.mxu0 %v4884
    %4992 = vmatpush.msra.mxu0 %v4883
    %4993 = vmatpush.msra.mxu0 %v4882
    %4994 = vmatpush.msra.mxu0 %v4881
    %4995 = vmatpush.msra.mxu0 %v4880
    %4996 = vmatpush.msra.mxu0 %v4879
    %4997 = vmatpush.msra.mxu0 %v4878
    %4998 = vmatpush.msra.mxu0 %v4877
    %4999 = vmatpush.msra.mxu0 %v4876
    %5000 = vmatpush.msra.mxu0 %v4875
    %5001 = vmatmul.f32.gmra.mxu0 %v4833
    %v5002 = vpop.f32.mrf.mxu0
    %v5003 = vadd.f32 %v4980, %v5002
    %5004 = vmatmul.f32.gmra.mxu0 %v4839
    %v5005 = vpop.f32.mrf.mxu0
    %v5006 = vadd.f32 %v4983, %v5005
    %5007 = vdwg.mxu0
    %5008 = vmatpush.msra.mxu0 %v4906
    %5009 = vmatpush.msra.mxu0 %v4905
    %5010 = vmatpush.msra.mxu0 %v4904
    %5011 = vmatpush.msra.mxu0 %v4903
    %5012 = vmatpush.msra.mxu0 %v4902
    %5013 = vmatpush.msra.mxu0 %v4901
    %5014 = vmatpush.msra.mxu0 %v4900
    %5015 = vmatpush.msra.mxu0 %v4899
    %5016 = vmatpush.msra.mxu0 %v4898
    %5017 = vmatpush.msra.mxu0 %v4897
    %5018 = vmatpush.msra.mxu0 %v4896
    %5019 = vmatpush.msra.mxu0 %v4895
    %5020 = vmatpush.msra.mxu0 %v4894
    %5021 = vmatpush.msra.mxu0 %v4893
    %5022 = vmatpush.msra.mxu0 %v4892
    %5023 = vmatpush.msra.mxu0 %v4891
    %5024 = vmatmul.f32.gmra.mxu0 %v4834
    %v5025 = vpop.f32.mrf.mxu0
    %v5026 = vadd.f32 %v5003, %v5025
    %5027 = vmatmul.f32.gmra.mxu0 %v4840
    %v5028 = vpop.f32.mrf.mxu0
    %v5029 = vadd.f32 %v5006, %v5028
    %5030 = vdwg.mxu0
    %5031 = vmatpush.msra.mxu0 %v4922
    %5032 = vmatpush.msra.mxu0 %v4921
    %5033 = vmatpush.msra.mxu0 %v4920
    %5034 = vmatpush.msra.mxu0 %v4919
    %5035 = vmatpush.msra.mxu0 %v4918
    %5036 = vmatpush.msra.mxu0 %v4917
    %5037 = vmatpush.msra.mxu0 %v4916
    %5038 = vmatpush.msra.mxu0 %v4915
    %5039 = vmatpush.msra.mxu0 %v4914
    %5040 = vmatpush.msra.mxu0 %v4913
    %5041 = vmatpush.msra.mxu0 %v4912
    %5042 = vmatpush.msra.mxu0 %v4911
    %5043 = vmatpush.msra.mxu0 %v4910
    %5044 = vmatpush.msra.mxu0 %v4909
    %5045 = vmatpush.msra.mxu0 %v4908
    %5046 = vmatpush.msra.mxu0 %v4907
    %5047 = vmatmul.f32.gmra.mxu0 %v4835
    %v5048 = vpop.f32.mrf.mxu0
    %v5049 = vadd.f32 %v5026, %v5048
    %5050 = vmatmul.f32.gmra.mxu0 %v4841
    %v5051 = vpop.f32.mrf.mxu0
    %v5052 = vadd.f32 %v5029, %v5051
    %5053 = vdwg.mxu0
    %5054 = vmatpush.msra.mxu0 %v4938
    %5055 = vmatpush.msra.mxu0 %v4937
    %5056 = vmatpush.msra.mxu0 %v4936
    %5057 = vmatpush.msra.mxu0 %v4935
    %5058 = vmatpush.msra.mxu0 %v4934
    %5059 = vmatpush.msra.mxu0 %v4933
    %5060 = vmatpush.msra.mxu0 %v4932
    %5061 = vmatpush.msra.mxu0 %v4931
    %5062 = vmatpush.msra.mxu0 %v4930
    %5063 = vmatpush.msra.mxu0 %v4929
    %5064 = vmatpush.msra.mxu0 %v4928
    %5065 = vmatpush.msra.mxu0 %v4927
    %5066 = vmatpush.msra.mxu0 %v4926
    %5067 = vmatpush.msra.mxu0 %v4925
    %5068 = vmatpush.msra.mxu0 %v4924
    %5069 = vmatpush.msra.mxu0 %v4923
    %5070 = vmatmul.f32.gmra.mxu0 %v4836
    %v5071 = vpop.f32.mrf.mxu0
    %v5072 = vadd.f32 %v5049, %v5071
    %5073 = vmatmul.f32.gmra.mxu0 %v4842
    %v5074 = vpop.f32.mrf.mxu0
    %v5075 = vadd.f32 %v5052, %v5074
    %5076 = vdwg.mxu0
    %5077 = vst.msk [vmem:[#allocation8 + $0x1] sm:$0x1] %vm4681, %v5072
    %v5079 = vrot.slane %v5072, 7
    %v5080 = vrot.slane %v5079, 2
    %5081 = vrot.lane.b32.xlu0 %v5080, 36
    %v5082 = vpop.permute.xlu0 %5081
    %5084 = vst.msk [vmem:[#allocation8 + $0x1] sm:$0x1] %vm4689, %v5082
    %5085 = vst.sshfl [vmem:[#allocation1] sm:$0xff pattern:$0x73625140] %v5072
    %s5086 = scalar_lea.vmem [#allocation1], 1
    %v5087 = vld [vmem:[%s5086] ss:$4 sm:$0xff]
    %5088 = vrot.lane.b32.xlu0 %v5087, 72
    %v5089 = vpop.permute.xlu0 %5088
    %5091 = vst.msk [vmem:[#allocation8 + $0x1] sm:$0x1] %vm4697, %v5089
    %5092 = vst.sshfl [vmem:[#allocation1] sm:$0xff pattern:$0x73625140] %v5072
    %s5093 = scalar_lea.vmem [#allocation1], 1
    %v5094 = vld [vmem:[%s5093] ss:$4 sm:$0xff]
    %v5095 = vrot.slane %v5094, 7
    %v5096 = vrot.slane %v5095, 2
    %5097 = vrot.lane.b32.xlu0 %v5096, 108
    %v5098 = vpop.permute.xlu0 %5097
    %v5099 = vrot.slane %v5098, 6
    %v5100 = vsel %vm4707, %v5099, %v5098
    %5102 = vst.msk [vmem:[#allocation8 + $0x1] sm:$0x5] %vm4712, %v5100
    %5103 = vst.sshfl [vmem:[#allocation1] sm:$0xff pattern:$0x73625140] %v5072
    %s5104 = scalar_lea.vmem [#allocation1], 2
    %v5105 = vld [vmem:[%s5104] ss:$4 sm:$0xff]
    %5106 = vrot.lane.b32.xlu0 %v5105, 16
    %v5107 = vpop.permute.xlu0 %5106
    %5109 = vst.msk [vmem:[#allocation8 + $0x3] sm:$0x1] %vm4720, %v5107
    %5110 = vst.sshfl [vmem:[#allocation1] sm:$0xff pattern:$0x73625140] %v5072
    %s5111 = scalar_lea.vmem [#allocation1], 2
    %v5112 = vld [vmem:[%s5111] ss:$4 sm:$0xff]
    %v5113 = vrot.slane %v5112, 7
    %v5114 = vrot.slane %v5113, 2
    %5115 = vrot.lane.b32.xlu0 %v5114, 52
    %v5116 = vpop.permute.xlu0 %5115
    %5118 = vst.msk [vmem:[#allocation8 + $0x3] sm:$0x1] %vm4730, %v5116
    %5119 = vst.sshfl [vmem:[#allocation1] sm:$0xff pattern:$0x73625140] %v5072
    %s5120 = scalar_lea.vmem [#allocation1], 3
    %v5121 = vld [vmem:[%s5120] ss:$4 sm:$0xff]
    %5122 = vrot.lane.b32.xlu0 %v5121, 88
    %v5123 = vpop.permute.xlu0 %5122
    %5125 = vst.msk [vmem:[#allocation8 + $0x3] sm:$0x1] %vm4738, %v5123
    %5126 = vst.sshfl [vmem:[#allocation1] sm:$0xff pattern:$0x73625140] %v5072
    %s5127 = scalar_lea.vmem [#allocation1], 3
    %v5128 = vld [vmem:[%s5127] ss:$4 sm:$0xff]
    %v5129 = vrot.slane %v5128, 7
    %v5130 = vrot.slane %v5129, 2
    %5131 = vrot.lane.b32.xlu0 %v5130, 124
    %v5132 = vpop.permute.xlu0 %5131
    %v5133 = vrot.slane %v5132, 6
    %v5134 = vsel %vm2494, %v5133, %v5132
    %5136 = vst.msk [vmem:[#allocation8 + $0x3] sm:$0x5] %vm4752, %v5134
    %5138 = vrot.lane.b32.xlu0 %v5075, 32
    %v5139 = vpop.permute.xlu0 %5138
    %5141 = vst.msk [vmem:[#allocation8 + $0x5] sm:$0x1] %vm4758, %v5139
    %v5142 = vrot.slane %v5075, 7
    %v5143 = vrot.slane %v5142, 2
    %5144 = vrot.lane.b32.xlu0 %v5143, 68
    %v5145 = vpop.permute.xlu0 %5144
    %5147 = vst.msk [vmem:[#allocation8 + $0x5] sm:$0x1] %vm4765, %v5145
    %5148 = vst.sshfl [vmem:[#allocation1] sm:$0xff pattern:$0x73625140] %v5075
    %s5149 = scalar_lea.vmem [#allocation1], 1
    %v5150 = vld [vmem:[%s5149] ss:$4 sm:$0xff]
    %5151 = vrot.lane.b32.xlu0 %v5150, 104
    %v5152 = vpop.permute.xlu0 %5151
    %v5153 = vrot.slane %v5152, 6
    %v5154 = vsel %vm4773, %v5153, %v5152
    %5156 = vst.msk [vmem:[#allocation8 + $0x5] sm:$0x5] %vm4778, %v5154
    %5157 = vst.sshfl [vmem:[#allocation1] sm:$0xff pattern:$0x73625140] %v5075
    %s5158 = scalar_lea.vmem [#allocation1], 1
    %v5159 = vld [vmem:[%s5158] ss:$4 sm:$0xff]
    %v5160 = vrot.slane %v5159, 7
    %v5161 = vrot.slane %v5160, 2
    %5162 = vrot.lane.b32.xlu0 %v5161, 12
    %v5163 = vpop.permute.xlu0 %5162
    %5165 = vst.msk [vmem:[#allocation8 + $0x7] sm:$0x1] %vm4788, %v5163
    %5166 = vst.sshfl [vmem:[#allocation1] sm:$0xff pattern:$0x73625140] %v5075
    %s5167 = scalar_lea.vmem [#allocation1], 2
    %v5168 = vld [vmem:[%s5167] ss:$4 sm:$0xff]
    %5169 = vrot.lane.b32.xlu0 %v5168, 48
    %v5170 = vpop.permute.xlu0 %5169
    %5172 = vst.msk [vmem:[#allocation8 + $0x7] sm:$0x1] %vm4796, %v5170
    %5173 = vst.sshfl [vmem:[#allocation1] sm:$0xff pattern:$0x73625140] %v5075
    %s5174 = scalar_lea.vmem [#allocation1], 2
    %v5175 = vld [vmem:[%s5174] ss:$4 sm:$0xff]
    %v5176 = vrot.slane %v5175, 7
    %v5177 = vrot.slane %v5176, 2
    %5178 = vrot.lane.b32.xlu0 %v5177, 84
    %v5179 = vpop.permute.xlu0 %5178
    %5181 = vst.msk [vmem:[#allocation8 + $0x7] sm:$0x1] %vm4806, %v5179
    %5182 = vst.sshfl [vmem:[#allocation1] sm:$0xff pattern:$0x73625140] %v5075
    %s5183 = scalar_lea.vmem [#allocation1], 3
    %v5184 = vld [vmem:[%s5183] ss:$4 sm:$0xff]
    %5185 = vrot.lane.b32.xlu0 %v5184, 120
    %v5186 = vpop.permute.xlu0 %5185
    %v5187 = vrot.slane %v5186, 6
    %v5188 = vsel %vm4814, %v5187, %v5186
    %5190 = vst.msk [vmem:[#allocation8 + $0x7] sm:$0x5] %vm4819, %v5188
    %5191 = vst.sshfl [vmem:[#allocation1] sm:$0xff pattern:$0x73625140] %v5075
    %s5192 = scalar_lea.vmem [#allocation1], 3
    %v5193 = vld [vmem:[%s5192] ss:$4 sm:$0xff]
    %v5194 = vrot.slane %v5193, 7
    %v5195 = vrot.slane %v5194, 2
    %5196 = vrot.lane.b32.xlu0 %v5195, 28
    %v5197 = vpop.permute.xlu0 %5196
    %5199 = vst.msk [vmem:[#allocation8 + $0x9] sm:$0x1] %vm4829, %v5197
    %v5200 = vld [vmem:[#allocation8] sm:$0xff]
    %v5201 = vld [vmem:[#allocation8 + $0x8] sm:$0x3]
    %v5202 = vld [vmem:[%s6] sm:$0xff]
    %v5203 = vld [vmem:[%s6 + $0x8] sm:$0xff]
    %v5204 = vld [vmem:[%s6 + $0x10] sm:$0xff]
    %v5205 = vld [vmem:[%s6 + $0x18] sm:$0xff]
    %v5206 = vld [vmem:[%s6 + $0x20] sm:$0xff]
    %v5207 = vld [vmem:[%s6 + $0x28] sm:$0xff]
    %v5208 = vld [vmem:[%s6 + $0x30] sm:$0xff]
    %v5209 = vld [vmem:[%s6 + $0x38] sm:$0xff]
    %v5210 = vld [vmem:[%s6 + $0x40] sm:$0xff]
    %v5211 = vld [vmem:[%s6 + $0x48] sm:$0xff]
    %v5212 = vld [vmem:[%s6 + $0x50] sm:$0xff]
    %v5213 = vld [vmem:[%s6 + $0x58] sm:$0xff]
    %v5214 = vld [vmem:[%s6 + $0x60] sm:$0xff]
    %v5215 = vld [vmem:[%s6 + $0x68] sm:$0xff]
    %v5216 = vld [vmem:[%s6 + $0x70] sm:$0xff]
    %v5217 = vld [vmem:[%s6 + $0x78] sm:$0xff]
    %v5218 = vld [vmem:[%s6 + $0x80] sm:$0xff]
    %v5219 = vld [vmem:[%s6 + $0x88] sm:$0xff]
    %v5220 = vld [vmem:[%s6 + $0x90] sm:$0xff]
    %v5221 = vld [vmem:[%s6 + $0x98] sm:$0xff]
    %v5222 = vld [vmem:[%s6 + $0xa0] sm:$0xff]
    %v5223 = vld [vmem:[%s6 + $0xa8] sm:$0xff]
    %v5224 = vld [vmem:[%s6 + $0xb0] sm:$0xff]
    %v5225 = vld [vmem:[%s6 + $0xb8] sm:$0xff]
    %v5226 = vld [vmem:[%s6 + $0xc0] sm:$0xff]
    %v5227 = vld [vmem:[%s6 + $0xc8] sm:$0xff]
    %v5228 = vld [vmem:[%s6 + $0xd0] sm:$0xff]
    %v5229 = vld [vmem:[%s6 + $0xd8] sm:$0xff]
    %v5230 = vld [vmem:[%s6 + $0xe0] sm:$0xff]
    %v5231 = vld [vmem:[%s6 + $0xe8] sm:$0xff]
    %v5232 = vld [vmem:[%s6 + $0xf0] sm:$0xff]
    %v5233 = vld [vmem:[%s6 + $0xf8] sm:$0xff]
    %v5234 = vld [vmem:[%s6 + $0x100] sm:$0xff]
    %v5235 = vld [vmem:[%s6 + $0x108] sm:$0xff]
    %v5236 = vld [vmem:[%s6 + $0x110] sm:$0xff]
    %v5237 = vld [vmem:[%s6 + $0x118] sm:$0xff]
    %v5238 = vld [vmem:[%s6 + $0x120] sm:$0xff]
    %v5239 = vld [vmem:[%s6 + $0x128] sm:$0xff]
    %v5240 = vld [vmem:[%s6 + $0x130] sm:$0xff]
    %v5241 = vld [vmem:[%s6 + $0x138] sm:$0xff]
    %v5242 = vld [vmem:[%s6 + $0x140] sm:$0xff]
    %v5243 = vld [vmem:[%s6 + $0x148] sm:$0xff]
    %v5244 = vld [vmem:[%s6 + $0x150] sm:$0xff]
    %v5245 = vld [vmem:[%s6 + $0x158] sm:$0xff]
    %v5246 = vld [vmem:[%s6 + $0x160] sm:$0xff]
    %v5247 = vld [vmem:[%s6 + $0x168] sm:$0xff]
    %v5248 = vld [vmem:[%s6 + $0x170] sm:$0xff]
    %v5249 = vld [vmem:[%s6 + $0x178] sm:$0xff]
    %v5250 = vld [vmem:[%s6 + $0x180] sm:$0xff]
    %v5251 = vld [vmem:[%s6 + $0x188] sm:$0xff]
    %v5252 = vld [vmem:[%s6 + $0x190] sm:$0xff]
    %v5253 = vld [vmem:[%s6 + $0x198] sm:$0xff]
    %v5254 = vld [vmem:[%s6 + $0x1a0] sm:$0xff]
    %v5255 = vld [vmem:[%s6 + $0x1a8] sm:$0xff]
    %v5256 = vld [vmem:[%s6 + $0x1b0] sm:$0xff]
    %v5257 = vld [vmem:[%s6 + $0x1b8] sm:$0xff]
    %v5258 = vld [vmem:[%s6 + $0x1c0] sm:$0xff]
    %v5259 = vld [vmem:[%s6 + $0x1c8] sm:$0xff]
    %v5260 = vld [vmem:[%s6 + $0x1d0] sm:$0xff]
    %v5261 = vld [vmem:[%s6 + $0x1d8] sm:$0xff]
    %v5262 = vld [vmem:[%s6 + $0x1e0] sm:$0xff]
    %v5263 = vld [vmem:[%s6 + $0x1e8] sm:$0xff]
    %v5264 = vld [vmem:[%s6 + $0x1f0] sm:$0xff]
    %v5265 = vld [vmem:[%s6 + $0x1f8] sm:$0xff]
    %v5266 = vld [vmem:[%s6 + $0x200] sm:$0xff]
    %v5267 = vld [vmem:[%s6 + $0x208] sm:$0xff]
    %v5268 = vld [vmem:[%s6 + $0x210] sm:$0xff]
    %v5269 = vld [vmem:[%s6 + $0x218] sm:$0xff]
    %v5270 = vld [vmem:[%s6 + $0x220] sm:$0xff]
    %v5271 = vld [vmem:[%s6 + $0x228] sm:$0xff]
    %v5272 = vld [vmem:[%s6 + $0x230] sm:$0xff]
    %v5273 = vld [vmem:[%s6 + $0x238] sm:$0xff]
    %v5274 = vld [vmem:[%s7] sm:$0x1]
    %v5276 = vperm.slane %v5274, 0
    %5280 = vst [vmem:[#allocation1] ss:$4 sm:$0xff] %v5200
    %s5281 = scalar_lea.vmem [#allocation1], 32
    %5282 = vst [vmem:[%s5281] ss:$4 sm:$0xff] %v5201
    %v5283 = vld.sshfl [vmem:[#allocation1] sm:$0xff pattern:$0x73625140]
    %v5284 = vld.sshfl [vmem:[#allocation1 + $0x8] sm:$0xff pattern:$0x73625140]
    %v5285 = vld.sshfl [vmem:[#allocation1 + $0x10] sm:$0xff pattern:$0x73625140]
    %v5286 = vld.sshfl [vmem:[#allocation1 + $0x18] sm:$0xff pattern:$0x73625140]
    %v5287 = vld.sshfl [vmem:[#allocation1 + $0x20] sm:$0xff pattern:$0x73625140]
    %v5292 = vsel %vm1089, %v5287, 0
    %5294 = vmatpush.msra.mxu0 %v5217
    %5295 = vmatpush.msra.mxu0 %v5216
    %5296 = vmatpush.msra.mxu0 %v5215
    %5297 = vmatpush.msra.mxu0 %v5214
    %5298 = vmatpush.msra.mxu0 %v5213
    %5299 = vmatpush.msra.mxu0 %v5212
    %5300 = vmatpush.msra.mxu0 %v5211
    %5301 = vmatpush.msra.mxu0 %v5210
    %5302 = vmatpush.msra.mxu0 %v5209
    %5303 = vmatpush.msra.mxu0 %v5208
    %5304 = vmatpush.msra.mxu0 %v5207
    %5305 = vmatpush.msra.mxu0 %v5206
    %5306 = vmatpush.msra.mxu0 %v5205
    %5307 = vmatpush.msra.mxu0 %v5204
    %5308 = vmatpush.msra.mxu0 %v5203
    %5309 = vmatpush.msra.mxu0 %v5202
    %5310 = vmatmul.f32.gmra.mxu0 %v5283
    %v5311 = vpop.f32.mrf.mxu0
    %v5312 = vadd.f32 %v5276, %v5311
    %5313 = vdwg.mxu0
    %5314 = vmatpush.msra.mxu0 %v5233
    %5315 = vmatpush.msra.mxu0 %v5232
    %5316 = vmatpush.msra.mxu0 %v5231
    %5317 = vmatpush.msra.mxu0 %v5230
    %5318 = vmatpush.msra.mxu0 %v5229
    %5319 = vmatpush.msra.mxu0 %v5228
    %5320 = vmatpush.msra.mxu0 %v5227
    %5321 = vmatpush.msra.mxu0 %v5226
    %5322 = vmatpush.msra.mxu0 %v5225
    %5323 = vmatpush.msra.mxu0 %v5224
    %5324 = vmatpush.msra.mxu0 %v5223
    %5325 = vmatpush.msra.mxu0 %v5222
    %5326 = vmatpush.msra.mxu0 %v5221
    %5327 = vmatpush.msra.mxu0 %v5220
    %5328 = vmatpush.msra.mxu0 %v5219
    %5329 = vmatpush.msra.mxu0 %v5218
    %5330 = vmatmul.f32.gmra.mxu0 %v5284
    %v5331 = vpop.f32.mrf.mxu0
    %v5332 = vadd.f32 %v5312, %v5331
    %5333 = vdwg.mxu0
    %5334 = vmatpush.msra.mxu0 %v5249
    %5335 = vmatpush.msra.mxu0 %v5248
    %5336 = vmatpush.msra.mxu0 %v5247
    %5337 = vmatpush.msra.mxu0 %v5246
    %5338 = vmatpush.msra.mxu0 %v5245
    %5339 = vmatpush.msra.mxu0 %v5244
    %5340 = vmatpush.msra.mxu0 %v5243
    %5341 = vmatpush.msra.mxu0 %v5242
    %5342 = vmatpush.msra.mxu0 %v5241
    %5343 = vmatpush.msra.mxu0 %v5240
    %5344 = vmatpush.msra.mxu0 %v5239
    %5345 = vmatpush.msra.mxu0 %v5238
    %5346 = vmatpush.msra.mxu0 %v5237
    %5347 = vmatpush.msra.mxu0 %v5236
    %5348 = vmatpush.msra.mxu0 %v5235
    %5349 = vmatpush.msra.mxu0 %v5234
    %5350 = vmatmul.f32.gmra.mxu0 %v5285
    %v5351 = vpop.f32.mrf.mxu0
    %v5352 = vadd.f32 %v5332, %v5351
    %5353 = vdwg.mxu0
    %5354 = vmatpush.msra.mxu0 %v5265
    %5355 = vmatpush.msra.mxu0 %v5264
    %5356 = vmatpush.msra.mxu0 %v5263
    %5357 = vmatpush.msra.mxu0 %v5262
    %5358 = vmatpush.msra.mxu0 %v5261
    %5359 = vmatpush.msra.mxu0 %v5260
    %5360 = vmatpush.msra.mxu0 %v5259
    %5361 = vmatpush.msra.mxu0 %v5258
    %5362 = vmatpush.msra.mxu0 %v5257
    %5363 = vmatpush.msra.mxu0 %v5256
    %5364 = vmatpush.msra.mxu0 %v5255
    %5365 = vmatpush.msra.mxu0 %v5254
    %5366 = vmatpush.msra.mxu0 %v5253
    %5367 = vmatpush.msra.mxu0 %v5252
    %5368 = vmatpush.msra.mxu0 %v5251
    %5369 = vmatpush.msra.mxu0 %v5250
    %5370 = vmatmul.f32.gmra.mxu0 %v5286
    %v5371 = vpop.f32.mrf.mxu0
    %v5372 = vadd.f32 %v5352, %v5371
    %5373 = vdwg.mxu0
    %5374 = vmatpush.msra.mxu0 0.0
    %5375 = vmatpush.msra.mxu0 0.0
    %5376 = vmatpush.msra.mxu0 0.0
    %5377 = vmatpush.msra.mxu0 0.0
    %5378 = vmatpush.msra.mxu0 0.0
    %5379 = vmatpush.msra.mxu0 0.0
    %5380 = vmatpush.msra.mxu0 0.0
    %5381 = vmatpush.msra.mxu0 0.0
    %5382 = vmatpush.msra.mxu0 %v5273
    %5383 = vmatpush.msra.mxu0 %v5272
    %5384 = vmatpush.msra.mxu0 %v5271
    %5385 = vmatpush.msra.mxu0 %v5270
    %5386 = vmatpush.msra.mxu0 %v5269
    %5387 = vmatpush.msra.mxu0 %v5268
    %5388 = vmatpush.msra.mxu0 %v5267
    %5389 = vmatpush.msra.mxu0 %v5266
    %5390 = vmatmul.f32.gmra.mxu0 %v5292
    %v5391 = vpop.f32.mrf.mxu0
    %v5392 = vadd.f32 %v5372, %v5391
    %5393 = vdwg.mxu0
    %v5394 = vmax.f32 %v5392, 0.0
    %v5395 = vld [vmem:[%s8] sm:$0xff]
    %v5396 = vld [vmem:[%s8 + $0x8] sm:$0xff]
    %v5397 = vld [vmem:[%s8 + $0x10] sm:$0xff]
    %v5398 = vld [vmem:[%s8 + $0x18] sm:$0xff]
    %v5399 = vld [vmem:[%s8 + $0x20] sm:$0xff]
    %v5400 = vld [vmem:[%s8 + $0x28] sm:$0xff]
    %v5401 = vld [vmem:[%s8 + $0x30] sm:$0xff]
    %v5402 = vld [vmem:[%s8 + $0x38] sm:$0xff]
    %v5403 = vld [vmem:[%s8 + $0x40] sm:$0xff]
    %v5404 = vld [vmem:[%s8 + $0x48] sm:$0xff]
    %v5405 = vld [vmem:[%s8 + $0x50] sm:$0xff]
    %v5406 = vld [vmem:[%s8 + $0x58] sm:$0xff]
    %v5407 = vld [vmem:[%s8 + $0x60] sm:$0xff]
    %v5408 = vld [vmem:[%s8 + $0x68] sm:$0xff]
    %v5409 = vld [vmem:[%s8 + $0x70] sm:$0xff]
    %v5410 = vld [vmem:[%s9] sm:$0x1]
    %v5412 = vperm.slane %v5410, 0
    %v5415 = vsel %vm4814, %v5394, 0
    %5417 = vmatpush.msra.mxu0 0.0
    %5418 = vmatpush.msra.mxu0 %v5409
    %5419 = vmatpush.msra.mxu0 %v5408
    %5420 = vmatpush.msra.mxu0 %v5407
    %5421 = vmatpush.msra.mxu0 %v5406
    %5422 = vmatpush.msra.mxu0 %v5405
    %5423 = vmatpush.msra.mxu0 %v5404
    %5424 = vmatpush.msra.mxu0 %v5403
    %5425 = vmatpush.msra.mxu0 %v5402
    %5426 = vmatpush.msra.mxu0 %v5401
    %5427 = vmatpush.msra.mxu0 %v5400
    %5428 = vmatpush.msra.mxu0 %v5399
    %5429 = vmatpush.msra.mxu0 %v5398
    %5430 = vmatpush.msra.mxu0 %v5397
    %5431 = vmatpush.msra.mxu0 %v5396
    %5432 = vmatpush.msra.mxu0 %v5395
    %5433 = vmatmul.f32.gmra.mxu0 %v5415
    %v5434 = vpop.f32.mrf.mxu0
    %v5435 = vadd.f32 %v5412, %v5434
    %5436 = vdwg.mxu0
    %v5437 = vmax.f32 %v5435, 0.0
    %v5438 = vld [vmem:[%s10] sm:$0xff]
    %v5439 = vld [vmem:[%s10 + $0x8] sm:$0xff]
    %v5440 = vld [vmem:[%s10 + $0x10] sm:$0xff]
    %v5441 = vld [vmem:[%s10 + $0x18] sm:$0xff]
    %v5442 = vld [vmem:[%s10 + $0x20] sm:$0xff]
    %v5443 = vld [vmem:[%s10 + $0x28] sm:$0xff]
    %v5444 = vld [vmem:[%s10 + $0x30] sm:$0xff]
    %v5445 = vld [vmem:[%s10 + $0x38] sm:$0xff]
    %v5446 = vld [vmem:[%s10 + $0x40] sm:$0xff]
    %v5447 = vld [vmem:[%s10 + $0x48] sm:$0xff]
    %v5448 = vld [vmem:[%s10 + $0x50] sm:$0xf]
    %v5449 = vld [vmem:[%s11] sm:$0x1]
    %v5451 = vperm.slane %v5449, 0
    %vm5453 = vcmask 687104
    %v5455 = vsel %vm5453, %v5437, 0
    %vm5457 = vcmask 1043456
    %v5459 = vsel %vm5457, %v5448, 0
    %5461 = vmatpush.msra.mxu0 0.0
    %5462 = vmatpush.msra.mxu0 0.0
    %5463 = vmatpush.msra.mxu0 0.0
    %5464 = vmatpush.msra.mxu0 0.0
    %5465 = vmatpush.msra.mxu0 0.0
    %5466 = vmatpush.msra.mxu0 %v5459
    %5467 = vmatpush.msra.mxu0 %v5447
    %5468 = vmatpush.msra.mxu0 %v5446
    %5469 = vmatpush.msra.mxu0 %v5445
    %5470 = vmatpush.msra.mxu0 %v5444
    %5471 = vmatpush.msra.mxu0 %v5443
    %5472 = vmatpush.msra.mxu0 %v5442
    %5473 = vmatpush.msra.mxu0 %v5441
    %5474 = vmatpush.msra.mxu0 %v5440
    %5475 = vmatpush.msra.mxu0 %v5439
    %5476 = vmatpush.msra.mxu0 %v5438
    %5477 = vmatmul.f32.gmra.mxu0 %v5455
    %v5478 = vpop.f32.mrf.mxu0
    %v5479 = vadd.f32 %v5451, %v5478
    %5480 = vdwg.mxu0
    %vm5481 = vcmask 74752
    %5482 = vst.msk [vmem:[#allocation12] sm:$0x3] %vm5481, %v5479
    // Predicated region
    $region54: #{cifar_cnn_forward.1} parent=1 // pred_check
      _
    $region55: #{cifar_cnn_forward.1} parent=1 // pred_check_branch
      %5484 = sbr.rel (0) target = $region57
    $region56: #{cifar_cnn_forward.1} parent=1 // pred_region
      %5486 = vsyncadd [#allocation11], 0
      %s5488 = sshll.u32 [#allocation12], 4
      %s5489 = int_to_ptr.vmem [resolvable:$true] %s5488
      %s5490 = sshll.u32 %s12, 4
      %s5491 = int_to_ptr.hbm [resolvable:$true] %s5490
      %5493 = dma.vmem_to_hbm [thread:$0]  %s5489, 32, %s5491, [#allocation11]
    $region57: #{cifar_cnn_forward.1} parent=1 // pred_fallthru
      _
    // Predicated region
    $region58: #{cifar_cnn_forward.1} parent=1 // pred_check
      _
    $region59: #{cifar_cnn_forward.1} parent=1 // pred_check_branch
      %5495 = sbr.rel (0) target = $region61
    $region60: #{cifar_cnn_forward.1} parent=1 // pred_region
      %5497 = dma.done [#allocation11], 32
    $region61: #{cifar_cnn_forward.1} parent=1 // pred_fallthru
      _
    %5498 = vsyncpa [#allocation10], 1
    %5499 = vsyncpa [#allocation11], 1

</llo_original>
